<compile_context>
chip_gen: v5e
topology: v5e:2x2
jax: 0.10.0
libtpu: 0.0.40
codegen_flags: <defaults>
</compile_context>

<pallas_src>
import functools

import jax
import jax.numpy as jnp
from jax.experimental import pallas as pl
from jax.experimental.pallas import tpu as pltpu

# ---------------- config (small, consistent with MoEConfig) ----------------
HIDDEN = 32
NUM_HEADS = 4
HEAD_DIM = HIDDEN // NUM_HEADS
NUM_LAYERS = 2            # layer 0: GPT2 block, layer 1: MoE block (fused kernel)
VOCAB = 64
VOCAB_PAD = 128           # lane-dense unembed output (zero-padded tied embedding)
MAX_POS = 64
NUM_EXPERTS = 4
CAPACITY_FACTOR = 2.0     # k = tokens * capacity / num_experts
LN_EPS = 1e-5

MXU_BF16 = False          # True: cast matmul operands to bf16 (v6e/v7x), f32 accum kept.


# ============================ in-kernel helpers ============================

def _cast(x):
    return x.astype(jnp.bfloat16) if MXU_BF16 else x


def _mm(a, b):
    """Standard (m,k)x(k,n) MXU matmul with f32 accumulation."""
    return jnp.dot(_cast(a), _cast(b), preferred_element_type=jnp.float32)


def _mm_tt(a, b):
    """Contract the last dims of a and b (i.e. a @ b.T) with f32 accumulation."""
    return jax.lax.dot_general(_cast(a), _cast(b), (((1,), (1,)), ((), ())),
                               preferred_element_type=jnp.float32)


def _ln(x, g, b):
    """LayerNorm over the last axis. g/b are (1, H) rows."""
    mean = jnp.mean(x, axis=-1, keepdims=True)
    var = jnp.mean(jnp.square(x - mean), axis=-1, keepdims=True)
    return (x - mean) * jax.lax.rsqrt(var + LN_EPS) * g + b


def _erf(x):
    """erf via Abramowitz & Stegun 7.1.26 (max abs err ~1.5e-7); only exp/mul/add."""
    a1, a2, a3, a4, a5 = 0.254829592, -0.284496736, 1.421413741, -1.453152027, 1.061405429
    p = 0.3275911
    sgn = jnp.where(x < 0.0, jnp.float32(-1.0), jnp.float32(1.0))
    ax = jnp.abs(x)
    t = 1.0 / (1.0 + p * ax)
    poly = ((((a5 * t + a4) * t + a3) * t + a2) * t + a1) * t
    return sgn * (1.0 - poly * jnp.exp(-ax * ax))


def _gelu(x):
    """erf-based GELU, matching PyTorch nn.GELU default (not the tanh approximation)."""
    return 0.5 * x * (1.0 + _erf(x * 0.7071067811865476))


def _full_spec(shape):
    """Whole-array block for a 1-step grid."""
    n = len(shape)
    return pl.BlockSpec(shape, lambda i, _n=n: (0,) * _n)


# ============================ the fused forward kernel ============================

def _forward_kernel(tok_ref, emb_ref, pos_ref, mask_ref,
                    ln1_g_ref, ln1_b_ref,
                    wq_ref, wk_ref, wv_ref, bq_ref, bk_ref, bv_ref, wo_ref, bo_ref,
                    ln2_g_ref, ln2_b_ref, wfc1_ref, bfc1_ref, wfc2_ref, bfc2_ref,
                    lnm_g_ref, lnm_b_ref, wr_ref, br_ref,
                    w1_ref, b1_ref, w2_ref, b2_ref,
                    lnf_g_ref, lnf_b_ref,
                    logits_ref, probs_ref, g_ref, idx_ref, *, n_k):
    T = tok_ref.shape[0]
    H, NH, D, E = HIDDEN, NUM_HEADS, HEAD_DIM, NUM_EXPERTS

    # ---- embedding: one-hot(tokens) @ padded tied embedding + positions ----
    tok_oh = (tok_ref[...] == jax.lax.broadcasted_iota(
        jnp.int32, (T, VOCAB_PAD), 1)).astype(jnp.float32)                    # (T, VP)
    x = _mm(tok_oh, emb_ref[...]) + pos_ref[...]                              # (T, H)

    # ================= layer 0: GPT2 block (pre-LN) =================
    xn = _ln(x, ln1_g_ref[...], ln1_b_ref[...])
    mask = mask_ref[...] > 0.5                         # (T, T) block-diagonal causal
    neg = jnp.float32(-1e30)
    scale = jnp.float32(1.0 / (D ** 0.5))
    attn = jnp.zeros((T, H), jnp.float32)
    for h in range(NH):                                # static unroll, 4 heads
        q = _mm(xn, wq_ref[h]) + bq_ref[h]             # (T, D)
        k = _mm(xn, wk_ref[h]) + bk_ref[h]
        v = _mm(xn, wv_ref[h]) + bv_ref[h]
        s = _mm_tt(q, k) * scale                       # (T, T)
        s = jnp.where(mask, s, neg)
        s = s - jnp.max(s, axis=-1, keepdims=True)
        p = jnp.exp(s)
        p = p * pl.reciprocal(jnp.sum(p, axis=-1, keepdims=True), approx=True)
        attn = attn + _mm(_mm(p, v), wo_ref[h])        # (T, H)
    x1 = x + attn + bo_ref[...]

    x1n = _ln(x1, ln2_g_ref[...], ln2_b_ref[...])
    x2 = x1 + _mm(_gelu(_mm(x1n, wfc1_ref[...]) + bfc1_ref[...]),
                  wfc2_ref[...]) + bfc2_ref[...]

    # ================= layer 1: MoE block (expert-choice routing) =================
    xm = _ln(x2, lnm_g_ref[...], lnm_b_ref[...])
    rl = _mm(xm, wr_ref[...]) + br_ref[...]            # (T, E) router logits
    rl = rl - jnp.max(rl, axis=0, keepdims=True)       # softmax over TOKENS (expert choice)
    er = jnp.exp(rl)
    probs = er * pl.reciprocal(jnp.sum(er, axis=0, keepdims=True), approx=True)
    probs_ref[...] = probs

    # In-kernel expert-choice top-k: k tokens per expert via iterative masked argmax
    # (f32 reductions + int compares only; ties resolved to the lowest token index).
    row_te = jax.lax.broadcasted_iota(jnp.int32, (T, E), 0)
    row_tf = row_te.astype(jnp.float32)
    selected = jnp.zeros((T, E), jnp.float32)
    p_work = probs
    for j in range(n_k):                               # static unroll, k rounds
        mx = jnp.max(p_work, axis=0, keepdims=True)                          # (1, E)
        idxf = jnp.min(jnp.where(p_work >= mx, row_tf, jnp.float32(T)),
                       axis=0, keepdims=True)
        idx = idxf.astype(jnp.int32)                                         # (1, E)
        sel = row_te == idx                                                  # (T, E)
        g_ref[pl.ds(j, 1), :] = mx
        idx_ref[pl.ds(j, 1), :] = idx
        selected = selected + sel.astype(jnp.float32)
        p_work = jnp.where(sel, jnp.float32(-1.0), p_work)

    gate_w = probs * selected                          # (T, E) combine weights

    # Dense-compute / sparse-combine: each expert FFN runs over all T tokens and
    # non-selected tokens are zero-weighted -> exact expert-choice semantics.
    # TODO(synk): for large T, switch to an index-gathered (E,k,H) formulation
    # (scalar-prefetched indices) instead of running every token through every expert.
    y = jnp.zeros((T, H), jnp.float32)
    for e in range(E):                                 # static unroll, 4 experts
        h1 = _gelu(_mm(xm, w1_ref[e]) + b1_ref[e])     # (T, 4H)
        eo = _mm(h1, w2_ref[e]) + b2_ref[e]            # (T, H)
        y = y + gate_w[:, e:e + 1] * eo
    x3 = x2 + y

    # ================= final LayerNorm + tied unembed (lane-dense output) =========
    zf = _ln(x3, lnf_g_ref[...], lnf_b_ref[...])
    logits_ref[...] = _mm_tt(zf, emb_ref[...])         # (T, VOCAB_PAD)


# ============================ model (thin JAX glue) ============================

def forward(params, tokens):
    """tokens: (batch, seq) int32 -> (logits (batch, seq, vocab), cache)."""
    B, S = tokens.shape
    T = B * S
    H, E, NH, D = HIDDEN, NUM_EXPERTS, NUM_HEADS, HEAD_DIM
    k = int(T * CAPACITY_FACTOR) // NUM_EXPERTS
    p0, p1 = params["layer0"], params["layer1"]

    # ---- wrapper-side layout plumbing (tiny, zero in-kernel cost) ----
    emb_pad = jnp.zeros((VOCAB_PAD, H), jnp.float32).at[:VOCAB].set(params["tok_emb"])
    pos = jnp.tile(params["pos_emb"][:S], (B, 1))                          # (T, H)
    ridx = jnp.arange(T)[:, None]
    cidx = jnp.arange(T)[None, :]
    attn_mask = (((ridx // S) == (cidx // S)) & (cidx <= ridx)).astype(jnp.float32)

    w_qkv, b_qkv = p0["w_qkv"], p0["b_qkv"]

    def head_w(w):  # (H, H) -> (NH, H, D); head h = original columns h*D:(h+1)*D
        return w.reshape(H, NH, D).transpose(1, 0, 2)

    wq, wk, wv = [head_w(w_qkv[:, i * H:(i + 1) * H]) for i in range(3)]
    bq, bk, bv = [b_qkv[i * H:(i + 1) * H].reshape(NH, 1, D) for i in range(3)]
    wo = p0["w_o"].reshape(NH, D, H)

    args = (
        tokens.reshape(T, 1).astype(jnp.int32), emb_pad, pos, attn_mask,
        p0["ln1_g"].reshape(1, H), p0["ln1_b"].reshape(1, H),
        wq, wk, wv, bq, bk, bv, wo, p0["b_o"].reshape(1, H),
        p0["ln2_g"].reshape(1, H), p0["ln2_b"].reshape(1, H),
        p0["w_fc1"], p0["b_fc1"].reshape(1, 4 * H),
        p0["w_fc2"], p0["b_fc2"].reshape(1, H),
        p1["ln_g"].reshape(1, H), p1["ln_b"].reshape(1, H),
        p1["w_router"], p1["b_router"].reshape(1, E),
        p1["w1"], p1["b1"], p1["w2"], p1["b2"],
        params["lnf_g"].reshape(1, H), params["lnf_b"].reshape(1, H),
    )
    out_shapes = (
        jax.ShapeDtypeStruct((T, VOCAB_PAD), jnp.float32),   # lane-dense logits
        jax.ShapeDtypeStruct((T, E), jnp.float32),           # routing_probs
        jax.ShapeDtypeStruct((k, E), jnp.float32),           # G (gate values)
        jax.ShapeDtypeStruct((k, E), jnp.int32),             # token_assignments
    )

    logits_pad, probs, gates, assign = pl.pallas_call(
        functools.partial(_forward_kernel, n_k=k),
        out_shape=out_shapes,
        grid=(1,),
        in_specs=[_full_spec(a.shape) for a in args],
        out_specs=[_full_spec(s.shape) for s in out_shapes],
        compiler_params=pltpu.CompilerParams(dimension_semantics=("arbitrary",)),
    )(*args)

    logits = logits_pad[:, :VOCAB].reshape(B, S, VOCAB)
    cache = {"moe_block1": {"G": gates, "token_assignments": assign,
                            "routing_probs": probs}}
    return logits, cache


# ============================ deterministic init ============================

def init_params(key):
    keys = iter(jax.random.split(key, 16))

    def nrm(shape, scale=0.02):
        return (scale * jax.random.normal(next(keys), shape)).astype(jnp.float32)

    params = {
        "tok_emb": nrm((VOCAB, HIDDEN)),
        "pos_emb": nrm((MAX_POS, HIDDEN)),
        "lnf_g": jnp.ones((HIDDEN,), jnp.float32),
        "lnf_b": jnp.zeros((HIDDEN,), jnp.float32),
        "layer0": {  # GPT2 block
            "ln1_g": jnp.ones((HIDDEN,), jnp.float32),
            "ln1_b": jnp.zeros((HIDDEN,), jnp.float32),
            "w_qkv": nrm((HIDDEN, 3 * HIDDEN)),
            "b_qkv": jnp.zeros((3 * HIDDEN,), jnp.float32),
            "w_o": nrm((HIDDEN, HIDDEN)),
            "b_o": jnp.zeros((HIDDEN,), jnp.float32),
            "ln2_g": jnp.ones((HIDDEN,), jnp.float32),
            "ln2_b": jnp.zeros((HIDDEN,), jnp.float32),
            "w_fc1": nrm((HIDDEN, 4 * HIDDEN)),
            "b_fc1": jnp.zeros((4 * HIDDEN,), jnp.float32),
            "w_fc2": nrm((4 * HIDDEN, HIDDEN)),
            "b_fc2": jnp.zeros((HIDDEN,), jnp.float32),
        },
        "layer1": {  # MoE block (expert-choice)
            "ln_g": jnp.ones((HIDDEN,), jnp.float32),
            "ln_b": jnp.zeros((HIDDEN,), jnp.float32),
            "w_router": nrm((HIDDEN, NUM_EXPERTS)),
            "b_router": jnp.zeros((NUM_EXPERTS,), jnp.float32),
            "w1": nrm((NUM_EXPERTS, HIDDEN, 4 * HIDDEN)),
            "b1": jnp.zeros((NUM_EXPERTS, 1, 4 * HIDDEN), jnp.float32),
            "w2": nrm((NUM_EXPERTS, 4 * HIDDEN, HIDDEN)),
            "b2": jnp.zeros((NUM_EXPERTS, 1, HIDDEN), jnp.float32),
        },
    }
    return params


if __name__ == "__main__":
    key = jax.random.PRNGKey(0)
    pkey, dkey = jax.random.split(key)
    params = init_params(pkey)

    batch, seq = 2, 8
    tokens = jax.random.randint(dkey, (batch, seq), 0, VOCAB, dtype=jnp.int32)

    logits, cache = jax.jit(forward)(params, tokens)
    jax.block_until_ready(logits)

    assert logits.shape == (batch, seq, VOCAB)
    assert logits.dtype == jnp.float32
    assert "moe_block1" in cache
    assert cache["moe_block1"]["token_assignments"].shape == (
        int(batch * seq * CAPACITY_FACTOR) // NUM_EXPERTS, NUM_EXPERTS)
    print("KERNEL_OK")
</pallas_src>

<mosaic_0001>
module attributes {stable_mosaic.version = 11 : i64} {
  func.func @_forward_kernel(%arg0: i32, %arg1: memref<16x1xi32, #tpu.memory_space<vmem>>, %arg2: memref<128x32xf32, #tpu.memory_space<vmem>>, %arg3: memref<16x32xf32, #tpu.memory_space<vmem>>, %arg4: memref<16x16xf32, #tpu.memory_space<vmem>>, %arg5: memref<1x32xf32, #tpu.memory_space<vmem>>, %arg6: memref<1x32xf32, #tpu.memory_space<vmem>>, %arg7: memref<4x32x8xf32, #tpu.memory_space<vmem>>, %arg8: memref<4x32x8xf32, #tpu.memory_space<vmem>>, %arg9: memref<4x32x8xf32, #tpu.memory_space<vmem>>, %arg10: memref<4x1x8xf32, #tpu.memory_space<vmem>>, %arg11: memref<4x1x8xf32, #tpu.memory_space<vmem>>, %arg12: memref<4x1x8xf32, #tpu.memory_space<vmem>>, %arg13: memref<4x8x32xf32, #tpu.memory_space<vmem>>, %arg14: memref<1x32xf32, #tpu.memory_space<vmem>>, %arg15: memref<1x32xf32, #tpu.memory_space<vmem>>, %arg16: memref<1x32xf32, #tpu.memory_space<vmem>>, %arg17: memref<32x128xf32, #tpu.memory_space<vmem>>, %arg18: memref<1x128xf32, #tpu.memory_space<vmem>>, %arg19: memref<128x32xf32, #tpu.memory_space<vmem>>, %arg20: memref<1x32xf32, #tpu.memory_space<vmem>>, %arg21: memref<1x32xf32, #tpu.memory_space<vmem>>, %arg22: memref<1x32xf32, #tpu.memory_space<vmem>>, %arg23: memref<32x4xf32, #tpu.memory_space<vmem>>, %arg24: memref<1x4xf32, #tpu.memory_space<vmem>>, %arg25: memref<4x32x128xf32, #tpu.memory_space<vmem>>, %arg26: memref<4x1x128xf32, #tpu.memory_space<vmem>>, %arg27: memref<4x128x32xf32, #tpu.memory_space<vmem>>, %arg28: memref<4x1x32xf32, #tpu.memory_space<vmem>>, %arg29: memref<1x32xf32, #tpu.memory_space<vmem>>, %arg30: memref<1x32xf32, #tpu.memory_space<vmem>>, %arg31: memref<16x128xf32, #tpu.memory_space<vmem>>, %arg32: memref<16x4xf32, #tpu.memory_space<vmem>>, %arg33: memref<8x4xf32, #tpu.memory_space<vmem>>, %arg34: memref<8x4xi32, #tpu.memory_space<vmem>>) attributes {dimension_semantics = [#tpu.dimension_semantics<arbitrary>], iteration_bounds = array<i64: 1>, scalar_prefetch = 0 : i64, scratch_operands = 0 : i64, tpu.core_type = #tpu.core_type<tc>, window_params = [{pipeline_mode = #tpu.pipeline_mode<synchronous>, transform_indices = @transform_0, window_bounds = array<i64: 16, 1>}, {pipeline_mode = #tpu.pipeline_mode<synchronous>, transform_indices = @transform_1, window_bounds = array<i64: 128, 32>}, {pipeline_mode = #tpu.pipeline_mode<synchronous>, transform_indices = @transform_2, window_bounds = array<i64: 16, 32>}, {pipeline_mode = #tpu.pipeline_mode<synchronous>, transform_indices = @transform_3, window_bounds = array<i64: 16, 16>}, {pipeline_mode = #tpu.pipeline_mode<synchronous>, transform_indices = @transform_4, window_bounds = array<i64: 1, 32>}, {pipeline_mode = #tpu.pipeline_mode<synchronous>, transform_indices = @transform_5, window_bounds = array<i64: 1, 32>}, {pipeline_mode = #tpu.pipeline_mode<synchronous>, transform_indices = @transform_6, window_bounds = array<i64: 4, 32, 8>}, {pipeline_mode = #tpu.pipeline_mode<synchronous>, transform_indices = @transform_7, window_bounds = array<i64: 4, 32, 8>}, {pipeline_mode = #tpu.pipeline_mode<synchronous>, transform_indices = @transform_8, window_bounds = array<i64: 4, 32, 8>}, {pipeline_mode = #tpu.pipeline_mode<synchronous>, transform_indices = @transform_9, window_bounds = array<i64: 4, 1, 8>}, {pipeline_mode = #tpu.pipeline_mode<synchronous>, transform_indices = @transform_10, window_bounds = array<i64: 4, 1, 8>}, {pipeline_mode = #tpu.pipeline_mode<synchronous>, transform_indices = @transform_11, window_bounds = array<i64: 4, 1, 8>}, {pipeline_mode = #tpu.pipeline_mode<synchronous>, transform_indices = @transform_12, window_bounds = array<i64: 4, 8, 32>}, {pipeline_mode = #tpu.pipeline_mode<synchronous>, transform_indices = @transform_13, window_bounds = array<i64: 1, 32>}, {pipeline_mode = #tpu.pipeline_mode<synchronous>, transform_indices = @transform_14, window_bounds = array<i64: 1, 32>}, {pipeline_mode = #tpu.pipeline_mode<synchronous>, transform_indices = @transform_15, window_bounds = array<i64: 1, 32>}, {pipeline_mode = #tpu.pipeline_mode<synchronous>, transform_indices = @transform_16, window_bounds = array<i64: 32, 128>}, {pipeline_mode = #tpu.pipeline_mode<synchronous>, transform_indices = @transform_17, window_bounds = array<i64: 1, 128>}, {pipeline_mode = #tpu.pipeline_mode<synchronous>, transform_indices = @transform_18, window_bounds = array<i64: 128, 32>}, {pipeline_mode = #tpu.pipeline_mode<synchronous>, transform_indices = @transform_19, window_bounds = array<i64: 1, 32>}, {pipeline_mode = #tpu.pipeline_mode<synchronous>, transform_indices = @transform_20, window_bounds = array<i64: 1, 32>}, {pipeline_mode = #tpu.pipeline_mode<synchronous>, transform_indices = @transform_21, window_bounds = array<i64: 1, 32>}, {pipeline_mode = #tpu.pipeline_mode<synchronous>, transform_indices = @transform_22, window_bounds = array<i64: 32, 4>}, {pipeline_mode = #tpu.pipeline_mode<synchronous>, transform_indices = @transform_23, window_bounds = array<i64: 1, 4>}, {pipeline_mode = #tpu.pipeline_mode<synchronous>, transform_indices = @transform_24, window_bounds = array<i64: 4, 32, 128>}, {pipeline_mode = #tpu.pipeline_mode<synchronous>, transform_indices = @transform_25, window_bounds = array<i64: 4, 1, 128>}, {pipeline_mode = #tpu.pipeline_mode<synchronous>, transform_indices = @transform_26, window_bounds = array<i64: 4, 128, 32>}, {pipeline_mode = #tpu.pipeline_mode<synchronous>, transform_indices = @transform_27, window_bounds = array<i64: 4, 1, 32>}, {pipeline_mode = #tpu.pipeline_mode<synchronous>, transform_indices = @transform_28, window_bounds = array<i64: 1, 32>}, {pipeline_mode = #tpu.pipeline_mode<synchronous>, transform_indices = @transform_29, window_bounds = array<i64: 1, 32>}, {pipeline_mode = #tpu.pipeline_mode<synchronous>, transform_indices = @transform_30, window_bounds = array<i64: 16, 128>}, {pipeline_mode = #tpu.pipeline_mode<synchronous>, transform_indices = @transform_31, window_bounds = array<i64: 16, 4>}, {pipeline_mode = #tpu.pipeline_mode<synchronous>, transform_indices = @transform_32, window_bounds = array<i64: 8, 4>}, {pipeline_mode = #tpu.pipeline_mode<synchronous>, transform_indices = @transform_33, window_bounds = array<i64: 8, 4>}]} {
    %c0 = arith.constant 0 : index
    %c0_0 = arith.constant 0 : index
    %0 = vector.load %arg1[%c0, %c0_0] : memref<16x1xi32, #tpu.memory_space<vmem>>, vector<16x1xi32>
    %1 = tpu.iota {dimensions = array<i32: 1>} : vector<16x128xi32>
    %2 = vector.broadcast %0 : vector<16x1xi32> to vector<16x128xi32>
    %3 = arith.cmpi eq, %2, %1 : vector<16x128xi32>
    %4 = arith.extui %3 : vector<16x128xi1> to vector<16x128xi32>
    %5 = arith.sitofp %4 : vector<16x128xi32> to vector<16x128xf32>
    %c0_1 = arith.constant 0 : index
    %c0_2 = arith.constant 0 : index
    %6 = vector.load %arg2[%c0_1, %c0_2] : memref<128x32xf32, #tpu.memory_space<vmem>>, vector<128x32xf32>
    %cst = arith.constant dense<0.000000e+00> : vector<16x32xf32>
    %7 = tpu.matmul %5, %6, %cst {dimension_numbers = #tpu.dot_dimension_numbers<[1], [0], [0], [1], [0, 0, 1, 1], [], []>} : vector<16x128xf32>, vector<128x32xf32>, vector<16x32xf32> -> vector<16x32xf32>
    %c0_3 = arith.constant 0 : index
    %c0_4 = arith.constant 0 : index
    %8 = vector.load %arg3[%c0_3, %c0_4] : memref<16x32xf32, #tpu.memory_space<vmem>>, vector<16x32xf32>
    %9 = arith.addf %7, %8 : vector<16x32xf32>
    %c0_5 = arith.constant 0 : index
    %c0_6 = arith.constant 0 : index
    %10 = vector.load %arg5[%c0_5, %c0_6] : memref<1x32xf32, #tpu.memory_space<vmem>>, vector<1x32xf32>
    %c0_7 = arith.constant 0 : index
    %c0_8 = arith.constant 0 : index
    %11 = vector.load %arg6[%c0_7, %c0_8] : memref<1x32xf32, #tpu.memory_space<vmem>>, vector<1x32xf32>
    %cst_9 = arith.constant dense<0.000000e+00> : vector<16xf32>
    %12 = vector.multi_reduction <add>, %9, %cst_9 [1] : vector<16x32xf32> to vector<16xf32>
    %13 = vector.shape_cast %12 : vector<16xf32> to vector<16x1xf32>
    %cst_10 = arith.constant 3.200000e+01 : f32
    %14 = vector.broadcast %cst_10 : f32 to vector<16x1xf32>
    %15 = arith.divf %13, %14 : vector<16x1xf32>
    %16 = vector.broadcast %15 : vector<16x1xf32> to vector<16x32xf32>
    %17 = arith.subf %9, %16 : vector<16x32xf32>
    %18 = arith.mulf %17, %17 : vector<16x32xf32>
    %cst_11 = arith.constant dense<0.000000e+00> : vector<16xf32>
    %19 = vector.multi_reduction <add>, %18, %cst_11 [1] : vector<16x32xf32> to vector<16xf32>
    %20 = vector.shape_cast %19 : vector<16xf32> to vector<16x1xf32>
    %cst_12 = arith.constant 3.200000e+01 : f32
    %21 = vector.broadcast %cst_12 : f32 to vector<16x1xf32>
    %22 = arith.divf %20, %21 : vector<16x1xf32>
    %23 = vector.broadcast %15 : vector<16x1xf32> to vector<16x32xf32>
    %24 = arith.subf %9, %23 : vector<16x32xf32>
    %cst_13 = arith.constant 9.99999974E-6 : f32
    %25 = vector.broadcast %cst_13 : f32 to vector<16x1xf32>
    %26 = arith.addf %22, %25 : vector<16x1xf32>
    %27 = math.rsqrt %26 : vector<16x1xf32>
    %28 = vector.broadcast %27 : vector<16x1xf32> to vector<16x32xf32>
    %29 = arith.mulf %24, %28 : vector<16x32xf32>
    %30 = vector.broadcast %10 : vector<1x32xf32> to vector<16x32xf32>
    %31 = arith.mulf %29, %30 : vector<16x32xf32>
    %32 = vector.broadcast %11 : vector<1x32xf32> to vector<16x32xf32>
    %33 = arith.addf %31, %32 : vector<16x32xf32>
    %c0_14 = arith.constant 0 : index
    %c0_15 = arith.constant 0 : index
    %34 = vector.load %arg4[%c0_14, %c0_15] : memref<16x16xf32, #tpu.memory_space<vmem>>, vector<16x16xf32>
    %cst_16 = arith.constant 5.000000e-01 : f32
    %35 = vector.broadcast %cst_16 : f32 to vector<16x16xf32>
    %36 = arith.cmpf ogt, %34, %35 : vector<16x16xf32>
    %cst_17 = arith.constant 0.000000e+00 : f32
    %37 = vector.broadcast %cst_17 : f32 to vector<16x32xf32>
    %c0_18 = arith.constant 0 : index
    %c0_19 = arith.constant 0 : index
    %c0_20 = arith.constant 0 : index
    %38 = vector.load %arg7[%c0_18, %c0_19, %c0_20] : memref<4x32x8xf32, #tpu.memory_space<vmem>>, vector<1x32x8xf32>
    %39 = vector.shape_cast %38 : vector<1x32x8xf32> to vector<32x8xf32>
    %cst_21 = arith.constant dense<0.000000e+00> : vector<16x8xf32>
    %40 = tpu.matmul %33, %39, %cst_21 {dimension_numbers = #tpu.dot_dimension_numbers<[1], [0], [0], [1], [0, 0, 1, 1], [], []>} : vector<16x32xf32>, vector<32x8xf32>, vector<16x8xf32> -> vector<16x8xf32>
    %c0_22 = arith.constant 0 : index
    %c0_23 = arith.constant 0 : index
    %c0_24 = arith.constant 0 : index
    %41 = vector.load %arg10[%c0_22, %c0_23, %c0_24] : memref<4x1x8xf32, #tpu.memory_space<vmem>>, vector<1x1x8xf32>
    %42 = vector.shape_cast %41 : vector<1x1x8xf32> to vector<1x8xf32>
    %43 = vector.broadcast %42 : vector<1x8xf32> to vector<16x8xf32>
    %44 = arith.addf %40, %43 : vector<16x8xf32>
    %c0_25 = arith.constant 0 : index
    %c0_26 = arith.constant 0 : index
    %c0_27 = arith.constant 0 : index
    %45 = vector.load %arg8[%c0_25, %c0_26, %c0_27] : memref<4x32x8xf32, #tpu.memory_space<vmem>>, vector<1x32x8xf32>
    %46 = vector.shape_cast %45 : vector<1x32x8xf32> to vector<32x8xf32>
    %cst_28 = arith.constant dense<0.000000e+00> : vector<16x8xf32>
    %47 = tpu.matmul %33, %46, %cst_28 {dimension_numbers = #tpu.dot_dimension_numbers<[1], [0], [0], [1], [0, 0, 1, 1], [], []>} : vector<16x32xf32>, vector<32x8xf32>, vector<16x8xf32> -> vector<16x8xf32>
    %c0_29 = arith.constant 0 : index
    %c0_30 = arith.constant 0 : index
    %c0_31 = arith.constant 0 : index
    %48 = vector.load %arg11[%c0_29, %c0_30, %c0_31] : memref<4x1x8xf32, #tpu.memory_space<vmem>>, vector<1x1x8xf32>
    %49 = vector.shape_cast %48 : vector<1x1x8xf32> to vector<1x8xf32>
    %50 = vector.broadcast %49 : vector<1x8xf32> to vector<16x8xf32>
    %51 = arith.addf %47, %50 : vector<16x8xf32>
    %c0_32 = arith.constant 0 : index
    %c0_33 = arith.constant 0 : index
    %c0_34 = arith.constant 0 : index
    %52 = vector.load %arg9[%c0_32, %c0_33, %c0_34] : memref<4x32x8xf32, #tpu.memory_space<vmem>>, vector<1x32x8xf32>
    %53 = vector.shape_cast %52 : vector<1x32x8xf32> to vector<32x8xf32>
    %cst_35 = arith.constant dense<0.000000e+00> : vector<16x8xf32>
    %54 = tpu.matmul %33, %53, %cst_35 {dimension_numbers = #tpu.dot_dimension_numbers<[1], [0], [0], [1], [0, 0, 1, 1], [], []>} : vector<16x32xf32>, vector<32x8xf32>, vector<16x8xf32> -> vector<16x8xf32>
    %c0_36 = arith.constant 0 : index
    %c0_37 = arith.constant 0 : index
    %c0_38 = arith.constant 0 : index
    %55 = vector.load %arg12[%c0_36, %c0_37, %c0_38] : memref<4x1x8xf32, #tpu.memory_space<vmem>>, vector<1x1x8xf32>
    %56 = vector.shape_cast %55 : vector<1x1x8xf32> to vector<1x8xf32>
    %57 = vector.broadcast %56 : vector<1x8xf32> to vector<16x8xf32>
    %58 = arith.addf %54, %57 : vector<16x8xf32>
    %cst_39 = arith.constant dense<0.000000e+00> : vector<16x16xf32>
    %59 = tpu.matmul %44, %51, %cst_39 {dimension_numbers = #tpu.dot_dimension_numbers<[1], [1], [0], [0], [0, 0, 1, 0], [], []>} : vector<16x8xf32>, vector<16x8xf32>, vector<16x16xf32> -> vector<16x16xf32>
    %cst_40 = arith.constant 0.353553385 : f32
    %60 = vector.broadcast %cst_40 : f32 to vector<16x16xf32>
    %61 = arith.mulf %59, %60 : vector<16x16xf32>
    %cst_41 = arith.constant -1.000000e+30 : f32
    %62 = vector.broadcast %cst_41 : f32 to vector<16x16xf32>
    %63 = arith.select %36, %61, %62 : vector<16x16xi1>, vector<16x16xf32>
    %cst_42 = arith.constant dense<0xFF800000> : vector<16xf32>
    %64 = vector.multi_reduction <maximumf>, %63, %cst_42 [1] : vector<16x16xf32> to vector<16xf32>
    %65 = vector.shape_cast %64 : vector<16xf32> to vector<16x1xf32>
    %66 = vector.broadcast %65 : vector<16x1xf32> to vector<16x16xf32>
    %67 = arith.subf %63, %66 : vector<16x16xf32>
    %68 = math.exp %67 : vector<16x16xf32>
    %cst_43 = arith.constant dense<0.000000e+00> : vector<16xf32>
    %69 = vector.multi_reduction <add>, %68, %cst_43 [1] : vector<16x16xf32> to vector<16xf32>
    %70 = vector.shape_cast %69 : vector<16xf32> to vector<16x1xf32>
    %71 = tpu.reciprocal %70 {approx = true} : vector<16x1xf32> -> vector<16x1xf32>
    %72 = vector.broadcast %71 : vector<16x1xf32> to vector<16x16xf32>
    %73 = arith.mulf %68, %72 : vector<16x16xf32>
    %cst_44 = arith.constant dense<0.000000e+00> : vector<16x8xf32>
    %74 = tpu.matmul %73, %58, %cst_44 {dimension_numbers = #tpu.dot_dimension_numbers<[1], [0], [0], [1], [0, 0, 1, 1], [], []>} : vector<16x16xf32>, vector<16x8xf32>, vector<16x8xf32> -> vector<16x8xf32>
    %c0_45 = arith.constant 0 : index
    %c0_46 = arith.constant 0 : index
    %c0_47 = arith.constant 0 : index
    %75 = vector.load %arg13[%c0_45, %c0_46, %c0_47] : memref<4x8x32xf32, #tpu.memory_space<vmem>>, vector<1x8x32xf32>
    %76 = vector.shape_cast %75 : vector<1x8x32xf32> to vector<8x32xf32>
    %cst_48 = arith.constant dense<0.000000e+00> : vector<16x32xf32>
    %77 = tpu.matmul %74, %76, %cst_48 {dimension_numbers = #tpu.dot_dimension_numbers<[1], [0], [0], [1], [0, 0, 1, 1], [], []>} : vector<16x8xf32>, vector<8x32xf32>, vector<16x32xf32> -> vector<16x32xf32>
    %78 = arith.addf %37, %77 : vector<16x32xf32>
    %c1 = arith.constant 1 : index
    %c0_49 = arith.constant 0 : index
    %c0_50 = arith.constant 0 : index
    %79 = vector.load %arg7[%c1, %c0_49, %c0_50] : memref<4x32x8xf32, #tpu.memory_space<vmem>>, vector<1x32x8xf32>
    %80 = vector.shape_cast %79 : vector<1x32x8xf32> to vector<32x8xf32>
    %cst_51 = arith.constant dense<0.000000e+00> : vector<16x8xf32>
    %81 = tpu.matmul %33, %80, %cst_51 {dimension_numbers = #tpu.dot_dimension_numbers<[1], [0], [0], [1], [0, 0, 1, 1], [], []>} : vector<16x32xf32>, vector<32x8xf32>, vector<16x8xf32> -> vector<16x8xf32>
    %c1_52 = arith.constant 1 : index
    %c0_53 = arith.constant 0 : index
    %c0_54 = arith.constant 0 : index
    %82 = vector.load %arg10[%c1_52, %c0_53, %c0_54] : memref<4x1x8xf32, #tpu.memory_space<vmem>>, vector<1x1x8xf32>
    %83 = vector.shape_cast %82 : vector<1x1x8xf32> to vector<1x8xf32>
    %84 = vector.broadcast %83 : vector<1x8xf32> to vector<16x8xf32>
    %85 = arith.addf %81, %84 : vector<16x8xf32>
    %c1_55 = arith.constant 1 : index
    %c0_56 = arith.constant 0 : index
    %c0_57 = arith.constant 0 : index
    %86 = vector.load %arg8[%c1_55, %c0_56, %c0_57] : memref<4x32x8xf32, #tpu.memory_space<vmem>>, vector<1x32x8xf32>
    %87 = vector.shape_cast %86 : vector<1x32x8xf32> to vector<32x8xf32>
    %cst_58 = arith.constant dense<0.000000e+00> : vector<16x8xf32>
    %88 = tpu.matmul %33, %87, %cst_58 {dimension_numbers = #tpu.dot_dimension_numbers<[1], [0], [0], [1], [0, 0, 1, 1], [], []>} : vector<16x32xf32>, vector<32x8xf32>, vector<16x8xf32> -> vector<16x8xf32>
    %c1_59 = arith.constant 1 : index
    %c0_60 = arith.constant 0 : index
    %c0_61 = arith.constant 0 : index
    %89 = vector.load %arg11[%c1_59, %c0_60, %c0_61] : memref<4x1x8xf32, #tpu.memory_space<vmem>>, vector<1x1x8xf32>
    %90 = vector.shape_cast %89 : vector<1x1x8xf32> to vector<1x8xf32>
    %91 = vector.broadcast %90 : vector<1x8xf32> to vector<16x8xf32>
    %92 = arith.addf %88, %91 : vector<16x8xf32>
    %c1_62 = arith.constant 1 : index
    %c0_63 = arith.constant 0 : index
    %c0_64 = arith.constant 0 : index
    %93 = vector.load %arg9[%c1_62, %c0_63, %c0_64] : memref<4x32x8xf32, #tpu.memory_space<vmem>>, vector<1x32x8xf32>
    %94 = vector.shape_cast %93 : vector<1x32x8xf32> to vector<32x8xf32>
    %cst_65 = arith.constant dense<0.000000e+00> : vector<16x8xf32>
    %95 = tpu.matmul %33, %94, %cst_65 {dimension_numbers = #tpu.dot_dimension_numbers<[1], [0], [0], [1], [0, 0, 1, 1], [], []>} : vector<16x32xf32>, vector<32x8xf32>, vector<16x8xf32> -> vector<16x8xf32>
    %c1_66 = arith.constant 1 : index
    %c0_67 = arith.constant 0 : index
    %c0_68 = arith.constant 0 : index
    %96 = vector.load %arg12[%c1_66, %c0_67, %c0_68] : memref<4x1x8xf32, #tpu.memory_space<vmem>>, vector<1x1x8xf32>
    %97 = vector.shape_cast %96 : vector<1x1x8xf32> to vector<1x8xf32>
    %98 = vector.broadcast %97 : vector<1x8xf32> to vector<16x8xf32>
    %99 = arith.addf %95, %98 : vector<16x8xf32>
    %cst_69 = arith.constant dense<0.000000e+00> : vector<16x16xf32>
    %100 = tpu.matmul %85, %92, %cst_69 {dimension_numbers = #tpu.dot_dimension_numbers<[1], [1], [0], [0], [0, 0, 1, 0], [], []>} : vector<16x8xf32>, vector<16x8xf32>, vector<16x16xf32> -> vector<16x16xf32>
    %cst_70 = arith.constant 0.353553385 : f32
    %101 = vector.broadcast %cst_70 : f32 to vector<16x16xf32>
    %102 = arith.mulf %100, %101 : vector<16x16xf32>
    %cst_71 = arith.constant -1.000000e+30 : f32
    %103 = vector.broadcast %cst_71 : f32 to vector<16x16xf32>
    %104 = arith.select %36, %102, %103 : vector<16x16xi1>, vector<16x16xf32>
    %cst_72 = arith.constant dense<0xFF800000> : vector<16xf32>
    %105 = vector.multi_reduction <maximumf>, %104, %cst_72 [1] : vector<16x16xf32> to vector<16xf32>
    %106 = vector.shape_cast %105 : vector<16xf32> to vector<16x1xf32>
    %107 = vector.broadcast %106 : vector<16x1xf32> to vector<16x16xf32>
    %108 = arith.subf %104, %107 : vector<16x16xf32>
    %109 = math.exp %108 : vector<16x16xf32>
    %cst_73 = arith.constant dense<0.000000e+00> : vector<16xf32>
    %110 = vector.multi_reduction <add>, %109, %cst_73 [1] : vector<16x16xf32> to vector<16xf32>
    %111 = vector.shape_cast %110 : vector<16xf32> to vector<16x1xf32>
    %112 = tpu.reciprocal %111 {approx = true} : vector<16x1xf32> -> vector<16x1xf32>
    %113 = vector.broadcast %112 : vector<16x1xf32> to vector<16x16xf32>
    %114 = arith.mulf %109, %113 : vector<16x16xf32>
    %cst_74 = arith.constant dense<0.000000e+00> : vector<16x8xf32>
    %115 = tpu.matmul %114, %99, %cst_74 {dimension_numbers = #tpu.dot_dimension_numbers<[1], [0], [0], [1], [0, 0, 1, 1], [], []>} : vector<16x16xf32>, vector<16x8xf32>, vector<16x8xf32> -> vector<16x8xf32>
    %c1_75 = arith.constant 1 : index
    %c0_76 = arith.constant 0 : index
    %c0_77 = arith.constant 0 : index
    %116 = vector.load %arg13[%c1_75, %c0_76, %c0_77] : memref<4x8x32xf32, #tpu.memory_space<vmem>>, vector<1x8x32xf32>
    %117 = vector.shape_cast %116 : vector<1x8x32xf32> to vector<8x32xf32>
    %cst_78 = arith.constant dense<0.000000e+00> : vector<16x32xf32>
    %118 = tpu.matmul %115, %117, %cst_78 {dimension_numbers = #tpu.dot_dimension_numbers<[1], [0], [0], [1], [0, 0, 1, 1], [], []>} : vector<16x8xf32>, vector<8x32xf32>, vector<16x32xf32> -> vector<16x32xf32>
    %119 = arith.addf %78, %118 : vector<16x32xf32>
    %c2 = arith.constant 2 : index
    %c0_79 = arith.constant 0 : index
    %c0_80 = arith.constant 0 : index
    %120 = vector.load %arg7[%c2, %c0_79, %c0_80] : memref<4x32x8xf32, #tpu.memory_space<vmem>>, vector<1x32x8xf32>
    %121 = vector.shape_cast %120 : vector<1x32x8xf32> to vector<32x8xf32>
    %cst_81 = arith.constant dense<0.000000e+00> : vector<16x8xf32>
    %122 = tpu.matmul %33, %121, %cst_81 {dimension_numbers = #tpu.dot_dimension_numbers<[1], [0], [0], [1], [0, 0, 1, 1], [], []>} : vector<16x32xf32>, vector<32x8xf32>, vector<16x8xf32> -> vector<16x8xf32>
    %c2_82 = arith.constant 2 : index
    %c0_83 = arith.constant 0 : index
    %c0_84 = arith.constant 0 : index
    %123 = vector.load %arg10[%c2_82, %c0_83, %c0_84] : memref<4x1x8xf32, #tpu.memory_space<vmem>>, vector<1x1x8xf32>
    %124 = vector.shape_cast %123 : vector<1x1x8xf32> to vector<1x8xf32>
    %125 = vector.broadcast %124 : vector<1x8xf32> to vector<16x8xf32>
    %126 = arith.addf %122, %125 : vector<16x8xf32>
    %c2_85 = arith.constant 2 : index
    %c0_86 = arith.constant 0 : index
    %c0_87 = arith.constant 0 : index
    %127 = vector.load %arg8[%c2_85, %c0_86, %c0_87] : memref<4x32x8xf32, #tpu.memory_space<vmem>>, vector<1x32x8xf32>
    %128 = vector.shape_cast %127 : vector<1x32x8xf32> to vector<32x8xf32>
    %cst_88 = arith.constant dense<0.000000e+00> : vector<16x8xf32>
    %129 = tpu.matmul %33, %128, %cst_88 {dimension_numbers = #tpu.dot_dimension_numbers<[1], [0], [0], [1], [0, 0, 1, 1], [], []>} : vector<16x32xf32>, vector<32x8xf32>, vector<16x8xf32> -> vector<16x8xf32>
    %c2_89 = arith.constant 2 : index
    %c0_90 = arith.constant 0 : index
    %c0_91 = arith.constant 0 : index
    %130 = vector.load %arg11[%c2_89, %c0_90, %c0_91] : memref<4x1x8xf32, #tpu.memory_space<vmem>>, vector<1x1x8xf32>
    %131 = vector.shape_cast %130 : vector<1x1x8xf32> to vector<1x8xf32>
    %132 = vector.broadcast %131 : vector<1x8xf32> to vector<16x8xf32>
    %133 = arith.addf %129, %132 : vector<16x8xf32>
    %c2_92 = arith.constant 2 : index
    %c0_93 = arith.constant 0 : index
    %c0_94 = arith.constant 0 : index
    %134 = vector.load %arg9[%c2_92, %c0_93, %c0_94] : memref<4x32x8xf32, #tpu.memory_space<vmem>>, vector<1x32x8xf32>
    %135 = vector.shape_cast %134 : vector<1x32x8xf32> to vector<32x8xf32>
    %cst_95 = arith.constant dense<0.000000e+00> : vector<16x8xf32>
    %136 = tpu.matmul %33, %135, %cst_95 {dimension_numbers = #tpu.dot_dimension_numbers<[1], [0], [0], [1], [0, 0, 1, 1], [], []>} : vector<16x32xf32>, vector<32x8xf32>, vector<16x8xf32> -> vector<16x8xf32>
    %c2_96 = arith.constant 2 : index
    %c0_97 = arith.constant 0 : index
    %c0_98 = arith.constant 0 : index
    %137 = vector.load %arg12[%c2_96, %c0_97, %c0_98] : memref<4x1x8xf32, #tpu.memory_space<vmem>>, vector<1x1x8xf32>
    %138 = vector.shape_cast %137 : vector<1x1x8xf32> to vector<1x8xf32>
    %139 = vector.broadcast %138 : vector<1x8xf32> to vector<16x8xf32>
    %140 = arith.addf %136, %139 : vector<16x8xf32>
    %cst_99 = arith.constant dense<0.000000e+00> : vector<16x16xf32>
    %141 = tpu.matmul %126, %133, %cst_99 {dimension_numbers = #tpu.dot_dimension_numbers<[1], [1], [0], [0], [0, 0, 1, 0], [], []>} : vector<16x8xf32>, vector<16x8xf32>, vector<16x16xf32> -> vector<16x16xf32>
    %cst_100 = arith.constant 0.353553385 : f32
    %142 = vector.broadcast %cst_100 : f32 to vector<16x16xf32>
    %143 = arith.mulf %141, %142 : vector<16x16xf32>
    %cst_101 = arith.constant -1.000000e+30 : f32
    %144 = vector.broadcast %cst_101 : f32 to vector<16x16xf32>
    %145 = arith.select %36, %143, %144 : vector<16x16xi1>, vector<16x16xf32>
    %cst_102 = arith.constant dense<0xFF800000> : vector<16xf32>
    %146 = vector.multi_reduction <maximumf>, %145, %cst_102 [1] : vector<16x16xf32> to vector<16xf32>
    %147 = vector.shape_cast %146 : vector<16xf32> to vector<16x1xf32>
    %148 = vector.broadcast %147 : vector<16x1xf32> to vector<16x16xf32>
    %149 = arith.subf %145, %148 : vector<16x16xf32>
    %150 = math.exp %149 : vector<16x16xf32>
    %cst_103 = arith.constant dense<0.000000e+00> : vector<16xf32>
    %151 = vector.multi_reduction <add>, %150, %cst_103 [1] : vector<16x16xf32> to vector<16xf32>
    %152 = vector.shape_cast %151 : vector<16xf32> to vector<16x1xf32>
    %153 = tpu.reciprocal %152 {approx = true} : vector<16x1xf32> -> vector<16x1xf32>
    %154 = vector.broadcast %153 : vector<16x1xf32> to vector<16x16xf32>
    %155 = arith.mulf %150, %154 : vector<16x16xf32>
    %cst_104 = arith.constant dense<0.000000e+00> : vector<16x8xf32>
    %156 = tpu.matmul %155, %140, %cst_104 {dimension_numbers = #tpu.dot_dimension_numbers<[1], [0], [0], [1], [0, 0, 1, 1], [], []>} : vector<16x16xf32>, vector<16x8xf32>, vector<16x8xf32> -> vector<16x8xf32>
    %c2_105 = arith.constant 2 : index
    %c0_106 = arith.constant 0 : index
    %c0_107 = arith.constant 0 : index
    %157 = vector.load %arg13[%c2_105, %c0_106, %c0_107] : memref<4x8x32xf32, #tpu.memory_space<vmem>>, vector<1x8x32xf32>
    %158 = vector.shape_cast %157 : vector<1x8x32xf32> to vector<8x32xf32>
    %cst_108 = arith.constant dense<0.000000e+00> : vector<16x32xf32>
    %159 = tpu.matmul %156, %158, %cst_108 {dimension_numbers = #tpu.dot_dimension_numbers<[1], [0], [0], [1], [0, 0, 1, 1], [], []>} : vector<16x8xf32>, vector<8x32xf32>, vector<16x32xf32> -> vector<16x32xf32>
    %160 = arith.addf %119, %159 : vector<16x32xf32>
    %c3 = arith.constant 3 : index
    %c0_109 = arith.constant 0 : index
    %c0_110 = arith.constant 0 : index
    %161 = vector.load %arg7[%c3, %c0_109, %c0_110] : memref<4x32x8xf32, #tpu.memory_space<vmem>>, vector<1x32x8xf32>
    %162 = vector.shape_cast %161 : vector<1x32x8xf32> to vector<32x8xf32>
    %cst_111 = arith.constant dense<0.000000e+00> : vector<16x8xf32>
    %163 = tpu.matmul %33, %162, %cst_111 {dimension_numbers = #tpu.dot_dimension_numbers<[1], [0], [0], [1], [0, 0, 1, 1], [], []>} : vector<16x32xf32>, vector<32x8xf32>, vector<16x8xf32> -> vector<16x8xf32>
    %c3_112 = arith.constant 3 : index
    %c0_113 = arith.constant 0 : index
    %c0_114 = arith.constant 0 : index
    %164 = vector.load %arg10[%c3_112, %c0_113, %c0_114] : memref<4x1x8xf32, #tpu.memory_space<vmem>>, vector<1x1x8xf32>
    %165 = vector.shape_cast %164 : vector<1x1x8xf32> to vector<1x8xf32>
    %166 = vector.broadcast %165 : vector<1x8xf32> to vector<16x8xf32>
    %167 = arith.addf %163, %166 : vector<16x8xf32>
    %c3_115 = arith.constant 3 : index
    %c0_116 = arith.constant 0 : index
    %c0_117 = arith.constant 0 : index
    %168 = vector.load %arg8[%c3_115, %c0_116, %c0_117] : memref<4x32x8xf32, #tpu.memory_space<vmem>>, vector<1x32x8xf32>
    %169 = vector.shape_cast %168 : vector<1x32x8xf32> to vector<32x8xf32>
    %cst_118 = arith.constant dense<0.000000e+00> : vector<16x8xf32>
    %170 = tpu.matmul %33, %169, %cst_118 {dimension_numbers = #tpu.dot_dimension_numbers<[1], [0], [0], [1], [0, 0, 1, 1], [], []>} : vector<16x32xf32>, vector<32x8xf32>, vector<16x8xf32> -> vector<16x8xf32>
    %c3_119 = arith.constant 3 : index
    %c0_120 = arith.constant 0 : index
    %c0_121 = arith.constant 0 : index
    %171 = vector.load %arg11[%c3_119, %c0_120, %c0_121] : memref<4x1x8xf32, #tpu.memory_space<vmem>>, vector<1x1x8xf32>
    %172 = vector.shape_cast %171 : vector<1x1x8xf32> to vector<1x8xf32>
    %173 = vector.broadcast %172 : vector<1x8xf32> to vector<16x8xf32>
    %174 = arith.addf %170, %173 : vector<16x8xf32>
    %c3_122 = arith.constant 3 : index
    %c0_123 = arith.constant 0 : index
    %c0_124 = arith.constant 0 : index
    %175 = vector.load %arg9[%c3_122, %c0_123, %c0_124] : memref<4x32x8xf32, #tpu.memory_space<vmem>>, vector<1x32x8xf32>
    %176 = vector.shape_cast %175 : vector<1x32x8xf32> to vector<32x8xf32>
    %cst_125 = arith.constant dense<0.000000e+00> : vector<16x8xf32>
    %177 = tpu.matmul %33, %176, %cst_125 {dimension_numbers = #tpu.dot_dimension_numbers<[1], [0], [0], [1], [0, 0, 1, 1], [], []>} : vector<16x32xf32>, vector<32x8xf32>, vector<16x8xf32> -> vector<16x8xf32>
    %c3_126 = arith.constant 3 : index
    %c0_127 = arith.constant 0 : index
    %c0_128 = arith.constant 0 : index
    %178 = vector.load %arg12[%c3_126, %c0_127, %c0_128] : memref<4x1x8xf32, #tpu.memory_space<vmem>>, vector<1x1x8xf32>
    %179 = vector.shape_cast %178 : vector<1x1x8xf32> to vector<1x8xf32>
    %180 = vector.broadcast %179 : vector<1x8xf32> to vector<16x8xf32>
    %181 = arith.addf %177, %180 : vector<16x8xf32>
    %cst_129 = arith.constant dense<0.000000e+00> : vector<16x16xf32>
    %182 = tpu.matmul %167, %174, %cst_129 {dimension_numbers = #tpu.dot_dimension_numbers<[1], [1], [0], [0], [0, 0, 1, 0], [], []>} : vector<16x8xf32>, vector<16x8xf32>, vector<16x16xf32> -> vector<16x16xf32>
    %cst_130 = arith.constant 0.353553385 : f32
    %183 = vector.broadcast %cst_130 : f32 to vector<16x16xf32>
    %184 = arith.mulf %182, %183 : vector<16x16xf32>
    %cst_131 = arith.constant -1.000000e+30 : f32
    %185 = vector.broadcast %cst_131 : f32 to vector<16x16xf32>
    %186 = arith.select %36, %184, %185 : vector<16x16xi1>, vector<16x16xf32>
    %cst_132 = arith.constant dense<0xFF800000> : vector<16xf32>
    %187 = vector.multi_reduction <maximumf>, %186, %cst_132 [1] : vector<16x16xf32> to vector<16xf32>
    %188 = vector.shape_cast %187 : vector<16xf32> to vector<16x1xf32>
    %189 = vector.broadcast %188 : vector<16x1xf32> to vector<16x16xf32>
    %190 = arith.subf %186, %189 : vector<16x16xf32>
    %191 = math.exp %190 : vector<16x16xf32>
    %cst_133 = arith.constant dense<0.000000e+00> : vector<16xf32>
    %192 = vector.multi_reduction <add>, %191, %cst_133 [1] : vector<16x16xf32> to vector<16xf32>
    %193 = vector.shape_cast %192 : vector<16xf32> to vector<16x1xf32>
    %194 = tpu.reciprocal %193 {approx = true} : vector<16x1xf32> -> vector<16x1xf32>
    %195 = vector.broadcast %194 : vector<16x1xf32> to vector<16x16xf32>
    %196 = arith.mulf %191, %195 : vector<16x16xf32>
    %cst_134 = arith.constant dense<0.000000e+00> : vector<16x8xf32>
    %197 = tpu.matmul %196, %181, %cst_134 {dimension_numbers = #tpu.dot_dimension_numbers<[1], [0], [0], [1], [0, 0, 1, 1], [], []>} : vector<16x16xf32>, vector<16x8xf32>, vector<16x8xf32> -> vector<16x8xf32>
    %c3_135 = arith.constant 3 : index
    %c0_136 = arith.constant 0 : index
    %c0_137 = arith.constant 0 : index
    %198 = vector.load %arg13[%c3_135, %c0_136, %c0_137] : memref<4x8x32xf32, #tpu.memory_space<vmem>>, vector<1x8x32xf32>
    %199 = vector.shape_cast %198 : vector<1x8x32xf32> to vector<8x32xf32>
    %cst_138 = arith.constant dense<0.000000e+00> : vector<16x32xf32>
    %200 = tpu.matmul %197, %199, %cst_138 {dimension_numbers = #tpu.dot_dimension_numbers<[1], [0], [0], [1], [0, 0, 1, 1], [], []>} : vector<16x8xf32>, vector<8x32xf32>, vector<16x32xf32> -> vector<16x32xf32>
    %201 = arith.addf %160, %200 : vector<16x32xf32>
    %202 = arith.addf %9, %201 : vector<16x32xf32>
    %c0_139 = arith.constant 0 : index
    %c0_140 = arith.constant 0 : index
    %203 = vector.load %arg14[%c0_139, %c0_140] : memref<1x32xf32, #tpu.memory_space<vmem>>, vector<1x32xf32>
    %204 = vector.broadcast %203 : vector<1x32xf32> to vector<16x32xf32>
    %205 = arith.addf %202, %204 : vector<16x32xf32>
    %c0_141 = arith.constant 0 : index
    %c0_142 = arith.constant 0 : index
    %206 = vector.load %arg15[%c0_141, %c0_142] : memref<1x32xf32, #tpu.memory_space<vmem>>, vector<1x32xf32>
    %c0_143 = arith.constant 0 : index
    %c0_144 = arith.constant 0 : index
    %207 = vector.load %arg16[%c0_143, %c0_144] : memref<1x32xf32, #tpu.memory_space<vmem>>, vector<1x32xf32>
    %cst_145 = arith.constant dense<0.000000e+00> : vector<16xf32>
    %208 = vector.multi_reduction <add>, %205, %cst_145 [1] : vector<16x32xf32> to vector<16xf32>
    %209 = vector.shape_cast %208 : vector<16xf32> to vector<16x1xf32>
    %cst_146 = arith.constant 3.200000e+01 : f32
    %210 = vector.broadcast %cst_146 : f32 to vector<16x1xf32>
    %211 = arith.divf %209, %210 : vector<16x1xf32>
    %212 = vector.broadcast %211 : vector<16x1xf32> to vector<16x32xf32>
    %213 = arith.subf %205, %212 : vector<16x32xf32>
    %214 = arith.mulf %213, %213 : vector<16x32xf32>
    %cst_147 = arith.constant dense<0.000000e+00> : vector<16xf32>
    %215 = vector.multi_reduction <add>, %214, %cst_147 [1] : vector<16x32xf32> to vector<16xf32>
    %216 = vector.shape_cast %215 : vector<16xf32> to vector<16x1xf32>
    %cst_148 = arith.constant 3.200000e+01 : f32
    %217 = vector.broadcast %cst_148 : f32 to vector<16x1xf32>
    %218 = arith.divf %216, %217 : vector<16x1xf32>
    %219 = vector.broadcast %211 : vector<16x1xf32> to vector<16x32xf32>
    %220 = arith.subf %205, %219 : vector<16x32xf32>
    %cst_149 = arith.constant 9.99999974E-6 : f32
    %221 = vector.broadcast %cst_149 : f32 to vector<16x1xf32>
    %222 = arith.addf %218, %221 : vector<16x1xf32>
    %223 = math.rsqrt %222 : vector<16x1xf32>
    %224 = vector.broadcast %223 : vector<16x1xf32> to vector<16x32xf32>
    %225 = arith.mulf %220, %224 : vector<16x32xf32>
    %226 = vector.broadcast %206 : vector<1x32xf32> to vector<16x32xf32>
    %227 = arith.mulf %225, %226 : vector<16x32xf32>
    %228 = vector.broadcast %207 : vector<1x32xf32> to vector<16x32xf32>
    %229 = arith.addf %227, %228 : vector<16x32xf32>
    %c0_150 = arith.constant 0 : index
    %c0_151 = arith.constant 0 : index
    %230 = vector.load %arg17[%c0_150, %c0_151] : memref<32x128xf32, #tpu.memory_space<vmem>>, vector<32x128xf32>
    %cst_152 = arith.constant dense<0.000000e+00> : vector<16x128xf32>
    %231 = tpu.matmul %229, %230, %cst_152 {dimension_numbers = #tpu.dot_dimension_numbers<[1], [0], [0], [1], [0, 0, 1, 1], [], []>} : vector<16x32xf32>, vector<32x128xf32>, vector<16x128xf32> -> vector<16x128xf32>
    %c0_153 = arith.constant 0 : index
    %c0_154 = arith.constant 0 : index
    %232 = vector.load %arg18[%c0_153, %c0_154] : memref<1x128xf32, #tpu.memory_space<vmem>>, vector<1x128xf32>
    %233 = vector.broadcast %232 : vector<1x128xf32> to vector<16x128xf32>
    %234 = arith.addf %231, %233 : vector<16x128xf32>
    %cst_155 = arith.constant 5.000000e-01 : f32
    %235 = vector.broadcast %cst_155 : f32 to vector<16x128xf32>
    %236 = arith.mulf %235, %234 : vector<16x128xf32>
    %cst_156 = arith.constant 0.707106769 : f32
    %237 = vector.broadcast %cst_156 : f32 to vector<16x128xf32>
    %238 = arith.mulf %234, %237 : vector<16x128xf32>
    %cst_157 = arith.constant 0.000000e+00 : f32
    %239 = vector.broadcast %cst_157 : f32 to vector<16x128xf32>
    %240 = arith.cmpf olt, %238, %239 : vector<16x128xf32>
    %cst_158 = arith.constant -1.000000e+00 : f32
    %cst_159 = arith.constant 1.000000e+00 : f32
    %241 = vector.broadcast %cst_158 : f32 to vector<16x128xf32>
    %242 = vector.broadcast %cst_159 : f32 to vector<16x128xf32>
    %243 = arith.select %240, %241, %242 : vector<16x128xi1>, vector<16x128xf32>
    %244 = math.absf %238 : vector<16x128xf32>
    %cst_160 = arith.constant 0.327591091 : f32
    %245 = vector.broadcast %cst_160 : f32 to vector<16x128xf32>
    %246 = arith.mulf %245, %244 : vector<16x128xf32>
    %cst_161 = arith.constant 1.000000e+00 : f32
    %247 = vector.broadcast %cst_161 : f32 to vector<16x128xf32>
    %248 = arith.addf %247, %246 : vector<16x128xf32>
    %cst_162 = arith.constant 1.000000e+00 : f32
    %249 = vector.broadcast %cst_162 : f32 to vector<16x128xf32>
    %250 = arith.divf %249, %248 : vector<16x128xf32>
    %cst_163 = arith.constant 1.06140542 : f32
    %251 = vector.broadcast %cst_163 : f32 to vector<16x128xf32>
    %252 = arith.mulf %251, %250 : vector<16x128xf32>
    %cst_164 = arith.constant -1.45315206 : f32
    %253 = vector.broadcast %cst_164 : f32 to vector<16x128xf32>
    %254 = arith.addf %252, %253 : vector<16x128xf32>
    %255 = arith.mulf %254, %250 : vector<16x128xf32>
    %cst_165 = arith.constant 1.42141378 : f32
    %256 = vector.broadcast %cst_165 : f32 to vector<16x128xf32>
    %257 = arith.addf %255, %256 : vector<16x128xf32>
    %258 = arith.mulf %257, %250 : vector<16x128xf32>
    %cst_166 = arith.constant -0.284496725 : f32
    %259 = vector.broadcast %cst_166 : f32 to vector<16x128xf32>
    %260 = arith.addf %258, %259 : vector<16x128xf32>
    %261 = arith.mulf %260, %250 : vector<16x128xf32>
    %cst_167 = arith.constant 0.254829586 : f32
    %262 = vector.broadcast %cst_167 : f32 to vector<16x128xf32>
    %263 = arith.addf %261, %262 : vector<16x128xf32>
    %264 = arith.mulf %263, %250 : vector<16x128xf32>
    %cst_168 = arith.constant 0.000000e+00 : f32
    %265 = vector.broadcast %cst_168 : f32 to vector<16x128xf32>
    %266 = arith.subf %265, %244 : vector<16x128xf32>
    %267 = arith.mulf %266, %244 : vector<16x128xf32>
    %268 = math.exp %267 : vector<16x128xf32>
    %269 = arith.mulf %264, %268 : vector<16x128xf32>
    %cst_169 = arith.constant 1.000000e+00 : f32
    %270 = vector.broadcast %cst_169 : f32 to vector<16x128xf32>
    %271 = arith.subf %270, %269 : vector<16x128xf32>
    %272 = arith.mulf %243, %271 : vector<16x128xf32>
    %cst_170 = arith.constant 1.000000e+00 : f32
    %273 = vector.broadcast %cst_170 : f32 to vector<16x128xf32>
    %274 = arith.addf %273, %272 : vector<16x128xf32>
    %275 = arith.mulf %236, %274 : vector<16x128xf32>
    %c0_171 = arith.constant 0 : index
    %c0_172 = arith.constant 0 : index
    %276 = vector.load %arg19[%c0_171, %c0_172] : memref<128x32xf32, #tpu.memory_space<vmem>>, vector<128x32xf32>
    %cst_173 = arith.constant dense<0.000000e+00> : vector<16x32xf32>
    %277 = tpu.matmul %275, %276, %cst_173 {dimension_numbers = #tpu.dot_dimension_numbers<[1], [0], [0], [1], [0, 0, 1, 1], [], []>} : vector<16x128xf32>, vector<128x32xf32>, vector<16x32xf32> -> vector<16x32xf32>
    %278 = arith.addf %205, %277 : vector<16x32xf32>
    %c0_174 = arith.constant 0 : index
    %c0_175 = arith.constant 0 : index
    %279 = vector.load %arg20[%c0_174, %c0_175] : memref<1x32xf32, #tpu.memory_space<vmem>>, vector<1x32xf32>
    %280 = vector.broadcast %279 : vector<1x32xf32> to vector<16x32xf32>
    %281 = arith.addf %278, %280 : vector<16x32xf32>
    %c0_176 = arith.constant 0 : index
    %c0_177 = arith.constant 0 : index
    %282 = vector.load %arg21[%c0_176, %c0_177] : memref<1x32xf32, #tpu.memory_space<vmem>>, vector<1x32xf32>
    %c0_178 = arith.constant 0 : index
    %c0_179 = arith.constant 0 : index
    %283 = vector.load %arg22[%c0_178, %c0_179] : memref<1x32xf32, #tpu.memory_space<vmem>>, vector<1x32xf32>
    %cst_180 = arith.constant dense<0.000000e+00> : vector<16xf32>
    %284 = vector.multi_reduction <add>, %281, %cst_180 [1] : vector<16x32xf32> to vector<16xf32>
    %285 = vector.shape_cast %284 : vector<16xf32> to vector<16x1xf32>
    %cst_181 = arith.constant 3.200000e+01 : f32
    %286 = vector.broadcast %cst_181 : f32 to vector<16x1xf32>
    %287 = arith.divf %285, %286 : vector<16x1xf32>
    %288 = vector.broadcast %287 : vector<16x1xf32> to vector<16x32xf32>
    %289 = arith.subf %281, %288 : vector<16x32xf32>
    %290 = arith.mulf %289, %289 : vector<16x32xf32>
    %cst_182 = arith.constant dense<0.000000e+00> : vector<16xf32>
    %291 = vector.multi_reduction <add>, %290, %cst_182 [1] : vector<16x32xf32> to vector<16xf32>
    %292 = vector.shape_cast %291 : vector<16xf32> to vector<16x1xf32>
    %cst_183 = arith.constant 3.200000e+01 : f32
    %293 = vector.broadcast %cst_183 : f32 to vector<16x1xf32>
    %294 = arith.divf %292, %293 : vector<16x1xf32>
    %295 = vector.broadcast %287 : vector<16x1xf32> to vector<16x32xf32>
    %296 = arith.subf %281, %295 : vector<16x32xf32>
    %cst_184 = arith.constant 9.99999974E-6 : f32
    %297 = vector.broadcast %cst_184 : f32 to vector<16x1xf32>
    %298 = arith.addf %294, %297 : vector<16x1xf32>
    %299 = math.rsqrt %298 : vector<16x1xf32>
    %300 = vector.broadcast %299 : vector<16x1xf32> to vector<16x32xf32>
    %301 = arith.mulf %296, %300 : vector<16x32xf32>
    %302 = vector.broadcast %282 : vector<1x32xf32> to vector<16x32xf32>
    %303 = arith.mulf %301, %302 : vector<16x32xf32>
    %304 = vector.broadcast %283 : vector<1x32xf32> to vector<16x32xf32>
    %305 = arith.addf %303, %304 : vector<16x32xf32>
    %c0_185 = arith.constant 0 : index
    %c0_186 = arith.constant 0 : index
    %306 = vector.load %arg23[%c0_185, %c0_186] : memref<32x4xf32, #tpu.memory_space<vmem>>, vector<32x4xf32>
    %cst_187 = arith.constant dense<0.000000e+00> : vector<16x4xf32>
    %307 = tpu.matmul %305, %306, %cst_187 {dimension_numbers = #tpu.dot_dimension_numbers<[1], [0], [0], [1], [0, 0, 1, 1], [], []>} : vector<16x32xf32>, vector<32x4xf32>, vector<16x4xf32> -> vector<16x4xf32>
    %c0_188 = arith.constant 0 : index
    %c0_189 = arith.constant 0 : index
    %308 = vector.load %arg24[%c0_188, %c0_189] : memref<1x4xf32, #tpu.memory_space<vmem>>, vector<1x4xf32>
    %309 = vector.broadcast %308 : vector<1x4xf32> to vector<16x4xf32>
    %310 = arith.addf %307, %309 : vector<16x4xf32>
    %cst_190 = arith.constant dense<0xFF800000> : vector<4xf32>
    %311 = vector.multi_reduction <maximumf>, %310, %cst_190 [0] : vector<16x4xf32> to vector<4xf32>
    %312 = vector.shape_cast %311 : vector<4xf32> to vector<1x4xf32>
    %313 = vector.broadcast %312 : vector<1x4xf32> to vector<16x4xf32>
    %314 = arith.subf %310, %313 : vector<16x4xf32>
    %315 = math.exp %314 : vector<16x4xf32>
    %cst_191 = arith.constant dense<0.000000e+00> : vector<4xf32>
    %316 = vector.multi_reduction <add>, %315, %cst_191 [0] : vector<16x4xf32> to vector<4xf32>
    %317 = vector.shape_cast %316 : vector<4xf32> to vector<1x4xf32>
    %318 = tpu.reciprocal %317 {approx = true} : vector<1x4xf32> -> vector<1x4xf32>
    %319 = vector.broadcast %318 : vector<1x4xf32> to vector<16x4xf32>
    %320 = arith.mulf %315, %319 : vector<16x4xf32>
    %c0_192 = arith.constant 0 : index
    %c0_193 = arith.constant 0 : index
    %321 = vector.load %arg32[%c0_192, %c0_193] : memref<16x4xf32, #tpu.memory_space<vmem>>, vector<16x4xf32>
    tpu.vector_store %arg32[%c0_192, %c0_193], %320 {strides = array<i32>} : memref<16x4xf32, #tpu.memory_space<vmem>>, vector<16x4xf32>,
    %322 = tpu.iota {dimensions = array<i32: 0>} : vector<16x4xi32>
    %323 = arith.sitofp %322 : vector<16x4xi32> to vector<16x4xf32>
    %cst_194 = arith.constant 0.000000e+00 : f32
    %324 = vector.broadcast %cst_194 : f32 to vector<16x4xf32>
    %cst_195 = arith.constant dense<0xFF800000> : vector<4xf32>
    %325 = vector.multi_reduction <maximumf>, %320, %cst_195 [0] : vector<16x4xf32> to vector<4xf32>
    %326 = vector.shape_cast %325 : vector<4xf32> to vector<1x4xf32>
    %327 = vector.broadcast %326 : vector<1x4xf32> to vector<16x4xf32>
    %328 = arith.cmpf oge, %320, %327 : vector<16x4xf32>
    %cst_196 = arith.constant 1.600000e+01 : f32
    %329 = vector.broadcast %cst_196 : f32 to vector<16x4xf32>
    %330 = arith.select %328, %323, %329 : vector<16x4xi1>, vector<16x4xf32>
    %cst_197 = arith.constant dense<0x7F800000> : vector<4xf32>
    %331 = vector.multi_reduction <minimumf>, %330, %cst_197 [0] : vector<16x4xf32> to vector<4xf32>
    %332 = vector.shape_cast %331 : vector<4xf32> to vector<1x4xf32>
    %333 = arith.fptosi %332 : vector<1x4xf32> to vector<1x4xi32>
    %334 = vector.broadcast %333 : vector<1x4xi32> to vector<16x4xi32>
    %335 = arith.cmpi eq, %322, %334 : vector<16x4xi32>
    %c0_198 = arith.constant 0 : index
    %c0_199 = arith.constant 0 : index
    %336 = vector.load %arg33[%c0_198, %c0_199] : memref<8x4xf32, #tpu.memory_space<vmem>>, vector<1x4xf32>
    tpu.vector_store %arg33[%c0_198, %c0_199], %326 {strides = array<i32>} : memref<8x4xf32, #tpu.memory_space<vmem>>, vector<1x4xf32>,
    %c0_200 = arith.constant 0 : index
    %c0_201 = arith.constant 0 : index
    %337 = vector.load %arg34[%c0_200, %c0_201] : memref<8x4xi32, #tpu.memory_space<vmem>>, vector<1x4xi32>
    tpu.vector_store %arg34[%c0_200, %c0_201], %333 {strides = array<i32>} : memref<8x4xi32, #tpu.memory_space<vmem>>, vector<1x4xi32>,
    %338 = arith.extui %335 : vector<16x4xi1> to vector<16x4xi32>
    %339 = arith.sitofp %338 : vector<16x4xi32> to vector<16x4xf32>
    %340 = arith.addf %324, %339 : vector<16x4xf32>
    %cst_202 = arith.constant -1.000000e+00 : f32
    %341 = vector.broadcast %cst_202 : f32 to vector<16x4xf32>
    %342 = arith.select %335, %341, %320 : vector<16x4xi1>, vector<16x4xf32>
    %cst_203 = arith.constant dense<0xFF800000> : vector<4xf32>
    %343 = vector.multi_reduction <maximumf>, %342, %cst_203 [0] : vector<16x4xf32> to vector<4xf32>
    %344 = vector.shape_cast %343 : vector<4xf32> to vector<1x4xf32>
    %345 = vector.broadcast %344 : vector<1x4xf32> to vector<16x4xf32>
    %346 = arith.cmpf oge, %342, %345 : vector<16x4xf32>
    %cst_204 = arith.constant 1.600000e+01 : f32
    %347 = vector.broadcast %cst_204 : f32 to vector<16x4xf32>
    %348 = arith.select %346, %323, %347 : vector<16x4xi1>, vector<16x4xf32>
    %cst_205 = arith.constant dense<0x7F800000> : vector<4xf32>
    %349 = vector.multi_reduction <minimumf>, %348, %cst_205 [0] : vector<16x4xf32> to vector<4xf32>
    %350 = vector.shape_cast %349 : vector<4xf32> to vector<1x4xf32>
    %351 = arith.fptosi %350 : vector<1x4xf32> to vector<1x4xi32>
    %352 = vector.broadcast %351 : vector<1x4xi32> to vector<16x4xi32>
    %353 = arith.cmpi eq, %322, %352 : vector<16x4xi32>
    %c1_206 = arith.constant 1 : index
    %c0_207 = arith.constant 0 : index
    %354 = vector.load %arg33[%c1_206, %c0_207] : memref<8x4xf32, #tpu.memory_space<vmem>>, vector<1x4xf32>
    tpu.vector_store %arg33[%c1_206, %c0_207], %344 {strides = array<i32>} : memref<8x4xf32, #tpu.memory_space<vmem>>, vector<1x4xf32>,
    %c1_208 = arith.constant 1 : index
    %c0_209 = arith.constant 0 : index
    %355 = vector.load %arg34[%c1_208, %c0_209] : memref<8x4xi32, #tpu.memory_space<vmem>>, vector<1x4xi32>
    tpu.vector_store %arg34[%c1_208, %c0_209], %351 {strides = array<i32>} : memref<8x4xi32, #tpu.memory_space<vmem>>, vector<1x4xi32>,
    %356 = arith.extui %353 : vector<16x4xi1> to vector<16x4xi32>
    %357 = arith.sitofp %356 : vector<16x4xi32> to vector<16x4xf32>
    %358 = arith.addf %340, %357 : vector<16x4xf32>
    %cst_210 = arith.constant -1.000000e+00 : f32
    %359 = vector.broadcast %cst_210 : f32 to vector<16x4xf32>
    %360 = arith.select %353, %359, %342 : vector<16x4xi1>, vector<16x4xf32>
    %cst_211 = arith.constant dense<0xFF800000> : vector<4xf32>
    %361 = vector.multi_reduction <maximumf>, %360, %cst_211 [0] : vector<16x4xf32> to vector<4xf32>
    %362 = vector.shape_cast %361 : vector<4xf32> to vector<1x4xf32>
    %363 = vector.broadcast %362 : vector<1x4xf32> to vector<16x4xf32>
    %364 = arith.cmpf oge, %360, %363 : vector<16x4xf32>
    %cst_212 = arith.constant 1.600000e+01 : f32
    %365 = vector.broadcast %cst_212 : f32 to vector<16x4xf32>
    %366 = arith.select %364, %323, %365 : vector<16x4xi1>, vector<16x4xf32>
    %cst_213 = arith.constant dense<0x7F800000> : vector<4xf32>
    %367 = vector.multi_reduction <minimumf>, %366, %cst_213 [0] : vector<16x4xf32> to vector<4xf32>
    %368 = vector.shape_cast %367 : vector<4xf32> to vector<1x4xf32>
    %369 = arith.fptosi %368 : vector<1x4xf32> to vector<1x4xi32>
    %370 = vector.broadcast %369 : vector<1x4xi32> to vector<16x4xi32>
    %371 = arith.cmpi eq, %322, %370 : vector<16x4xi32>
    %c2_214 = arith.constant 2 : index
    %c0_215 = arith.constant 0 : index
    %372 = vector.load %arg33[%c2_214, %c0_215] : memref<8x4xf32, #tpu.memory_space<vmem>>, vector<1x4xf32>
    tpu.vector_store %arg33[%c2_214, %c0_215], %362 {strides = array<i32>} : memref<8x4xf32, #tpu.memory_space<vmem>>, vector<1x4xf32>,
    %c2_216 = arith.constant 2 : index
    %c0_217 = arith.constant 0 : index
    %373 = vector.load %arg34[%c2_216, %c0_217] : memref<8x4xi32, #tpu.memory_space<vmem>>, vector<1x4xi32>
    tpu.vector_store %arg34[%c2_216, %c0_217], %369 {strides = array<i32>} : memref<8x4xi32, #tpu.memory_space<vmem>>, vector<1x4xi32>,
    %374 = arith.extui %371 : vector<16x4xi1> to vector<16x4xi32>
    %375 = arith.sitofp %374 : vector<16x4xi32> to vector<16x4xf32>
    %376 = arith.addf %358, %375 : vector<16x4xf32>
    %cst_218 = arith.constant -1.000000e+00 : f32
    %377 = vector.broadcast %cst_218 : f32 to vector<16x4xf32>
    %378 = arith.select %371, %377, %360 : vector<16x4xi1>, vector<16x4xf32>
    %cst_219 = arith.constant dense<0xFF800000> : vector<4xf32>
    %379 = vector.multi_reduction <maximumf>, %378, %cst_219 [0] : vector<16x4xf32> to vector<4xf32>
    %380 = vector.shape_cast %379 : vector<4xf32> to vector<1x4xf32>
    %381 = vector.broadcast %380 : vector<1x4xf32> to vector<16x4xf32>
    %382 = arith.cmpf oge, %378, %381 : vector<16x4xf32>
    %cst_220 = arith.constant 1.600000e+01 : f32
    %383 = vector.broadcast %cst_220 : f32 to vector<16x4xf32>
    %384 = arith.select %382, %323, %383 : vector<16x4xi1>, vector<16x4xf32>
    %cst_221 = arith.constant dense<0x7F800000> : vector<4xf32>
    %385 = vector.multi_reduction <minimumf>, %384, %cst_221 [0] : vector<16x4xf32> to vector<4xf32>
    %386 = vector.shape_cast %385 : vector<4xf32> to vector<1x4xf32>
    %387 = arith.fptosi %386 : vector<1x4xf32> to vector<1x4xi32>
    %388 = vector.broadcast %387 : vector<1x4xi32> to vector<16x4xi32>
    %389 = arith.cmpi eq, %322, %388 : vector<16x4xi32>
    %c3_222 = arith.constant 3 : index
    %c0_223 = arith.constant 0 : index
    %390 = vector.load %arg33[%c3_222, %c0_223] : memref<8x4xf32, #tpu.memory_space<vmem>>, vector<1x4xf32>
    tpu.vector_store %arg33[%c3_222, %c0_223], %380 {strides = array<i32>} : memref<8x4xf32, #tpu.memory_space<vmem>>, vector<1x4xf32>,
    %c3_224 = arith.constant 3 : index
    %c0_225 = arith.constant 0 : index
    %391 = vector.load %arg34[%c3_224, %c0_225] : memref<8x4xi32, #tpu.memory_space<vmem>>, vector<1x4xi32>
    tpu.vector_store %arg34[%c3_224, %c0_225], %387 {strides = array<i32>} : memref<8x4xi32, #tpu.memory_space<vmem>>, vector<1x4xi32>,
    %392 = arith.extui %389 : vector<16x4xi1> to vector<16x4xi32>
    %393 = arith.sitofp %392 : vector<16x4xi32> to vector<16x4xf32>
    %394 = arith.addf %376, %393 : vector<16x4xf32>
    %cst_226 = arith.constant -1.000000e+00 : f32
    %395 = vector.broadcast %cst_226 : f32 to vector<16x4xf32>
    %396 = arith.select %389, %395, %378 : vector<16x4xi1>, vector<16x4xf32>
    %cst_227 = arith.constant dense<0xFF800000> : vector<4xf32>
    %397 = vector.multi_reduction <maximumf>, %396, %cst_227 [0] : vector<16x4xf32> to vector<4xf32>
    %398 = vector.shape_cast %397 : vector<4xf32> to vector<1x4xf32>
    %399 = vector.broadcast %398 : vector<1x4xf32> to vector<16x4xf32>
    %400 = arith.cmpf oge, %396, %399 : vector<16x4xf32>
    %cst_228 = arith.constant 1.600000e+01 : f32
    %401 = vector.broadcast %cst_228 : f32 to vector<16x4xf32>
    %402 = arith.select %400, %323, %401 : vector<16x4xi1>, vector<16x4xf32>
    %cst_229 = arith.constant dense<0x7F800000> : vector<4xf32>
    %403 = vector.multi_reduction <minimumf>, %402, %cst_229 [0] : vector<16x4xf32> to vector<4xf32>
    %404 = vector.shape_cast %403 : vector<4xf32> to vector<1x4xf32>
    %405 = arith.fptosi %404 : vector<1x4xf32> to vector<1x4xi32>
    %406 = vector.broadcast %405 : vector<1x4xi32> to vector<16x4xi32>
    %407 = arith.cmpi eq, %322, %406 : vector<16x4xi32>
    %c4 = arith.constant 4 : index
    %c0_230 = arith.constant 0 : index
    %408 = vector.load %arg33[%c4, %c0_230] : memref<8x4xf32, #tpu.memory_space<vmem>>, vector<1x4xf32>
    tpu.vector_store %arg33[%c4, %c0_230], %398 {strides = array<i32>} : memref<8x4xf32, #tpu.memory_space<vmem>>, vector<1x4xf32>,
    %c4_231 = arith.constant 4 : index
    %c0_232 = arith.constant 0 : index
    %409 = vector.load %arg34[%c4_231, %c0_232] : memref<8x4xi32, #tpu.memory_space<vmem>>, vector<1x4xi32>
    tpu.vector_store %arg34[%c4_231, %c0_232], %405 {strides = array<i32>} : memref<8x4xi32, #tpu.memory_space<vmem>>, vector<1x4xi32>,
    %410 = arith.extui %407 : vector<16x4xi1> to vector<16x4xi32>
    %411 = arith.sitofp %410 : vector<16x4xi32> to vector<16x4xf32>
    %412 = arith.addf %394, %411 : vector<16x4xf32>
    %cst_233 = arith.constant -1.000000e+00 : f32
    %413 = vector.broadcast %cst_233 : f32 to vector<16x4xf32>
    %414 = arith.select %407, %413, %396 : vector<16x4xi1>, vector<16x4xf32>
    %cst_234 = arith.constant dense<0xFF800000> : vector<4xf32>
    %415 = vector.multi_reduction <maximumf>, %414, %cst_234 [0] : vector<16x4xf32> to vector<4xf32>
    %416 = vector.shape_cast %415 : vector<4xf32> to vector<1x4xf32>
    %417 = vector.broadcast %416 : vector<1x4xf32> to vector<16x4xf32>
    %418 = arith.cmpf oge, %414, %417 : vector<16x4xf32>
    %cst_235 = arith.constant 1.600000e+01 : f32
    %419 = vector.broadcast %cst_235 : f32 to vector<16x4xf32>
    %420 = arith.select %418, %323, %419 : vector<16x4xi1>, vector<16x4xf32>
    %cst_236 = arith.constant dense<0x7F800000> : vector<4xf32>
    %421 = vector.multi_reduction <minimumf>, %420, %cst_236 [0] : vector<16x4xf32> to vector<4xf32>
    %422 = vector.shape_cast %421 : vector<4xf32> to vector<1x4xf32>
    %423 = arith.fptosi %422 : vector<1x4xf32> to vector<1x4xi32>
    %424 = vector.broadcast %423 : vector<1x4xi32> to vector<16x4xi32>
    %425 = arith.cmpi eq, %322, %424 : vector<16x4xi32>
    %c5 = arith.constant 5 : index
    %c0_237 = arith.constant 0 : index
    %426 = vector.load %arg33[%c5, %c0_237] : memref<8x4xf32, #tpu.memory_space<vmem>>, vector<1x4xf32>
    tpu.vector_store %arg33[%c5, %c0_237], %416 {strides = array<i32>} : memref<8x4xf32, #tpu.memory_space<vmem>>, vector<1x4xf32>,
    %c5_238 = arith.constant 5 : index
    %c0_239 = arith.constant 0 : index
    %427 = vector.load %arg34[%c5_238, %c0_239] : memref<8x4xi32, #tpu.memory_space<vmem>>, vector<1x4xi32>
    tpu.vector_store %arg34[%c5_238, %c0_239], %423 {strides = array<i32>} : memref<8x4xi32, #tpu.memory_space<vmem>>, vector<1x4xi32>,
    %428 = arith.extui %425 : vector<16x4xi1> to vector<16x4xi32>
    %429 = arith.sitofp %428 : vector<16x4xi32> to vector<16x4xf32>
    %430 = arith.addf %412, %429 : vector<16x4xf32>
    %cst_240 = arith.constant -1.000000e+00 : f32
    %431 = vector.broadcast %cst_240 : f32 to vector<16x4xf32>
    %432 = arith.select %425, %431, %414 : vector<16x4xi1>, vector<16x4xf32>
    %cst_241 = arith.constant dense<0xFF800000> : vector<4xf32>
    %433 = vector.multi_reduction <maximumf>, %432, %cst_241 [0] : vector<16x4xf32> to vector<4xf32>
    %434 = vector.shape_cast %433 : vector<4xf32> to vector<1x4xf32>
    %435 = vector.broadcast %434 : vector<1x4xf32> to vector<16x4xf32>
    %436 = arith.cmpf oge, %432, %435 : vector<16x4xf32>
    %cst_242 = arith.constant 1.600000e+01 : f32
    %437 = vector.broadcast %cst_242 : f32 to vector<16x4xf32>
    %438 = arith.select %436, %323, %437 : vector<16x4xi1>, vector<16x4xf32>
    %cst_243 = arith.constant dense<0x7F800000> : vector<4xf32>
    %439 = vector.multi_reduction <minimumf>, %438, %cst_243 [0] : vector<16x4xf32> to vector<4xf32>
    %440 = vector.shape_cast %439 : vector<4xf32> to vector<1x4xf32>
    %441 = arith.fptosi %440 : vector<1x4xf32> to vector<1x4xi32>
    %442 = vector.broadcast %441 : vector<1x4xi32> to vector<16x4xi32>
    %443 = arith.cmpi eq, %322, %442 : vector<16x4xi32>
    %c6 = arith.constant 6 : index
    %c0_244 = arith.constant 0 : index
    %444 = vector.load %arg33[%c6, %c0_244] : memref<8x4xf32, #tpu.memory_space<vmem>>, vector<1x4xf32>
    tpu.vector_store %arg33[%c6, %c0_244], %434 {strides = array<i32>} : memref<8x4xf32, #tpu.memory_space<vmem>>, vector<1x4xf32>,
    %c6_245 = arith.constant 6 : index
    %c0_246 = arith.constant 0 : index
    %445 = vector.load %arg34[%c6_245, %c0_246] : memref<8x4xi32, #tpu.memory_space<vmem>>, vector<1x4xi32>
    tpu.vector_store %arg34[%c6_245, %c0_246], %441 {strides = array<i32>} : memref<8x4xi32, #tpu.memory_space<vmem>>, vector<1x4xi32>,
    %446 = arith.extui %443 : vector<16x4xi1> to vector<16x4xi32>
    %447 = arith.sitofp %446 : vector<16x4xi32> to vector<16x4xf32>
    %448 = arith.addf %430, %447 : vector<16x4xf32>
    %cst_247 = arith.constant -1.000000e+00 : f32
    %449 = vector.broadcast %cst_247 : f32 to vector<16x4xf32>
    %450 = arith.select %443, %449, %432 : vector<16x4xi1>, vector<16x4xf32>
    %cst_248 = arith.constant dense<0xFF800000> : vector<4xf32>
    %451 = vector.multi_reduction <maximumf>, %450, %cst_248 [0] : vector<16x4xf32> to vector<4xf32>
    %452 = vector.shape_cast %451 : vector<4xf32> to vector<1x4xf32>
    %453 = vector.broadcast %452 : vector<1x4xf32> to vector<16x4xf32>
    %454 = arith.cmpf oge, %450, %453 : vector<16x4xf32>
    %cst_249 = arith.constant 1.600000e+01 : f32
    %455 = vector.broadcast %cst_249 : f32 to vector<16x4xf32>
    %456 = arith.select %454, %323, %455 : vector<16x4xi1>, vector<16x4xf32>
    %cst_250 = arith.constant dense<0x7F800000> : vector<4xf32>
    %457 = vector.multi_reduction <minimumf>, %456, %cst_250 [0] : vector<16x4xf32> to vector<4xf32>
    %458 = vector.shape_cast %457 : vector<4xf32> to vector<1x4xf32>
    %459 = arith.fptosi %458 : vector<1x4xf32> to vector<1x4xi32>
    %460 = vector.broadcast %459 : vector<1x4xi32> to vector<16x4xi32>
    %461 = arith.cmpi eq, %322, %460 : vector<16x4xi32>
    %c7 = arith.constant 7 : index
    %c0_251 = arith.constant 0 : index
    %462 = vector.load %arg33[%c7, %c0_251] : memref<8x4xf32, #tpu.memory_space<vmem>>, vector<1x4xf32>
    tpu.vector_store %arg33[%c7, %c0_251], %452 {strides = array<i32>} : memref<8x4xf32, #tpu.memory_space<vmem>>, vector<1x4xf32>,
    %c7_252 = arith.constant 7 : index
    %c0_253 = arith.constant 0 : index
    %463 = vector.load %arg34[%c7_252, %c0_253] : memref<8x4xi32, #tpu.memory_space<vmem>>, vector<1x4xi32>
    tpu.vector_store %arg34[%c7_252, %c0_253], %459 {strides = array<i32>} : memref<8x4xi32, #tpu.memory_space<vmem>>, vector<1x4xi32>,
    %464 = arith.extui %461 : vector<16x4xi1> to vector<16x4xi32>
    %465 = arith.sitofp %464 : vector<16x4xi32> to vector<16x4xf32>
    %466 = arith.addf %448, %465 : vector<16x4xf32>
    %467 = arith.mulf %320, %466 : vector<16x4xf32>
    %cst_254 = arith.constant 0.000000e+00 : f32
    %468 = vector.broadcast %cst_254 : f32 to vector<16x32xf32>
    %c0_255 = arith.constant 0 : index
    %c0_256 = arith.constant 0 : index
    %c0_257 = arith.constant 0 : index
    %469 = vector.load %arg25[%c0_255, %c0_256, %c0_257] : memref<4x32x128xf32, #tpu.memory_space<vmem>>, vector<1x32x128xf32>
    %470 = vector.shape_cast %469 : vector<1x32x128xf32> to vector<32x128xf32>
    %cst_258 = arith.constant dense<0.000000e+00> : vector<16x128xf32>
    %471 = tpu.matmul %305, %470, %cst_258 {dimension_numbers = #tpu.dot_dimension_numbers<[1], [0], [0], [1], [0, 0, 1, 1], [], []>} : vector<16x32xf32>, vector<32x128xf32>, vector<16x128xf32> -> vector<16x128xf32>
    %c0_259 = arith.constant 0 : index
    %c0_260 = arith.constant 0 : index
    %c0_261 = arith.constant 0 : index
    %472 = vector.load %arg26[%c0_259, %c0_260, %c0_261] : memref<4x1x128xf32, #tpu.memory_space<vmem>>, vector<1x1x128xf32>
    %473 = vector.shape_cast %472 : vector<1x1x128xf32> to vector<1x128xf32>
    %474 = vector.broadcast %473 : vector<1x128xf32> to vector<16x128xf32>
    %475 = arith.addf %471, %474 : vector<16x128xf32>
    %cst_262 = arith.constant 5.000000e-01 : f32
    %476 = vector.broadcast %cst_262 : f32 to vector<16x128xf32>
    %477 = arith.mulf %476, %475 : vector<16x128xf32>
    %cst_263 = arith.constant 0.707106769 : f32
    %478 = vector.broadcast %cst_263 : f32 to vector<16x128xf32>
    %479 = arith.mulf %475, %478 : vector<16x128xf32>
    %cst_264 = arith.constant 0.000000e+00 : f32
    %480 = vector.broadcast %cst_264 : f32 to vector<16x128xf32>
    %481 = arith.cmpf olt, %479, %480 : vector<16x128xf32>
    %cst_265 = arith.constant -1.000000e+00 : f32
    %cst_266 = arith.constant 1.000000e+00 : f32
    %482 = vector.broadcast %cst_265 : f32 to vector<16x128xf32>
    %483 = vector.broadcast %cst_266 : f32 to vector<16x128xf32>
    %484 = arith.select %481, %482, %483 : vector<16x128xi1>, vector<16x128xf32>
    %485 = math.absf %479 : vector<16x128xf32>
    %cst_267 = arith.constant 0.327591091 : f32
    %486 = vector.broadcast %cst_267 : f32 to vector<16x128xf32>
    %487 = arith.mulf %486, %485 : vector<16x128xf32>
    %cst_268 = arith.constant 1.000000e+00 : f32
    %488 = vector.broadcast %cst_268 : f32 to vector<16x128xf32>
    %489 = arith.addf %488, %487 : vector<16x128xf32>
    %cst_269 = arith.constant 1.000000e+00 : f32
    %490 = vector.broadcast %cst_269 : f32 to vector<16x128xf32>
    %491 = arith.divf %490, %489 : vector<16x128xf32>
    %cst_270 = arith.constant 1.06140542 : f32
    %492 = vector.broadcast %cst_270 : f32 to vector<16x128xf32>
    %493 = arith.mulf %492, %491 : vector<16x128xf32>
    %cst_271 = arith.constant -1.45315206 : f32
    %494 = vector.broadcast %cst_271 : f32 to vector<16x128xf32>
    %495 = arith.addf %493, %494 : vector<16x128xf32>
    %496 = arith.mulf %495, %491 : vector<16x128xf32>
    %cst_272 = arith.constant 1.42141378 : f32
    %497 = vector.broadcast %cst_272 : f32 to vector<16x128xf32>
    %498 = arith.addf %496, %497 : vector<16x128xf32>
    %499 = arith.mulf %498, %491 : vector<16x128xf32>
    %cst_273 = arith.constant -0.284496725 : f32
    %500 = vector.broadcast %cst_273 : f32 to vector<16x128xf32>
    %501 = arith.addf %499, %500 : vector<16x128xf32>
    %502 = arith.mulf %501, %491 : vector<16x128xf32>
    %cst_274 = arith.constant 0.254829586 : f32
    %503 = vector.broadcast %cst_274 : f32 to vector<16x128xf32>
    %504 = arith.addf %502, %503 : vector<16x128xf32>
    %505 = arith.mulf %504, %491 : vector<16x128xf32>
    %cst_275 = arith.constant 0.000000e+00 : f32
    %506 = vector.broadcast %cst_275 : f32 to vector<16x128xf32>
    %507 = arith.subf %506, %485 : vector<16x128xf32>
    %508 = arith.mulf %507, %485 : vector<16x128xf32>
    %509 = math.exp %508 : vector<16x128xf32>
    %510 = arith.mulf %505, %509 : vector<16x128xf32>
    %cst_276 = arith.constant 1.000000e+00 : f32
    %511 = vector.broadcast %cst_276 : f32 to vector<16x128xf32>
    %512 = arith.subf %511, %510 : vector<16x128xf32>
    %513 = arith.mulf %484, %512 : vector<16x128xf32>
    %cst_277 = arith.constant 1.000000e+00 : f32
    %514 = vector.broadcast %cst_277 : f32 to vector<16x128xf32>
    %515 = arith.addf %514, %513 : vector<16x128xf32>
    %516 = arith.mulf %477, %515 : vector<16x128xf32>
    %c0_278 = arith.constant 0 : index
    %c0_279 = arith.constant 0 : index
    %c0_280 = arith.constant 0 : index
    %517 = vector.load %arg27[%c0_278, %c0_279, %c0_280] : memref<4x128x32xf32, #tpu.memory_space<vmem>>, vector<1x128x32xf32>
    %518 = vector.shape_cast %517 : vector<1x128x32xf32> to vector<128x32xf32>
    %cst_281 = arith.constant dense<0.000000e+00> : vector<16x32xf32>
    %519 = tpu.matmul %516, %518, %cst_281 {dimension_numbers = #tpu.dot_dimension_numbers<[1], [0], [0], [1], [0, 0, 1, 1], [], []>} : vector<16x128xf32>, vector<128x32xf32>, vector<16x32xf32> -> vector<16x32xf32>
    %c0_282 = arith.constant 0 : index
    %c0_283 = arith.constant 0 : index
    %c0_284 = arith.constant 0 : index
    %520 = vector.load %arg28[%c0_282, %c0_283, %c0_284] : memref<4x1x32xf32, #tpu.memory_space<vmem>>, vector<1x1x32xf32>
    %521 = vector.shape_cast %520 : vector<1x1x32xf32> to vector<1x32xf32>
    %522 = vector.broadcast %521 : vector<1x32xf32> to vector<16x32xf32>
    %523 = arith.addf %519, %522 : vector<16x32xf32>
    %524 = vector.extract_strided_slice %467 {offsets = [0, 0], sizes = [16, 1], strides = [1, 1]} : vector<16x4xf32> to vector<16x1xf32>
    %525 = vector.broadcast %524 : vector<16x1xf32> to vector<16x32xf32>
    %526 = arith.mulf %525, %523 : vector<16x32xf32>
    %527 = arith.addf %468, %526 : vector<16x32xf32>
    %c1_285 = arith.constant 1 : index
    %c0_286 = arith.constant 0 : index
    %c0_287 = arith.constant 0 : index
    %528 = vector.load %arg25[%c1_285, %c0_286, %c0_287] : memref<4x32x128xf32, #tpu.memory_space<vmem>>, vector<1x32x128xf32>
    %529 = vector.shape_cast %528 : vector<1x32x128xf32> to vector<32x128xf32>
    %cst_288 = arith.constant dense<0.000000e+00> : vector<16x128xf32>
    %530 = tpu.matmul %305, %529, %cst_288 {dimension_numbers = #tpu.dot_dimension_numbers<[1], [0], [0], [1], [0, 0, 1, 1], [], []>} : vector<16x32xf32>, vector<32x128xf32>, vector<16x128xf32> -> vector<16x128xf32>
    %c1_289 = arith.constant 1 : index
    %c0_290 = arith.constant 0 : index
    %c0_291 = arith.constant 0 : index
    %531 = vector.load %arg26[%c1_289, %c0_290, %c0_291] : memref<4x1x128xf32, #tpu.memory_space<vmem>>, vector<1x1x128xf32>
    %532 = vector.shape_cast %531 : vector<1x1x128xf32> to vector<1x128xf32>
    %533 = vector.broadcast %532 : vector<1x128xf32> to vector<16x128xf32>
    %534 = arith.addf %530, %533 : vector<16x128xf32>
    %cst_292 = arith.constant 5.000000e-01 : f32
    %535 = vector.broadcast %cst_292 : f32 to vector<16x128xf32>
    %536 = arith.mulf %535, %534 : vector<16x128xf32>
    %cst_293 = arith.constant 0.707106769 : f32
    %537 = vector.broadcast %cst_293 : f32 to vector<16x128xf32>
    %538 = arith.mulf %534, %537 : vector<16x128xf32>
    %cst_294 = arith.constant 0.000000e+00 : f32
    %539 = vector.broadcast %cst_294 : f32 to vector<16x128xf32>
    %540 = arith.cmpf olt, %538, %539 : vector<16x128xf32>
    %cst_295 = arith.constant -1.000000e+00 : f32
    %cst_296 = arith.constant 1.000000e+00 : f32
    %541 = vector.broadcast %cst_295 : f32 to vector<16x128xf32>
    %542 = vector.broadcast %cst_296 : f32 to vector<16x128xf32>
    %543 = arith.select %540, %541, %542 : vector<16x128xi1>, vector<16x128xf32>
    %544 = math.absf %538 : vector<16x128xf32>
    %cst_297 = arith.constant 0.327591091 : f32
    %545 = vector.broadcast %cst_297 : f32 to vector<16x128xf32>
    %546 = arith.mulf %545, %544 : vector<16x128xf32>
    %cst_298 = arith.constant 1.000000e+00 : f32
    %547 = vector.broadcast %cst_298 : f32 to vector<16x128xf32>
    %548 = arith.addf %547, %546 : vector<16x128xf32>
    %cst_299 = arith.constant 1.000000e+00 : f32
    %549 = vector.broadcast %cst_299 : f32 to vector<16x128xf32>
    %550 = arith.divf %549, %548 : vector<16x128xf32>
    %cst_300 = arith.constant 1.06140542 : f32
    %551 = vector.broadcast %cst_300 : f32 to vector<16x128xf32>
    %552 = arith.mulf %551, %550 : vector<16x128xf32>
    %cst_301 = arith.constant -1.45315206 : f32
    %553 = vector.broadcast %cst_301 : f32 to vector<16x128xf32>
    %554 = arith.addf %552, %553 : vector<16x128xf32>
    %555 = arith.mulf %554, %550 : vector<16x128xf32>
    %cst_302 = arith.constant 1.42141378 : f32
    %556 = vector.broadcast %cst_302 : f32 to vector<16x128xf32>
    %557 = arith.addf %555, %556 : vector<16x128xf32>
    %558 = arith.mulf %557, %550 : vector<16x128xf32>
    %cst_303 = arith.constant -0.284496725 : f32
    %559 = vector.broadcast %cst_303 : f32 to vector<16x128xf32>
    %560 = arith.addf %558, %559 : vector<16x128xf32>
    %561 = arith.mulf %560, %550 : vector<16x128xf32>
    %cst_304 = arith.constant 0.254829586 : f32
    %562 = vector.broadcast %cst_304 : f32 to vector<16x128xf32>
    %563 = arith.addf %561, %562 : vector<16x128xf32>
    %564 = arith.mulf %563, %550 : vector<16x128xf32>
    %cst_305 = arith.constant 0.000000e+00 : f32
    %565 = vector.broadcast %cst_305 : f32 to vector<16x128xf32>
    %566 = arith.subf %565, %544 : vector<16x128xf32>
    %567 = arith.mulf %566, %544 : vector<16x128xf32>
    %568 = math.exp %567 : vector<16x128xf32>
    %569 = arith.mulf %564, %568 : vector<16x128xf32>
    %cst_306 = arith.constant 1.000000e+00 : f32
    %570 = vector.broadcast %cst_306 : f32 to vector<16x128xf32>
    %571 = arith.subf %570, %569 : vector<16x128xf32>
    %572 = arith.mulf %543, %571 : vector<16x128xf32>
    %cst_307 = arith.constant 1.000000e+00 : f32
    %573 = vector.broadcast %cst_307 : f32 to vector<16x128xf32>
    %574 = arith.addf %573, %572 : vector<16x128xf32>
    %575 = arith.mulf %536, %574 : vector<16x128xf32>
    %c1_308 = arith.constant 1 : index
    %c0_309 = arith.constant 0 : index
    %c0_310 = arith.constant 0 : index
    %576 = vector.load %arg27[%c1_308, %c0_309, %c0_310] : memref<4x128x32xf32, #tpu.memory_space<vmem>>, vector<1x128x32xf32>
    %577 = vector.shape_cast %576 : vector<1x128x32xf32> to vector<128x32xf32>
    %cst_311 = arith.constant dense<0.000000e+00> : vector<16x32xf32>
    %578 = tpu.matmul %575, %577, %cst_311 {dimension_numbers = #tpu.dot_dimension_numbers<[1], [0], [0], [1], [0, 0, 1, 1], [], []>} : vector<16x128xf32>, vector<128x32xf32>, vector<16x32xf32> -> vector<16x32xf32>
    %c1_312 = arith.constant 1 : index
    %c0_313 = arith.constant 0 : index
    %c0_314 = arith.constant 0 : index
    %579 = vector.load %arg28[%c1_312, %c0_313, %c0_314] : memref<4x1x32xf32, #tpu.memory_space<vmem>>, vector<1x1x32xf32>
    %580 = vector.shape_cast %579 : vector<1x1x32xf32> to vector<1x32xf32>
    %581 = vector.broadcast %580 : vector<1x32xf32> to vector<16x32xf32>
    %582 = arith.addf %578, %581 : vector<16x32xf32>
    %583 = vector.extract_strided_slice %467 {offsets = [0, 1], sizes = [16, 1], strides = [1, 1]} : vector<16x4xf32> to vector<16x1xf32>
    %584 = vector.broadcast %583 : vector<16x1xf32> to vector<16x32xf32>
    %585 = arith.mulf %584, %582 : vector<16x32xf32>
    %586 = arith.addf %527, %585 : vector<16x32xf32>
    %c2_315 = arith.constant 2 : index
    %c0_316 = arith.constant 0 : index
    %c0_317 = arith.constant 0 : index
    %587 = vector.load %arg25[%c2_315, %c0_316, %c0_317] : memref<4x32x128xf32, #tpu.memory_space<vmem>>, vector<1x32x128xf32>
    %588 = vector.shape_cast %587 : vector<1x32x128xf32> to vector<32x128xf32>
    %cst_318 = arith.constant dense<0.000000e+00> : vector<16x128xf32>
    %589 = tpu.matmul %305, %588, %cst_318 {dimension_numbers = #tpu.dot_dimension_numbers<[1], [0], [0], [1], [0, 0, 1, 1], [], []>} : vector<16x32xf32>, vector<32x128xf32>, vector<16x128xf32> -> vector<16x128xf32>
    %c2_319 = arith.constant 2 : index
    %c0_320 = arith.constant 0 : index
    %c0_321 = arith.constant 0 : index
    %590 = vector.load %arg26[%c2_319, %c0_320, %c0_321] : memref<4x1x128xf32, #tpu.memory_space<vmem>>, vector<1x1x128xf32>
    %591 = vector.shape_cast %590 : vector<1x1x128xf32> to vector<1x128xf32>
    %592 = vector.broadcast %591 : vector<1x128xf32> to vector<16x128xf32>
    %593 = arith.addf %589, %592 : vector<16x128xf32>
    %cst_322 = arith.constant 5.000000e-01 : f32
    %594 = vector.broadcast %cst_322 : f32 to vector<16x128xf32>
    %595 = arith.mulf %594, %593 : vector<16x128xf32>
    %cst_323 = arith.constant 0.707106769 : f32
    %596 = vector.broadcast %cst_323 : f32 to vector<16x128xf32>
    %597 = arith.mulf %593, %596 : vector<16x128xf32>
    %cst_324 = arith.constant 0.000000e+00 : f32
    %598 = vector.broadcast %cst_324 : f32 to vector<16x128xf32>
    %599 = arith.cmpf olt, %597, %598 : vector<16x128xf32>
    %cst_325 = arith.constant -1.000000e+00 : f32
    %cst_326 = arith.constant 1.000000e+00 : f32
    %600 = vector.broadcast %cst_325 : f32 to vector<16x128xf32>
    %601 = vector.broadcast %cst_326 : f32 to vector<16x128xf32>
    %602 = arith.select %599, %600, %601 : vector<16x128xi1>, vector<16x128xf32>
    %603 = math.absf %597 : vector<16x128xf32>
    %cst_327 = arith.constant 0.327591091 : f32
    %604 = vector.broadcast %cst_327 : f32 to vector<16x128xf32>
    %605 = arith.mulf %604, %603 : vector<16x128xf32>
    %cst_328 = arith.constant 1.000000e+00 : f32
    %606 = vector.broadcast %cst_328 : f32 to vector<16x128xf32>
    %607 = arith.addf %606, %605 : vector<16x128xf32>
    %cst_329 = arith.constant 1.000000e+00 : f32
    %608 = vector.broadcast %cst_329 : f32 to vector<16x128xf32>
    %609 = arith.divf %608, %607 : vector<16x128xf32>
    %cst_330 = arith.constant 1.06140542 : f32
    %610 = vector.broadcast %cst_330 : f32 to vector<16x128xf32>
    %611 = arith.mulf %610, %609 : vector<16x128xf32>
    %cst_331 = arith.constant -1.45315206 : f32
    %612 = vector.broadcast %cst_331 : f32 to vector<16x128xf32>
    %613 = arith.addf %611, %612 : vector<16x128xf32>
    %614 = arith.mulf %613, %609 : vector<16x128xf32>
    %cst_332 = arith.constant 1.42141378 : f32
    %615 = vector.broadcast %cst_332 : f32 to vector<16x128xf32>
    %616 = arith.addf %614, %615 : vector<16x128xf32>
    %617 = arith.mulf %616, %609 : vector<16x128xf32>
    %cst_333 = arith.constant -0.284496725 : f32
    %618 = vector.broadcast %cst_333 : f32 to vector<16x128xf32>
    %619 = arith.addf %617, %618 : vector<16x128xf32>
    %620 = arith.mulf %619, %609 : vector<16x128xf32>
    %cst_334 = arith.constant 0.254829586 : f32
    %621 = vector.broadcast %cst_334 : f32 to vector<16x128xf32>
    %622 = arith.addf %620, %621 : vector<16x128xf32>
    %623 = arith.mulf %622, %609 : vector<16x128xf32>
    %cst_335 = arith.constant 0.000000e+00 : f32
    %624 = vector.broadcast %cst_335 : f32 to vector<16x128xf32>
    %625 = arith.subf %624, %603 : vector<16x128xf32>
    %626 = arith.mulf %625, %603 : vector<16x128xf32>
    %627 = math.exp %626 : vector<16x128xf32>
    %628 = arith.mulf %623, %627 : vector<16x128xf32>
    %cst_336 = arith.constant 1.000000e+00 : f32
    %629 = vector.broadcast %cst_336 : f32 to vector<16x128xf32>
    %630 = arith.subf %629, %628 : vector<16x128xf32>
    %631 = arith.mulf %602, %630 : vector<16x128xf32>
    %cst_337 = arith.constant 1.000000e+00 : f32
    %632 = vector.broadcast %cst_337 : f32 to vector<16x128xf32>
    %633 = arith.addf %632, %631 : vector<16x128xf32>
    %634 = arith.mulf %595, %633 : vector<16x128xf32>
    %c2_338 = arith.constant 2 : index
    %c0_339 = arith.constant 0 : index
    %c0_340 = arith.constant 0 : index
    %635 = vector.load %arg27[%c2_338, %c0_339, %c0_340] : memref<4x128x32xf32, #tpu.memory_space<vmem>>, vector<1x128x32xf32>
    %636 = vector.shape_cast %635 : vector<1x128x32xf32> to vector<128x32xf32>
    %cst_341 = arith.constant dense<0.000000e+00> : vector<16x32xf32>
    %637 = tpu.matmul %634, %636, %cst_341 {dimension_numbers = #tpu.dot_dimension_numbers<[1], [0], [0], [1], [0, 0, 1, 1], [], []>} : vector<16x128xf32>, vector<128x32xf32>, vector<16x32xf32> -> vector<16x32xf32>
    %c2_342 = arith.constant 2 : index
    %c0_343 = arith.constant 0 : index
    %c0_344 = arith.constant 0 : index
    %638 = vector.load %arg28[%c2_342, %c0_343, %c0_344] : memref<4x1x32xf32, #tpu.memory_space<vmem>>, vector<1x1x32xf32>
    %639 = vector.shape_cast %638 : vector<1x1x32xf32> to vector<1x32xf32>
    %640 = vector.broadcast %639 : vector<1x32xf32> to vector<16x32xf32>
    %641 = arith.addf %637, %640 : vector<16x32xf32>
    %642 = vector.extract_strided_slice %467 {offsets = [0, 2], sizes = [16, 1], strides = [1, 1]} : vector<16x4xf32> to vector<16x1xf32>
    %643 = vector.broadcast %642 : vector<16x1xf32> to vector<16x32xf32>
    %644 = arith.mulf %643, %641 : vector<16x32xf32>
    %645 = arith.addf %586, %644 : vector<16x32xf32>
    %c3_345 = arith.constant 3 : index
    %c0_346 = arith.constant 0 : index
    %c0_347 = arith.constant 0 : index
    %646 = vector.load %arg25[%c3_345, %c0_346, %c0_347] : memref<4x32x128xf32, #tpu.memory_space<vmem>>, vector<1x32x128xf32>
    %647 = vector.shape_cast %646 : vector<1x32x128xf32> to vector<32x128xf32>
    %cst_348 = arith.constant dense<0.000000e+00> : vector<16x128xf32>
    %648 = tpu.matmul %305, %647, %cst_348 {dimension_numbers = #tpu.dot_dimension_numbers<[1], [0], [0], [1], [0, 0, 1, 1], [], []>} : vector<16x32xf32>, vector<32x128xf32>, vector<16x128xf32> -> vector<16x128xf32>
    %c3_349 = arith.constant 3 : index
    %c0_350 = arith.constant 0 : index
    %c0_351 = arith.constant 0 : index
    %649 = vector.load %arg26[%c3_349, %c0_350, %c0_351] : memref<4x1x128xf32, #tpu.memory_space<vmem>>, vector<1x1x128xf32>
    %650 = vector.shape_cast %649 : vector<1x1x128xf32> to vector<1x128xf32>
    %651 = vector.broadcast %650 : vector<1x128xf32> to vector<16x128xf32>
    %652 = arith.addf %648, %651 : vector<16x128xf32>
    %cst_352 = arith.constant 5.000000e-01 : f32
    %653 = vector.broadcast %cst_352 : f32 to vector<16x128xf32>
    %654 = arith.mulf %653, %652 : vector<16x128xf32>
    %cst_353 = arith.constant 0.707106769 : f32
    %655 = vector.broadcast %cst_353 : f32 to vector<16x128xf32>
    %656 = arith.mulf %652, %655 : vector<16x128xf32>
    %cst_354 = arith.constant 0.000000e+00 : f32
    %657 = vector.broadcast %cst_354 : f32 to vector<16x128xf32>
    %658 = arith.cmpf olt, %656, %657 : vector<16x128xf32>
    %cst_355 = arith.constant -1.000000e+00 : f32
    %cst_356 = arith.constant 1.000000e+00 : f32
    %659 = vector.broadcast %cst_355 : f32 to vector<16x128xf32>
    %660 = vector.broadcast %cst_356 : f32 to vector<16x128xf32>
    %661 = arith.select %658, %659, %660 : vector<16x128xi1>, vector<16x128xf32>
    %662 = math.absf %656 : vector<16x128xf32>
    %cst_357 = arith.constant 0.327591091 : f32
    %663 = vector.broadcast %cst_357 : f32 to vector<16x128xf32>
    %664 = arith.mulf %663, %662 : vector<16x128xf32>
    %cst_358 = arith.constant 1.000000e+00 : f32
    %665 = vector.broadcast %cst_358 : f32 to vector<16x128xf32>
    %666 = arith.addf %665, %664 : vector<16x128xf32>
    %cst_359 = arith.constant 1.000000e+00 : f32
    %667 = vector.broadcast %cst_359 : f32 to vector<16x128xf32>
    %668 = arith.divf %667, %666 : vector<16x128xf32>
    %cst_360 = arith.constant 1.06140542 : f32
    %669 = vector.broadcast %cst_360 : f32 to vector<16x128xf32>
    %670 = arith.mulf %669, %668 : vector<16x128xf32>
    %cst_361 = arith.constant -1.45315206 : f32
    %671 = vector.broadcast %cst_361 : f32 to vector<16x128xf32>
    %672 = arith.addf %670, %671 : vector<16x128xf32>
    %673 = arith.mulf %672, %668 : vector<16x128xf32>
    %cst_362 = arith.constant 1.42141378 : f32
    %674 = vector.broadcast %cst_362 : f32 to vector<16x128xf32>
    %675 = arith.addf %673, %674 : vector<16x128xf32>
    %676 = arith.mulf %675, %668 : vector<16x128xf32>
    %cst_363 = arith.constant -0.284496725 : f32
    %677 = vector.broadcast %cst_363 : f32 to vector<16x128xf32>
    %678 = arith.addf %676, %677 : vector<16x128xf32>
    %679 = arith.mulf %678, %668 : vector<16x128xf32>
    %cst_364 = arith.constant 0.254829586 : f32
    %680 = vector.broadcast %cst_364 : f32 to vector<16x128xf32>
    %681 = arith.addf %679, %680 : vector<16x128xf32>
    %682 = arith.mulf %681, %668 : vector<16x128xf32>
    %cst_365 = arith.constant 0.000000e+00 : f32
    %683 = vector.broadcast %cst_365 : f32 to vector<16x128xf32>
    %684 = arith.subf %683, %662 : vector<16x128xf32>
    %685 = arith.mulf %684, %662 : vector<16x128xf32>
    %686 = math.exp %685 : vector<16x128xf32>
    %687 = arith.mulf %682, %686 : vector<16x128xf32>
    %cst_366 = arith.constant 1.000000e+00 : f32
    %688 = vector.broadcast %cst_366 : f32 to vector<16x128xf32>
    %689 = arith.subf %688, %687 : vector<16x128xf32>
    %690 = arith.mulf %661, %689 : vector<16x128xf32>
    %cst_367 = arith.constant 1.000000e+00 : f32
    %691 = vector.broadcast %cst_367 : f32 to vector<16x128xf32>
    %692 = arith.addf %691, %690 : vector<16x128xf32>
    %693 = arith.mulf %654, %692 : vector<16x128xf32>
    %c3_368 = arith.constant 3 : index
    %c0_369 = arith.constant 0 : index
    %c0_370 = arith.constant 0 : index
    %694 = vector.load %arg27[%c3_368, %c0_369, %c0_370] : memref<4x128x32xf32, #tpu.memory_space<vmem>>, vector<1x128x32xf32>
    %695 = vector.shape_cast %694 : vector<1x128x32xf32> to vector<128x32xf32>
    %cst_371 = arith.constant dense<0.000000e+00> : vector<16x32xf32>
    %696 = tpu.matmul %693, %695, %cst_371 {dimension_numbers = #tpu.dot_dimension_numbers<[1], [0], [0], [1], [0, 0, 1, 1], [], []>} : vector<16x128xf32>, vector<128x32xf32>, vector<16x32xf32> -> vector<16x32xf32>
    %c3_372 = arith.constant 3 : index
    %c0_373 = arith.constant 0 : index
    %c0_374 = arith.constant 0 : index
    %697 = vector.load %arg28[%c3_372, %c0_373, %c0_374] : memref<4x1x32xf32, #tpu.memory_space<vmem>>, vector<1x1x32xf32>
    %698 = vector.shape_cast %697 : vector<1x1x32xf32> to vector<1x32xf32>
    %699 = vector.broadcast %698 : vector<1x32xf32> to vector<16x32xf32>
    %700 = arith.addf %696, %699 : vector<16x32xf32>
    %701 = vector.extract_strided_slice %467 {offsets = [0, 3], sizes = [16, 1], strides = [1, 1]} : vector<16x4xf32> to vector<16x1xf32>
    %702 = vector.broadcast %701 : vector<16x1xf32> to vector<16x32xf32>
    %703 = arith.mulf %702, %700 : vector<16x32xf32>
    %704 = arith.addf %645, %703 : vector<16x32xf32>
    %705 = arith.addf %281, %704 : vector<16x32xf32>
    %c0_375 = arith.constant 0 : index
    %c0_376 = arith.constant 0 : index
    %706 = vector.load %arg29[%c0_375, %c0_376] : memref<1x32xf32, #tpu.memory_space<vmem>>, vector<1x32xf32>
    %c0_377 = arith.constant 0 : index
    %c0_378 = arith.constant 0 : index
    %707 = vector.load %arg30[%c0_377, %c0_378] : memref<1x32xf32, #tpu.memory_space<vmem>>, vector<1x32xf32>
    %cst_379 = arith.constant dense<0.000000e+00> : vector<16xf32>
    %708 = vector.multi_reduction <add>, %705, %cst_379 [1] : vector<16x32xf32> to vector<16xf32>
    %709 = vector.shape_cast %708 : vector<16xf32> to vector<16x1xf32>
    %cst_380 = arith.constant 3.200000e+01 : f32
    %710 = vector.broadcast %cst_380 : f32 to vector<16x1xf32>
    %711 = arith.divf %709, %710 : vector<16x1xf32>
    %712 = vector.broadcast %711 : vector<16x1xf32> to vector<16x32xf32>
    %713 = arith.subf %705, %712 : vector<16x32xf32>
    %714 = arith.mulf %713, %713 : vector<16x32xf32>
    %cst_381 = arith.constant dense<0.000000e+00> : vector<16xf32>
    %715 = vector.multi_reduction <add>, %714, %cst_381 [1] : vector<16x32xf32> to vector<16xf32>
    %716 = vector.shape_cast %715 : vector<16xf32> to vector<16x1xf32>
    %cst_382 = arith.constant 3.200000e+01 : f32
    %717 = vector.broadcast %cst_382 : f32 to vector<16x1xf32>
    %718 = arith.divf %716, %717 : vector<16x1xf32>
    %719 = vector.broadcast %711 : vector<16x1xf32> to vector<16x32xf32>
    %720 = arith.subf %705, %719 : vector<16x32xf32>
    %cst_383 = arith.constant 9.99999974E-6 : f32
    %721 = vector.broadcast %cst_383 : f32 to vector<16x1xf32>
    %722 = arith.addf %718, %721 : vector<16x1xf32>
    %723 = math.rsqrt %722 : vector<16x1xf32>
    %724 = vector.broadcast %723 : vector<16x1xf32> to vector<16x32xf32>
    %725 = arith.mulf %720, %724 : vector<16x32xf32>
    %726 = vector.broadcast %706 : vector<1x32xf32> to vector<16x32xf32>
    %727 = arith.mulf %725, %726 : vector<16x32xf32>
    %728 = vector.broadcast %707 : vector<1x32xf32> to vector<16x32xf32>
    %729 = arith.addf %727, %728 : vector<16x32xf32>
    %c0_384 = arith.constant 0 : index
    %c0_385 = arith.constant 0 : index
    %730 = vector.load %arg2[%c0_384, %c0_385] : memref<128x32xf32, #tpu.memory_space<vmem>>, vector<128x32xf32>
    %cst_386 = arith.constant dense<0.000000e+00> : vector<16x128xf32>
    %731 = tpu.matmul %729, %730, %cst_386 {dimension_numbers = #tpu.dot_dimension_numbers<[1], [1], [0], [0], [0, 0, 1, 0], [], []>} : vector<16x32xf32>, vector<128x32xf32>, vector<16x128xf32> -> vector<16x128xf32>
    %c0_387 = arith.constant 0 : index
    %c0_388 = arith.constant 0 : index
    %732 = vector.load %arg31[%c0_387, %c0_388] : memref<16x128xf32, #tpu.memory_space<vmem>>, vector<16x128xf32>
    tpu.vector_store %arg31[%c0_387, %c0_388], %731 {strides = array<i32>} : memref<16x128xf32, #tpu.memory_space<vmem>>, vector<16x128xf32>,
    return
  }
  func.func @transform_0(%arg0: i32) -> (i32, i32) {
    %c0_i32 = arith.constant 0 : i32
    %c0_i32_0 = arith.constant 0 : i32
    %c0_i32_1 = arith.constant 0 : i32
    return %c0_i32, %c0_i32_0 : i32, i32
  }
  func.func @transform_1(%arg0: i32) -> (i32, i32) {
    %c0_i32 = arith.constant 0 : i32
    %c0_i32_0 = arith.constant 0 : i32
    %c0_i32_1 = arith.constant 0 : i32
    return %c0_i32, %c0_i32_0 : i32, i32
  }
  func.func @transform_2(%arg0: i32) -> (i32, i32) {
    %c0_i32 = arith.constant 0 : i32
    %c0_i32_0 = arith.constant 0 : i32
    %c0_i32_1 = arith.constant 0 : i32
    return %c0_i32, %c0_i32_0 : i32, i32
  }
  func.func @transform_3(%arg0: i32) -> (i32, i32) {
    %c0_i32 = arith.constant 0 : i32
    %c0_i32_0 = arith.constant 0 : i32
    %c0_i32_1 = arith.constant 0 : i32
    return %c0_i32, %c0_i32_0 : i32, i32
  }
  func.func @transform_4(%arg0: i32) -> (i32, i32) {
    %c0_i32 = arith.constant 0 : i32
    %c0_i32_0 = arith.constant 0 : i32
    %c0_i32_1 = arith.constant 0 : i32
    return %c0_i32, %c0_i32_0 : i32, i32
  }
  func.func @transform_5(%arg0: i32) -> (i32, i32) {
    %c0_i32 = arith.constant 0 : i32
    %c0_i32_0 = arith.constant 0 : i32
    %c0_i32_1 = arith.constant 0 : i32
    return %c0_i32, %c0_i32_0 : i32, i32
  }
  func.func @transform_6(%arg0: i32) -> (i32, i32, i32) {
    %c0_i32 = arith.constant 0 : i32
    %c0_i32_0 = arith.constant 0 : i32
    %c0_i32_1 = arith.constant 0 : i32
    %c0_i32_2 = arith.constant 0 : i32
    return %c0_i32, %c0_i32_0, %c0_i32_1 : i32, i32, i32
  }
  func.func @transform_7(%arg0: i32) -> (i32, i32, i32) {
    %c0_i32 = arith.constant 0 : i32
    %c0_i32_0 = arith.constant 0 : i32
    %c0_i32_1 = arith.constant 0 : i32
    %c0_i32_2 = arith.constant 0 : i32
    return %c0_i32, %c0_i32_0, %c0_i32_1 : i32, i32, i32
  }
  func.func @transform_8(%arg0: i32) -> (i32, i32, i32) {
    %c0_i32 = arith.constant 0 : i32
    %c0_i32_0 = arith.constant 0 : i32
    %c0_i32_1 = arith.constant 0 : i32
    %c0_i32_2 = arith.constant 0 : i32
    return %c0_i32, %c0_i32_0, %c0_i32_1 : i32, i32, i32
  }
  func.func @transform_9(%arg0: i32) -> (i32, i32, i32) {
    %c0_i32 = arith.constant 0 : i32
    %c0_i32_0 = arith.constant 0 : i32
    %c0_i32_1 = arith.constant 0 : i32
    %c0_i32_2 = arith.constant 0 : i32
    return %c0_i32, %c0_i32_0, %c0_i32_1 : i32, i32, i32
  }
  func.func @transform_10(%arg0: i32) -> (i32, i32, i32) {
    %c0_i32 = arith.constant 0 : i32
    %c0_i32_0 = arith.constant 0 : i32
    %c0_i32_1 = arith.constant 0 : i32
    %c0_i32_2 = arith.constant 0 : i32
    return %c0_i32, %c0_i32_0, %c0_i32_1 : i32, i32, i32
  }
  func.func @transform_11(%arg0: i32) -> (i32, i32, i32) {
    %c0_i32 = arith.constant 0 : i32
    %c0_i32_0 = arith.constant 0 : i32
    %c0_i32_1 = arith.constant 0 : i32
    %c0_i32_2 = arith.constant 0 : i32
    return %c0_i32, %c0_i32_0, %c0_i32_1 : i32, i32, i32
  }
  func.func @transform_12(%arg0: i32) -> (i32, i32, i32) {
    %c0_i32 = arith.constant 0 : i32
    %c0_i32_0 = arith.constant 0 : i32
    %c0_i32_1 = arith.constant 0 : i32
    %c0_i32_2 = arith.constant 0 : i32
    return %c0_i32, %c0_i32_0, %c0_i32_1 : i32, i32, i32
  }
  func.func @transform_13(%arg0: i32) -> (i32, i32) {
    %c0_i32 = arith.constant 0 : i32
    %c0_i32_0 = arith.constant 0 : i32
    %c0_i32_1 = arith.constant 0 : i32
    return %c0_i32, %c0_i32_0 : i32, i32
  }
  func.func @transform_14(%arg0: i32) -> (i32, i32) {
    %c0_i32 = arith.constant 0 : i32
    %c0_i32_0 = arith.constant 0 : i32
    %c0_i32_1 = arith.constant 0 : i32
    return %c0_i32, %c0_i32_0 : i32, i32
  }
  func.func @transform_15(%arg0: i32) -> (i32, i32) {
    %c0_i32 = arith.constant 0 : i32
    %c0_i32_0 = arith.constant 0 : i32
    %c0_i32_1 = arith.constant 0 : i32
    return %c0_i32, %c0_i32_0 : i32, i32
  }
  func.func @transform_16(%arg0: i32) -> (i32, i32) {
    %c0_i32 = arith.constant 0 : i32
    %c0_i32_0 = arith.constant 0 : i32
    %c0_i32_1 = arith.constant 0 : i32
    return %c0_i32, %c0_i32_0 : i32, i32
  }
  func.func @transform_17(%arg0: i32) -> (i32, i32) {
    %c0_i32 = arith.constant 0 : i32
    %c0_i32_0 = arith.constant 0 : i32
    %c0_i32_1 = arith.constant 0 : i32
    return %c0_i32, %c0_i32_0 : i32, i32
  }
  func.func @transform_18(%arg0: i32) -> (i32, i32) {
    %c0_i32 = arith.constant 0 : i32
    %c0_i32_0 = arith.constant 0 : i32
    %c0_i32_1 = arith.constant 0 : i32
    return %c0_i32, %c0_i32_0 : i32, i32
  }
  func.func @transform_19(%arg0: i32) -> (i32, i32) {
    %c0_i32 = arith.constant 0 : i32
    %c0_i32_0 = arith.constant 0 : i32
    %c0_i32_1 = arith.constant 0 : i32
    return %c0_i32, %c0_i32_0 : i32, i32
  }
  func.func @transform_20(%arg0: i32) -> (i32, i32) {
    %c0_i32 = arith.constant 0 : i32
    %c0_i32_0 = arith.constant 0 : i32
    %c0_i32_1 = arith.constant 0 : i32
    return %c0_i32, %c0_i32_0 : i32, i32
  }
  func.func @transform_21(%arg0: i32) -> (i32, i32) {
    %c0_i32 = arith.constant 0 : i32
    %c0_i32_0 = arith.constant 0 : i32
    %c0_i32_1 = arith.constant 0 : i32
    return %c0_i32, %c0_i32_0 : i32, i32
  }
  func.func @transform_22(%arg0: i32) -> (i32, i32) {
    %c0_i32 = arith.constant 0 : i32
    %c0_i32_0 = arith.constant 0 : i32
    %c0_i32_1 = arith.constant 0 : i32
    return %c0_i32, %c0_i32_0 : i32, i32
  }
  func.func @transform_23(%arg0: i32) -> (i32, i32) {
    %c0_i32 = arith.constant 0 : i32
    %c0_i32_0 = arith.constant 0 : i32
    %c0_i32_1 = arith.constant 0 : i32
    return %c0_i32, %c0_i32_0 : i32, i32
  }
  func.func @transform_24(%arg0: i32) -> (i32, i32, i32) {
    %c0_i32 = arith.constant 0 : i32
    %c0_i32_0 = arith.constant 0 : i32
    %c0_i32_1 = arith.constant 0 : i32
    %c0_i32_2 = arith.constant 0 : i32
    return %c0_i32, %c0_i32_0, %c0_i32_1 : i32, i32, i32
  }
  func.func @transform_25(%arg0: i32) -> (i32, i32, i32) {
    %c0_i32 = arith.constant 0 : i32
    %c0_i32_0 = arith.constant 0 : i32
    %c0_i32_1 = arith.constant 0 : i32
    %c0_i32_2 = arith.constant 0 : i32
    return %c0_i32, %c0_i32_0, %c0_i32_1 : i32, i32, i32
  }
  func.func @transform_26(%arg0: i32) -> (i32, i32, i32) {
    %c0_i32 = arith.constant 0 : i32
    %c0_i32_0 = arith.constant 0 : i32
    %c0_i32_1 = arith.constant 0 : i32
    %c0_i32_2 = arith.constant 0 : i32
    return %c0_i32, %c0_i32_0, %c0_i32_1 : i32, i32, i32
  }
  func.func @transform_27(%arg0: i32) -> (i32, i32, i32) {
    %c0_i32 = arith.constant 0 : i32
    %c0_i32_0 = arith.constant 0 : i32
    %c0_i32_1 = arith.constant 0 : i32
    %c0_i32_2 = arith.constant 0 : i32
    return %c0_i32, %c0_i32_0, %c0_i32_1 : i32, i32, i32
  }
  func.func @transform_28(%arg0: i32) -> (i32, i32) {
    %c0_i32 = arith.constant 0 : i32
    %c0_i32_0 = arith.constant 0 : i32
    %c0_i32_1 = arith.constant 0 : i32
    return %c0_i32, %c0_i32_0 : i32, i32
  }
  func.func @transform_29(%arg0: i32) -> (i32, i32) {
    %c0_i32 = arith.constant 0 : i32
    %c0_i32_0 = arith.constant 0 : i32
    %c0_i32_1 = arith.constant 0 : i32
    return %c0_i32, %c0_i32_0 : i32, i32
  }
  func.func @transform_30(%arg0: i32) -> (i32, i32) {
    %c0_i32 = arith.constant 0 : i32
    %c0_i32_0 = arith.constant 0 : i32
    %c0_i32_1 = arith.constant 0 : i32
    return %c0_i32, %c0_i32_0 : i32, i32
  }
  func.func @transform_31(%arg0: i32) -> (i32, i32) {
    %c0_i32 = arith.constant 0 : i32
    %c0_i32_0 = arith.constant 0 : i32
    %c0_i32_1 = arith.constant 0 : i32
    return %c0_i32, %c0_i32_0 : i32, i32
  }
  func.func @transform_32(%arg0: i32) -> (i32, i32) {
    %c0_i32 = arith.constant 0 : i32
    %c0_i32_0 = arith.constant 0 : i32
    %c0_i32_1 = arith.constant 0 : i32
    return %c0_i32, %c0_i32_0 : i32, i32
  }
  func.func @transform_33(%arg0: i32) -> (i32, i32) {
    %c0_i32 = arith.constant 0 : i32
    %c0_i32_0 = arith.constant 0 : i32
    %c0_i32_1 = arith.constant 0 : i32
    return %c0_i32, %c0_i32_0 : i32, i32
  }
}

</mosaic_0001>

<llo_original>
// kernel: forward.1
$region0: #{forward.1}
  #allocation0 [shape = 'u32[]', space=smem, size = 0x4, offset = 0x4, fixed_abs, tag = 'smem constant byte address 0x4 - core index']
  #allocation1 [shape = 'u32[72,128]{1,0:T(1,128)}', space=vmem, size = 0x9000, scoped, tag = 'internal scratch']
  %s0 = inlined_call_operand.smem [shape: u32[34], index: -1, kind: input, shape index: {}]
  %s1 = sld [smem:[%s0]]
  %s2 = scalar_lea.smem %s0, 1
  %s3 = sld [smem:[%s2]]
  %s4 = scalar_lea.smem %s0, 2
  %s5 = sld [smem:[%s4]]
  %s6 = scalar_lea.smem %s0, 3
  %s7 = sld [smem:[%s6]]
  %s8 = scalar_lea.smem %s0, 4
  %s9 = sld [smem:[%s8]]
  %s10 = scalar_lea.smem %s0, 5
  %s11 = sld [smem:[%s10]]
  %s12 = scalar_lea.smem %s0, 6
  %s13 = sld [smem:[%s12]]
  %s14 = scalar_lea.smem %s0, 7
  %s15 = sld [smem:[%s14]]
  %s16 = scalar_lea.smem %s0, 8
  %s17 = sld [smem:[%s16]]
  %s18 = scalar_lea.smem %s0, 9
  %s19 = sld [smem:[%s18]]
  %s20 = scalar_lea.smem %s0, 10
  %s21 = sld [smem:[%s20]]
  %s22 = scalar_lea.smem %s0, 11
  %s23 = sld [smem:[%s22]]
  %s24 = scalar_lea.smem %s0, 12
  %s25 = sld [smem:[%s24]]
  %s26 = scalar_lea.smem %s0, 13
  %s27 = sld [smem:[%s26]]
  %s28 = scalar_lea.smem %s0, 14
  %s29 = sld [smem:[%s28]]
  %s30 = scalar_lea.smem %s0, 15
  %s31 = sld [smem:[%s30]]
  %s32 = scalar_lea.smem %s0, 16
  %s33 = sld [smem:[%s32]]
  %s34 = scalar_lea.smem %s0, 17
  %s35 = sld [smem:[%s34]]
  %s36 = scalar_lea.smem %s0, 18
  %s37 = sld [smem:[%s36]]
  %s38 = scalar_lea.smem %s0, 19
  %s39 = sld [smem:[%s38]]
  %s40 = scalar_lea.smem %s0, 20
  %s41 = sld [smem:[%s40]]
  %s42 = scalar_lea.smem %s0, 21
  %s43 = sld [smem:[%s42]]
  %s44 = scalar_lea.smem %s0, 22
  %s45 = sld [smem:[%s44]]
  %s46 = scalar_lea.smem %s0, 23
  %s47 = sld [smem:[%s46]]
  %s48 = scalar_lea.smem %s0, 24
  %s49 = sld [smem:[%s48]]
  %s50 = scalar_lea.smem %s0, 25
  %s51 = sld [smem:[%s50]]
  %s52 = scalar_lea.smem %s0, 26
  %s53 = sld [smem:[%s52]]
  %s54 = scalar_lea.smem %s0, 27
  %s55 = sld [smem:[%s54]]
  %s56 = scalar_lea.smem %s0, 28
  %s57 = sld [smem:[%s56]]
  %s58 = scalar_lea.smem %s0, 29
  %s59 = sld [smem:[%s58]]
  %s60 = scalar_lea.smem %s0, 30
  %s61 = sld [smem:[%s60]]
  %s62 = scalar_lea.smem %s0, 31
  %s63 = sld [smem:[%s62]]
  %s64 = scalar_lea.smem %s0, 32
  %s65 = sld [smem:[%s64]]
  %s66 = scalar_lea.smem %s0, 33
  %s67 = sld [smem:[%s66]]
  %68 = xla_tuple %s61, %s63, %s65, %s67
  %s69 = sld [smem:[#allocation0]]
  $region154: #{forward.1} parent=0
    _
  %s71 = ssub.s32 1, %s69
  %s72 = scalar_select 0, %s71, %s69
  // Predicated region
  $region2: #{forward.1} parent=0 // pred_check
    _
  $region3: #{forward.1} parent=0 // pred_check_branch
    %74 = sbr.rel (0) target = $region5
  $region4: #{forward.1} parent=0 // pred_region
    _
  $region5: #{forward.1} parent=0 // pred_fallthru
    _
  // Predicated region
  $region6: #{forward.1} parent=0 // pred_check
    _
  $region7: #{forward.1} parent=0 // pred_check_branch
    %76 = sbr.rel (0) target = $region9
  $region8: #{forward.1} parent=0 // pred_region
    _
  $region9: #{forward.1} parent=0 // pred_fallthru
    _
  // Predicated region
  $region10: #{forward.1} parent=0 // pred_check
    _
  $region11: #{forward.1} parent=0 // pred_check_branch
    %78 = sbr.rel (0) target = $region13
  $region12: #{forward.1} parent=0 // pred_region
    _
  $region13: #{forward.1} parent=0 // pred_fallthru
    _
  // Predicated region
  $region14: #{forward.1} parent=0 // pred_check
    _
  $region15: #{forward.1} parent=0 // pred_check_branch
    %80 = sbr.rel (0) target = $region17
  $region16: #{forward.1} parent=0 // pred_region
    _
  $region17: #{forward.1} parent=0 // pred_fallthru
    _
  // Predicated region
  $region18: #{forward.1} parent=0 // pred_check
    _
  $region19: #{forward.1} parent=0 // pred_check_branch
    %82 = sbr.rel (0) target = $region21
  $region20: #{forward.1} parent=0 // pred_region
    _
  $region21: #{forward.1} parent=0 // pred_fallthru
    _
  // Predicated region
  $region22: #{forward.1} parent=0 // pred_check
    _
  $region23: #{forward.1} parent=0 // pred_check_branch
    %84 = sbr.rel (0) target = $region25
  $region24: #{forward.1} parent=0 // pred_region
    _
  $region25: #{forward.1} parent=0 // pred_fallthru
    _
  // Predicated region
  $region26: #{forward.1} parent=0 // pred_check
    _
  $region27: #{forward.1} parent=0 // pred_check_branch
    %86 = sbr.rel (0) target = $region29
  $region28: #{forward.1} parent=0 // pred_region
    _
  $region29: #{forward.1} parent=0 // pred_fallthru
    _
  // Predicated region
  $region30: #{forward.1} parent=0 // pred_check
    _
  $region31: #{forward.1} parent=0 // pred_check_branch
    %88 = sbr.rel (0) target = $region33
  $region32: #{forward.1} parent=0 // pred_region
    _
  $region33: #{forward.1} parent=0 // pred_fallthru
    _
  // Predicated region
  $region34: #{forward.1} parent=0 // pred_check
    _
  $region35: #{forward.1} parent=0 // pred_check_branch
    %90 = sbr.rel (0) target = $region37
  $region36: #{forward.1} parent=0 // pred_region
    _
  $region37: #{forward.1} parent=0 // pred_fallthru
    _
  // Predicated region
  $region38: #{forward.1} parent=0 // pred_check
    _
  $region39: #{forward.1} parent=0 // pred_check_branch
    %92 = sbr.rel (0) target = $region41
  $region40: #{forward.1} parent=0 // pred_region
    _
  $region41: #{forward.1} parent=0 // pred_fallthru
    _
  // Predicated region
  $region42: #{forward.1} parent=0 // pred_check
    _
  $region43: #{forward.1} parent=0 // pred_check_branch
    %94 = sbr.rel (0) target = $region45
  $region44: #{forward.1} parent=0 // pred_region
    _
  $region45: #{forward.1} parent=0 // pred_fallthru
    _
  // Predicated region
  $region46: #{forward.1} parent=0 // pred_check
    _
  $region47: #{forward.1} parent=0 // pred_check_branch
    %96 = sbr.rel (0) target = $region49
  $region48: #{forward.1} parent=0 // pred_region
    _
  $region49: #{forward.1} parent=0 // pred_fallthru
    _
  // Predicated region
  $region50: #{forward.1} parent=0 // pred_check
    _
  $region51: #{forward.1} parent=0 // pred_check_branch
    %98 = sbr.rel (0) target = $region53
  $region52: #{forward.1} parent=0 // pred_region
    _
  $region53: #{forward.1} parent=0 // pred_fallthru
    _
  // Predicated region
  $region54: #{forward.1} parent=0 // pred_check
    _
  $region55: #{forward.1} parent=0 // pred_check_branch
    %100 = sbr.rel (0) target = $region57
  $region56: #{forward.1} parent=0 // pred_region
    _
  $region57: #{forward.1} parent=0 // pred_fallthru
    _
  // Predicated region
  $region58: #{forward.1} parent=0 // pred_check
    _
  $region59: #{forward.1} parent=0 // pred_check_branch
    %102 = sbr.rel (0) target = $region61
  $region60: #{forward.1} parent=0 // pred_region
    _
  $region61: #{forward.1} parent=0 // pred_fallthru
    _
  // Predicated region
  $region62: #{forward.1} parent=0 // pred_check
    _
  $region63: #{forward.1} parent=0 // pred_check_branch
    %104 = sbr.rel (0) target = $region65
  $region64: #{forward.1} parent=0 // pred_region
    _
  $region65: #{forward.1} parent=0 // pred_fallthru
    _
  // Predicated region
  $region66: #{forward.1} parent=0 // pred_check
    _
  $region67: #{forward.1} parent=0 // pred_check_branch
    %106 = sbr.rel (0) target = $region69
  $region68: #{forward.1} parent=0 // pred_region
    _
  $region69: #{forward.1} parent=0 // pred_fallthru
    _
  // Predicated region
  $region70: #{forward.1} parent=0 // pred_check
    _
  $region71: #{forward.1} parent=0 // pred_check_branch
    %108 = sbr.rel (0) target = $region73
  $region72: #{forward.1} parent=0 // pred_region
    _
  $region73: #{forward.1} parent=0 // pred_fallthru
    _
  // Predicated region
  $region74: #{forward.1} parent=0 // pred_check
    _
  $region75: #{forward.1} parent=0 // pred_check_branch
    %110 = sbr.rel (0) target = $region77
  $region76: #{forward.1} parent=0 // pred_region
    _
  $region77: #{forward.1} parent=0 // pred_fallthru
    _
  // Predicated region
  $region78: #{forward.1} parent=0 // pred_check
    _
  $region79: #{forward.1} parent=0 // pred_check_branch
    %112 = sbr.rel (0) target = $region81
  $region80: #{forward.1} parent=0 // pred_region
    _
  $region81: #{forward.1} parent=0 // pred_fallthru
    _
  // Predicated region
  $region82: #{forward.1} parent=0 // pred_check
    _
  $region83: #{forward.1} parent=0 // pred_check_branch
    %114 = sbr.rel (0) target = $region85
  $region84: #{forward.1} parent=0 // pred_region
    _
  $region85: #{forward.1} parent=0 // pred_fallthru
    _
  // Predicated region
  $region86: #{forward.1} parent=0 // pred_check
    _
  $region87: #{forward.1} parent=0 // pred_check_branch
    %116 = sbr.rel (0) target = $region89
  $region88: #{forward.1} parent=0 // pred_region
    _
  $region89: #{forward.1} parent=0 // pred_fallthru
    _
  // Predicated region
  $region90: #{forward.1} parent=0 // pred_check
    _
  $region91: #{forward.1} parent=0 // pred_check_branch
    %118 = sbr.rel (0) target = $region93
  $region92: #{forward.1} parent=0 // pred_region
    _
  $region93: #{forward.1} parent=0 // pred_fallthru
    _
  // Predicated region
  $region94: #{forward.1} parent=0 // pred_check
    _
  $region95: #{forward.1} parent=0 // pred_check_branch
    %120 = sbr.rel (0) target = $region97
  $region96: #{forward.1} parent=0 // pred_region
    _
  $region97: #{forward.1} parent=0 // pred_fallthru
    _
  // Predicated region
  $region98: #{forward.1} parent=0 // pred_check
    _
  $region99: #{forward.1} parent=0 // pred_check_branch
    %122 = sbr.rel (0) target = $region101
  $region100: #{forward.1} parent=0 // pred_region
    _
  $region101: #{forward.1} parent=0 // pred_fallthru
    _
  // Predicated region
  $region102: #{forward.1} parent=0 // pred_check
    _
  $region103: #{forward.1} parent=0 // pred_check_branch
    %124 = sbr.rel (0) target = $region105
  $region104: #{forward.1} parent=0 // pred_region
    _
  $region105: #{forward.1} parent=0 // pred_fallthru
    _
  // Predicated region
  $region106: #{forward.1} parent=0 // pred_check
    _
  $region107: #{forward.1} parent=0 // pred_check_branch
    %126 = sbr.rel (0) target = $region109
  $region108: #{forward.1} parent=0 // pred_region
    _
  $region109: #{forward.1} parent=0 // pred_fallthru
    _
  // Predicated region
  $region110: #{forward.1} parent=0 // pred_check
    _
  $region111: #{forward.1} parent=0 // pred_check_branch
    %128 = sbr.rel (0) target = $region113
  $region112: #{forward.1} parent=0 // pred_region
    _
  $region113: #{forward.1} parent=0 // pred_fallthru
    _
  // Predicated region
  $region114: #{forward.1} parent=0 // pred_check
    _
  $region115: #{forward.1} parent=0 // pred_check_branch
    %130 = sbr.rel (0) target = $region117
  $region116: #{forward.1} parent=0 // pred_region
    _
  $region117: #{forward.1} parent=0 // pred_fallthru
    _
  // Predicated region
  $region118: #{forward.1} parent=0 // pred_check
    _
  $region119: #{forward.1} parent=0 // pred_check_branch
    %132 = sbr.rel (0) target = $region121
  $region120: #{forward.1} parent=0 // pred_region
    _
  $region121: #{forward.1} parent=0 // pred_fallthru
    _
  %v133 = vld [vmem:[%s1] sm:$0xff]
  %v134 = vld [vmem:[%s1 + $0x8] sm:$0xff]
  %v135 = vlaneseq
  %v136 = vand.u32 %v135, 127
  %137 = vset.pattern.permute.xlu0 0
  %138 = vperm.xlu0 %137, %v133
  %v139 = vpop.permute.xlu0 %138
  %140 = vset.pattern.permute.xlu0 0
  %141 = vperm.xlu0 %140, %v134
  %v142 = vpop.permute.xlu0 %141
  %vm143 = vcmp.eq.s32.totalorder %v139, %v136
  %vm144 = vcmp.eq.s32.totalorder %v142, %v136
  %v145 = vsel %vm143, 1, 0
  %v146 = vsel %vm144, 1, 0
  %v147 = vcvt.s32.f32 %v145
  %v148 = vcvt.s32.f32 %v146
  %v149 = vld [vmem:[%s3] sm:$0xff]
  %v150 = vld [vmem:[%s3 + $0x8] sm:$0xff]
  %v151 = vld [vmem:[%s3 + $0x10] sm:$0xff]
  %v152 = vld [vmem:[%s3 + $0x18] sm:$0xff]
  %v153 = vld [vmem:[%s3 + $0x20] sm:$0xff]
  %v154 = vld [vmem:[%s3 + $0x28] sm:$0xff]
  %v155 = vld [vmem:[%s3 + $0x30] sm:$0xff]
  %v156 = vld [vmem:[%s3 + $0x38] sm:$0xff]
  %v157 = vld [vmem:[%s3 + $0x40] sm:$0xff]
  %v158 = vld [vmem:[%s3 + $0x48] sm:$0xff]
  %v159 = vld [vmem:[%s3 + $0x50] sm:$0xff]
  %v160 = vld [vmem:[%s3 + $0x58] sm:$0xff]
  %v161 = vld [vmem:[%s3 + $0x60] sm:$0xff]
  %v162 = vld [vmem:[%s3 + $0x68] sm:$0xff]
  %v163 = vld [vmem:[%s3 + $0x70] sm:$0xff]
  %v164 = vld [vmem:[%s3 + $0x78] sm:$0xff]
  %v165 = vld [vmem:[%s5] sm:$0xff]
  %v166 = vld [vmem:[%s5 + $0x8] sm:$0xff]
  %167 = vmatpush.msra.mxu0 %v164
  %168 = vmatpush.msra.mxu0 %v163
  %169 = vmatpush.msra.mxu0 %v162
  %170 = vmatpush.msra.mxu0 %v161
  %171 = vmatpush.msra.mxu0 %v160
  %172 = vmatpush.msra.mxu0 %v159
  %173 = vmatpush.msra.mxu0 %v158
  %174 = vmatpush.msra.mxu0 %v157
  %175 = vmatpush.msra.mxu0 %v156
  %176 = vmatpush.msra.mxu0 %v155
  %177 = vmatpush.msra.mxu0 %v154
  %178 = vmatpush.msra.mxu0 %v153
  %179 = vmatpush.msra.mxu0 %v152
  %180 = vmatpush.msra.mxu0 %v151
  %181 = vmatpush.msra.mxu0 %v150
  %182 = vmatpush.msra.mxu0 %v149
  %183 = vmatmul.f32.gmra.mxu0 %v147
  %v184 = vpop.f32.mrf.mxu0
  %v185 = vadd.f32 %v165, %v184
  %186 = vmatmul.f32.gmra.mxu0 %v148
  %v187 = vpop.f32.mrf.mxu0
  %v188 = vadd.f32 %v166, %v187
  %189 = vdwg.mxu0
  %v190 = vld [vmem:[%s9] sm:$0x1]
  %v191 = vld [vmem:[%s11] sm:$0x1]
  %vm192 = vcmask 261120
  %v193 = vsel %vm192, %v185, 0.0
  %194 = vadd.xlane.f32.xlu0 %v193
  %v195 = vpop.xlane.xlu0 %194
  %v196 = vsel %vm192, %v188, 0.0
  %197 = vadd.xlane.f32.xlu0 %v196
  %v198 = vpop.xlane.xlu0 %197
  %v199 = vrcp.pop 32.0
  %v200 = vmul.f32 32.0, %v199
  %v201 = vsub.f32 1.0, %v200
  %v202 = vmul.f32 %v199, %v201
  %v203 = vadd.f32 %v199, %v202
  %vm204 = vweird.f32 %v199
  %v205 = vsel %vm204, %v199, %v203
  %v206 = vmul.f32 %v195, %v205
  %v207 = vmul.f32 %v198, %v205
  %v208 = vsub.f32 %v185, %v206
  %v209 = vsub.f32 %v188, %v207
  %v210 = vmul.f32 %v208, %v208
  %v211 = vmul.f32 %v209, %v209
  %v212 = vsel %vm192, %v210, 0.0
  %213 = vadd.xlane.f32.xlu0 %v212
  %v214 = vpop.xlane.xlu0 %213
  %v215 = vsel %vm192, %v211, 0.0
  %216 = vadd.xlane.f32.xlu0 %v215
  %v217 = vpop.xlane.xlu0 %216
  %v218 = vmul.f32 %v214, %v205
  %v219 = vmul.f32 %v217, %v205
  %v220 = vadd.f32 %v218, 1e-05
  %v221 = vadd.f32 %v219, 1e-05
  %v222 = vrsqrt.pop %v220
  %v223 = vmul.f32 %v222, %v220
  %v224 = vmul.f32 %v223, %v222
  %v225 = vmul.f32 0.5, %v224
  %v226 = vsub.f32 1.5, %v225
  %v227 = vmul.f32 %v222, %v226
  %vm228 = vweird.f32 %v220
  %vm229 = vweird.f32 %v222
  %vm230 = vmor %vm228, %vm229
  %v231 = vsel %vm230, %v222, %v227
  %v232 = vrsqrt.pop %v221
  %v233 = vmul.f32 %v232, %v221
  %v234 = vmul.f32 %v233, %v232
  %v235 = vmul.f32 0.5, %v234
  %v236 = vsub.f32 1.5, %v235
  %v237 = vmul.f32 %v232, %v236
  %vm238 = vweird.f32 %v221
  %vm239 = vweird.f32 %v232
  %vm240 = vmor %vm238, %vm239
  %v241 = vsel %vm240, %v232, %v237
  %v242 = vmul.f32 %v208, %v231
  %v243 = vmul.f32 %v209, %v241
  %v245 = vperm.slane %v190, 0
  %v247 = vmul.f32 %v242, %v245
  %v248 = vmul.f32 %v243, %v245
  %v250 = vperm.slane %v191, 0
  %v252 = vadd.f32 %v247, %v250
  %v253 = vadd.f32 %v248, %v250
  %v254 = vld [vmem:[%s7] sm:$0xff]
  %v255 = vld [vmem:[%s7 + $0x8] sm:$0xff]
  %vm256 = vcmp.gt.f32.partialorder %v254, 0.5
  %vm257 = vcmp.gt.f32.partialorder %v255, 0.5
  %v258 = vld [vmem:[%s13] sm:$0xff]
  %v259 = vld [vmem:[%s13 + $0x8] sm:$0xff]
  %v260 = vld [vmem:[%s13 + $0x10] sm:$0xff]
  %v261 = vld [vmem:[%s13 + $0x18] sm:$0xff]
  %v262 = vld [vmem:[%s19] sm:$0x1]
  %v264 = vperm.slane %v262, 0
  %v267 = vsel %vm192, %v252, 0
  %v270 = vsel %vm192, %v253, 0
  %272 = vmatpush.msra.mxu0 0.0
  %273 = vmatpush.msra.mxu0 0.0
  %274 = vmatpush.msra.mxu0 0.0
  %275 = vmatpush.msra.mxu0 0.0
  %276 = vmatpush.msra.mxu0 0.0
  %277 = vmatpush.msra.mxu0 0.0
  %278 = vmatpush.msra.mxu0 0.0
  %279 = vmatpush.msra.mxu0 0.0
  %280 = vmatpush.msra.mxu0 0.0
  %281 = vmatpush.msra.mxu0 0.0
  %282 = vmatpush.msra.mxu0 0.0
  %283 = vmatpush.msra.mxu0 0.0
  %284 = vmatpush.msra.mxu0 %v261
  %285 = vmatpush.msra.mxu0 %v260
  %286 = vmatpush.msra.mxu0 %v259
  %287 = vmatpush.msra.mxu0 %v258
  %288 = vmatmul.f32.gmra.mxu0 %v267
  %v289 = vpop.f32.mrf.mxu0
  %v290 = vadd.f32 %v264, %v289
  %291 = vmatmul.f32.gmra.mxu0 %v270
  %v292 = vpop.f32.mrf.mxu0
  %v293 = vadd.f32 %v264, %v292
  %294 = vdwg.mxu0
  %v295 = vld [vmem:[%s15] sm:$0xff]
  %v296 = vld [vmem:[%s15 + $0x8] sm:$0xff]
  %v297 = vld [vmem:[%s15 + $0x10] sm:$0xff]
  %v298 = vld [vmem:[%s15 + $0x18] sm:$0xff]
  %v299 = vld [vmem:[%s21] sm:$0x1]
  %v301 = vperm.slane %v299, 0
  %303 = vmatpush.msra.mxu0 0.0
  %304 = vmatpush.msra.mxu0 0.0
  %305 = vmatpush.msra.mxu0 0.0
  %306 = vmatpush.msra.mxu0 0.0
  %307 = vmatpush.msra.mxu0 0.0
  %308 = vmatpush.msra.mxu0 0.0
  %309 = vmatpush.msra.mxu0 0.0
  %310 = vmatpush.msra.mxu0 0.0
  %311 = vmatpush.msra.mxu0 0.0
  %312 = vmatpush.msra.mxu0 0.0
  %313 = vmatpush.msra.mxu0 0.0
  %314 = vmatpush.msra.mxu0 0.0
  %315 = vmatpush.msra.mxu0 %v298
  %316 = vmatpush.msra.mxu0 %v297
  %317 = vmatpush.msra.mxu0 %v296
  %318 = vmatpush.msra.mxu0 %v295
  %319 = vmatmul.f32.gmra.mxu0 %v267
  %v320 = vpop.f32.mrf.mxu0
  %v321 = vadd.f32 %v301, %v320
  %322 = vmatmul.f32.gmra.mxu0 %v270
  %v323 = vpop.f32.mrf.mxu0
  %v324 = vadd.f32 %v301, %v323
  %325 = vdwg.mxu0
  %v326 = vld [vmem:[%s17] sm:$0xff]
  %v327 = vld [vmem:[%s17 + $0x8] sm:$0xff]
  %v328 = vld [vmem:[%s17 + $0x10] sm:$0xff]
  %v329 = vld [vmem:[%s17 + $0x18] sm:$0xff]
  %v330 = vld [vmem:[%s23] sm:$0x1]
  %v332 = vperm.slane %v330, 0
  %334 = vmatpush.msra.mxu0 0.0
  %335 = vmatpush.msra.mxu0 0.0
  %336 = vmatpush.msra.mxu0 0.0
  %337 = vmatpush.msra.mxu0 0.0
  %338 = vmatpush.msra.mxu0 0.0
  %339 = vmatpush.msra.mxu0 0.0
  %340 = vmatpush.msra.mxu0 0.0
  %341 = vmatpush.msra.mxu0 0.0
  %342 = vmatpush.msra.mxu0 0.0
  %343 = vmatpush.msra.mxu0 0.0
  %344 = vmatpush.msra.mxu0 0.0
  %345 = vmatpush.msra.mxu0 0.0
  %346 = vmatpush.msra.mxu0 %v329
  %347 = vmatpush.msra.mxu0 %v328
  %348 = vmatpush.msra.mxu0 %v327
  %349 = vmatpush.msra.mxu0 %v326
  %350 = vmatmul.f32.gmra.mxu0 %v267
  %v351 = vpop.f32.mrf.mxu0
  %v352 = vadd.f32 %v332, %v351
  %353 = vmatmul.f32.gmra.mxu0 %v270
  %v354 = vpop.f32.mrf.mxu0
  %v355 = vadd.f32 %v332, %v354
  %356 = vdwg.mxu0
  %vm357 = vcmask 64512
  %v359 = vsel %vm357, %v290, 0
  %v362 = vsel %vm357, %v293, 0
  %v365 = vsel %vm357, %v321, 0
  %v368 = vsel %vm357, %v324, 0
  %370 = vmatpush.xpose.msra.mxu0 0.0
  %371 = vmatpush.xpose.msra.mxu0 0.0
  %372 = vmatpush.xpose.msra.mxu0 0.0
  %373 = vmatpush.xpose.msra.mxu0 0.0
  %374 = vmatpush.xpose.msra.mxu0 0.0
  %375 = vmatpush.xpose.msra.mxu0 0.0
  %376 = vmatpush.xpose.msra.mxu0 0.0
  %377 = vmatpush.xpose.msra.mxu0 0.0
  %378 = vmatpush.xpose.msra.mxu0 0.0
  %379 = vmatpush.xpose.msra.mxu0 0.0
  %380 = vmatpush.xpose.msra.mxu0 0.0
  %381 = vmatpush.xpose.msra.mxu0 0.0
  %382 = vmatpush.xpose.msra.mxu0 0.0
  %383 = vmatpush.xpose.msra.mxu0 0.0
  %384 = vmatpush.xpose.msra.mxu0 %v368
  %385 = vmatpush.xpose.msra.mxu0 %v365
  %386 = vmatmul.f32.gmra.mxu0 %v359
  %v387 = vpop.f32.mrf.mxu0
  %v388 = vadd.f32 0.0, %v387
  %389 = vmatmul.f32.gmra.mxu0 %v362
  %v390 = vpop.f32.mrf.mxu0
  %v391 = vadd.f32 0.0, %v390
  %392 = vdwg.mxu0
  %v393 = vmul.f32 %v388, 0.35355338
  %v394 = vmul.f32 %v391, 0.35355338
  %v395 = vsel %vm256, %v393, -1e+30
  %v396 = vsel %vm257, %v394, -1e+30
  %vm397 = vcmask 130048
  %v398 = vsel %vm397, %v395, -inf
  %399 = vmax.xlane.f32.xlu0 %v398
  %v400 = vpop.xlane.xlu0 %399
  %v401 = vsel %vm397, %v396, -inf
  %402 = vmax.xlane.f32.xlu0 %v401
  %v403 = vpop.xlane.xlu0 %402
  %v404 = vsub.f32 %v395, %v400
  %v405 = vsub.f32 %v396, %v403
  %v406 = vmul.f32 %v404, 1.442695
  %v407 = vpow.pop %v406
  %v408 = vmul.f32 %v405, 1.442695
  %v409 = vpow.pop %v408
  %v410 = vsel %vm397, %v407, 0.0
  %411 = vadd.xlane.f32.xlu0 %v410
  %v412 = vpop.xlane.xlu0 %411
  %v413 = vsel %vm397, %v409, 0.0
  %414 = vadd.xlane.f32.xlu0 %v413
  %v415 = vpop.xlane.xlu0 %414
  %v416 = vrcp.pop %v412
  %v417 = vrcp.pop %v415
  %v418 = vmul.f32 %v407, %v416
  %v419 = vmul.f32 %v409, %v417
  %v421 = vsel %vm397, %v418, 0
  %v424 = vsel %vm397, %v419, 0
  %426 = vmatpush.msra.mxu0 0.0
  %427 = vmatpush.msra.mxu0 0.0
  %428 = vmatpush.msra.mxu0 0.0
  %429 = vmatpush.msra.mxu0 0.0
  %430 = vmatpush.msra.mxu0 0.0
  %431 = vmatpush.msra.mxu0 0.0
  %432 = vmatpush.msra.mxu0 0.0
  %433 = vmatpush.msra.mxu0 0.0
  %434 = vmatpush.msra.mxu0 0.0
  %435 = vmatpush.msra.mxu0 0.0
  %436 = vmatpush.msra.mxu0 0.0
  %437 = vmatpush.msra.mxu0 0.0
  %438 = vmatpush.msra.mxu0 0.0
  %439 = vmatpush.msra.mxu0 0.0
  %440 = vmatpush.msra.mxu0 %v355
  %441 = vmatpush.msra.mxu0 %v352
  %442 = vmatmul.f32.gmra.mxu0 %v421
  %v443 = vpop.f32.mrf.mxu0
  %v444 = vadd.f32 0.0, %v443
  %445 = vmatmul.f32.gmra.mxu0 %v424
  %v446 = vpop.f32.mrf.mxu0
  %v447 = vadd.f32 0.0, %v446
  %448 = vdwg.mxu0
  %v449 = vld [vmem:[%s25] sm:$0xff]
  %s450 = scalar_lea.vmem %s13, 32
  %v451 = vld [vmem:[%s450] sm:$0xff]
  %v452 = vld [vmem:[%s450 + $0x8] sm:$0xff]
  %v453 = vld [vmem:[%s450 + $0x10] sm:$0xff]
  %v454 = vld [vmem:[%s450 + $0x18] sm:$0xff]
  %s455 = scalar_lea.vmem %s19, 1
  %v456 = vld [vmem:[%s455] sm:$0x1]
  %v458 = vperm.slane %v456, 0
  %460 = vmatpush.msra.mxu0 0.0
  %461 = vmatpush.msra.mxu0 0.0
  %462 = vmatpush.msra.mxu0 0.0
  %463 = vmatpush.msra.mxu0 0.0
  %464 = vmatpush.msra.mxu0 0.0
  %465 = vmatpush.msra.mxu0 0.0
  %466 = vmatpush.msra.mxu0 0.0
  %467 = vmatpush.msra.mxu0 0.0
  %468 = vmatpush.msra.mxu0 0.0
  %469 = vmatpush.msra.mxu0 0.0
  %470 = vmatpush.msra.mxu0 0.0
  %471 = vmatpush.msra.mxu0 0.0
  %472 = vmatpush.msra.mxu0 %v454
  %473 = vmatpush.msra.mxu0 %v453
  %474 = vmatpush.msra.mxu0 %v452
  %475 = vmatpush.msra.mxu0 %v451
  %476 = vmatmul.f32.gmra.mxu0 %v267
  %v477 = vpop.f32.mrf.mxu0
  %v478 = vadd.f32 %v458, %v477
  %479 = vmatmul.f32.gmra.mxu0 %v270
  %v480 = vpop.f32.mrf.mxu0
  %v481 = vadd.f32 %v458, %v480
  %482 = vdwg.mxu0
  %s483 = scalar_lea.vmem %s15, 32
  %v484 = vld [vmem:[%s483] sm:$0xff]
  %v485 = vld [vmem:[%s483 + $0x8] sm:$0xff]
  %v486 = vld [vmem:[%s483 + $0x10] sm:$0xff]
  %v487 = vld [vmem:[%s483 + $0x18] sm:$0xff]
  %s488 = scalar_lea.vmem %s21, 1
  %v489 = vld [vmem:[%s488] sm:$0x1]
  %v491 = vperm.slane %v489, 0
  %493 = vmatpush.msra.mxu0 0.0
  %494 = vmatpush.msra.mxu0 0.0
  %495 = vmatpush.msra.mxu0 0.0
  %496 = vmatpush.msra.mxu0 0.0
  %497 = vmatpush.msra.mxu0 0.0
  %498 = vmatpush.msra.mxu0 0.0
  %499 = vmatpush.msra.mxu0 0.0
  %500 = vmatpush.msra.mxu0 0.0
  %501 = vmatpush.msra.mxu0 0.0
  %502 = vmatpush.msra.mxu0 0.0
  %503 = vmatpush.msra.mxu0 0.0
  %504 = vmatpush.msra.mxu0 0.0
  %505 = vmatpush.msra.mxu0 %v487
  %506 = vmatpush.msra.mxu0 %v486
  %507 = vmatpush.msra.mxu0 %v485
  %508 = vmatpush.msra.mxu0 %v484
  %509 = vmatmul.f32.gmra.mxu0 %v267
  %v510 = vpop.f32.mrf.mxu0
  %v511 = vadd.f32 %v491, %v510
  %512 = vmatmul.f32.gmra.mxu0 %v270
  %v513 = vpop.f32.mrf.mxu0
  %v514 = vadd.f32 %v491, %v513
  %515 = vdwg.mxu0
  %s516 = scalar_lea.vmem %s17, 32
  %v517 = vld [vmem:[%s516] sm:$0xff]
  %v518 = vld [vmem:[%s516 + $0x8] sm:$0xff]
  %v519 = vld [vmem:[%s516 + $0x10] sm:$0xff]
  %v520 = vld [vmem:[%s516 + $0x18] sm:$0xff]
  %s521 = scalar_lea.vmem %s23, 1
  %v522 = vld [vmem:[%s521] sm:$0x1]
  %v524 = vperm.slane %v522, 0
  %526 = vmatpush.msra.mxu0 0.0
  %527 = vmatpush.msra.mxu0 0.0
  %528 = vmatpush.msra.mxu0 0.0
  %529 = vmatpush.msra.mxu0 0.0
  %530 = vmatpush.msra.mxu0 0.0
  %531 = vmatpush.msra.mxu0 0.0
  %532 = vmatpush.msra.mxu0 0.0
  %533 = vmatpush.msra.mxu0 0.0
  %534 = vmatpush.msra.mxu0 0.0
  %535 = vmatpush.msra.mxu0 0.0
  %536 = vmatpush.msra.mxu0 0.0
  %537 = vmatpush.msra.mxu0 0.0
  %538 = vmatpush.msra.mxu0 %v520
  %539 = vmatpush.msra.mxu0 %v519
  %540 = vmatpush.msra.mxu0 %v518
  %541 = vmatpush.msra.mxu0 %v517
  %542 = vmatmul.f32.gmra.mxu0 %v267
  %v543 = vpop.f32.mrf.mxu0
  %v544 = vadd.f32 %v524, %v543
  %545 = vmatmul.f32.gmra.mxu0 %v270
  %v546 = vpop.f32.mrf.mxu0
  %v547 = vadd.f32 %v524, %v546
  %548 = vdwg.mxu0
  %v550 = vsel %vm357, %v478, 0
  %v553 = vsel %vm357, %v481, 0
  %v556 = vsel %vm357, %v511, 0
  %v559 = vsel %vm357, %v514, 0
  %561 = vmatpush.xpose.msra.mxu0 0.0
  %562 = vmatpush.xpose.msra.mxu0 0.0
  %563 = vmatpush.xpose.msra.mxu0 0.0
  %564 = vmatpush.xpose.msra.mxu0 0.0
  %565 = vmatpush.xpose.msra.mxu0 0.0
  %566 = vmatpush.xpose.msra.mxu0 0.0
  %567 = vmatpush.xpose.msra.mxu0 0.0
  %568 = vmatpush.xpose.msra.mxu0 0.0
  %569 = vmatpush.xpose.msra.mxu0 0.0
  %570 = vmatpush.xpose.msra.mxu0 0.0
  %571 = vmatpush.xpose.msra.mxu0 0.0
  %572 = vmatpush.xpose.msra.mxu0 0.0
  %573 = vmatpush.xpose.msra.mxu0 0.0
  %574 = vmatpush.xpose.msra.mxu0 0.0
  %575 = vmatpush.xpose.msra.mxu0 %v559
  %576 = vmatpush.xpose.msra.mxu0 %v556
  %577 = vmatmul.f32.gmra.mxu0 %v550
  %v578 = vpop.f32.mrf.mxu0
  %v579 = vadd.f32 0.0, %v578
  %580 = vmatmul.f32.gmra.mxu0 %v553
  %v581 = vpop.f32.mrf.mxu0
  %v582 = vadd.f32 0.0, %v581
  %583 = vdwg.mxu0
  %v584 = vmul.f32 %v579, 0.35355338
  %v585 = vmul.f32 %v582, 0.35355338
  %v586 = vsel %vm256, %v584, -1e+30
  %v587 = vsel %vm257, %v585, -1e+30
  %v588 = vsel %vm397, %v586, -inf
  %589 = vmax.xlane.f32.xlu0 %v588
  %v590 = vpop.xlane.xlu0 %589
  %v591 = vsel %vm397, %v587, -inf
  %592 = vmax.xlane.f32.xlu0 %v591
  %v593 = vpop.xlane.xlu0 %592
  %v594 = vsub.f32 %v586, %v590
  %v595 = vsub.f32 %v587, %v593
  %v596 = vmul.f32 %v594, 1.442695
  %v597 = vpow.pop %v596
  %v598 = vmul.f32 %v595, 1.442695
  %v599 = vpow.pop %v598
  %v600 = vsel %vm397, %v597, 0.0
  %601 = vadd.xlane.f32.xlu0 %v600
  %v602 = vpop.xlane.xlu0 %601
  %v603 = vsel %vm397, %v599, 0.0
  %604 = vadd.xlane.f32.xlu0 %v603
  %v605 = vpop.xlane.xlu0 %604
  %v606 = vrcp.pop %v602
  %v607 = vrcp.pop %v605
  %v608 = vmul.f32 %v597, %v606
  %v609 = vmul.f32 %v599, %v607
  %v611 = vsel %vm397, %v608, 0
  %v614 = vsel %vm397, %v609, 0
  %616 = vmatpush.msra.mxu0 0.0
  %617 = vmatpush.msra.mxu0 0.0
  %618 = vmatpush.msra.mxu0 0.0
  %619 = vmatpush.msra.mxu0 0.0
  %620 = vmatpush.msra.mxu0 0.0
  %621 = vmatpush.msra.mxu0 0.0
  %622 = vmatpush.msra.mxu0 0.0
  %623 = vmatpush.msra.mxu0 0.0
  %624 = vmatpush.msra.mxu0 0.0
  %625 = vmatpush.msra.mxu0 0.0
  %626 = vmatpush.msra.mxu0 0.0
  %627 = vmatpush.msra.mxu0 0.0
  %628 = vmatpush.msra.mxu0 0.0
  %629 = vmatpush.msra.mxu0 0.0
  %630 = vmatpush.msra.mxu0 %v547
  %631 = vmatpush.msra.mxu0 %v544
  %632 = vmatmul.f32.gmra.mxu0 %v611
  %v633 = vpop.f32.mrf.mxu0
  %v634 = vadd.f32 0.0, %v633
  %635 = vmatmul.f32.gmra.mxu0 %v614
  %v636 = vpop.f32.mrf.mxu0
  %v637 = vadd.f32 0.0, %v636
  %638 = vdwg.mxu0
  %s639 = scalar_lea.vmem %s25, 8
  %v640 = vld [vmem:[%s639] sm:$0xff]
  %v642 = vsel %vm357, %v634, 0
  %v645 = vsel %vm357, %v637, 0
  %647 = vmatpush.msra.mxu0 0.0
  %648 = vmatpush.msra.mxu0 0.0
  %649 = vmatpush.msra.mxu0 0.0
  %650 = vmatpush.msra.mxu0 0.0
  %651 = vmatpush.msra.mxu0 0.0
  %652 = vmatpush.msra.mxu0 0.0
  %653 = vmatpush.msra.mxu0 0.0
  %654 = vmatpush.msra.mxu0 0.0
  %655 = vmatpush.msra.mxu0 0.0
  %656 = vmatpush.msra.mxu0 0.0
  %657 = vmatpush.msra.mxu0 0.0
  %658 = vmatpush.msra.mxu0 0.0
  %659 = vmatpush.msra.mxu0 0.0
  %660 = vmatpush.msra.mxu0 0.0
  %661 = vmatpush.msra.mxu0 0.0
  %662 = vmatpush.msra.mxu0 %v640
  %663 = vmatmul.f32.gmra.mxu0 %v642
  %v664 = vpop.f32.mrf.mxu0
  %v665 = vadd.f32 0.0, %v664
  %666 = vmatmul.f32.gmra.mxu0 %v645
  %v667 = vpop.f32.mrf.mxu0
  %v668 = vadd.f32 0.0, %v667
  %669 = vdwg.mxu0
  %v671 = vsel %vm357, %v444, 0
  %v674 = vsel %vm357, %v447, 0
  %676 = vmatpush.msra.mxu0 0.0
  %677 = vmatpush.msra.mxu0 0.0
  %678 = vmatpush.msra.mxu0 0.0
  %679 = vmatpush.msra.mxu0 0.0
  %680 = vmatpush.msra.mxu0 0.0
  %681 = vmatpush.msra.mxu0 0.0
  %682 = vmatpush.msra.mxu0 0.0
  %683 = vmatpush.msra.mxu0 0.0
  %684 = vmatpush.msra.mxu0 0.0
  %685 = vmatpush.msra.mxu0 0.0
  %686 = vmatpush.msra.mxu0 0.0
  %687 = vmatpush.msra.mxu0 0.0
  %688 = vmatpush.msra.mxu0 0.0
  %689 = vmatpush.msra.mxu0 0.0
  %690 = vmatpush.msra.mxu0 0.0
  %691 = vmatpush.msra.mxu0 %v449
  %692 = vmatmul.f32.gmra.mxu0 %v671
  %v693 = vpop.f32.mrf.mxu0
  %v694 = vadd.f32 %v665, %v693
  %695 = vmatmul.f32.gmra.mxu0 %v674
  %v696 = vpop.f32.mrf.mxu0
  %v697 = vadd.f32 %v668, %v696
  %698 = vdwg.mxu0
  %s699 = scalar_lea.vmem %s13, 64
  %v700 = vld [vmem:[%s699] sm:$0xff]
  %v701 = vld [vmem:[%s699 + $0x8] sm:$0xff]
  %v702 = vld [vmem:[%s699 + $0x10] sm:$0xff]
  %v703 = vld [vmem:[%s699 + $0x18] sm:$0xff]
  %s704 = scalar_lea.vmem %s19, 2
  %v705 = vld [vmem:[%s704] sm:$0x1]
  %v707 = vperm.slane %v705, 0
  %709 = vmatpush.msra.mxu0 0.0
  %710 = vmatpush.msra.mxu0 0.0
  %711 = vmatpush.msra.mxu0 0.0
  %712 = vmatpush.msra.mxu0 0.0
  %713 = vmatpush.msra.mxu0 0.0
  %714 = vmatpush.msra.mxu0 0.0
  %715 = vmatpush.msra.mxu0 0.0
  %716 = vmatpush.msra.mxu0 0.0
  %717 = vmatpush.msra.mxu0 0.0
  %718 = vmatpush.msra.mxu0 0.0
  %719 = vmatpush.msra.mxu0 0.0
  %720 = vmatpush.msra.mxu0 0.0
  %721 = vmatpush.msra.mxu0 %v703
  %722 = vmatpush.msra.mxu0 %v702
  %723 = vmatpush.msra.mxu0 %v701
  %724 = vmatpush.msra.mxu0 %v700
  %725 = vmatmul.f32.gmra.mxu0 %v267
  %v726 = vpop.f32.mrf.mxu0
  %v727 = vadd.f32 %v707, %v726
  %728 = vmatmul.f32.gmra.mxu0 %v270
  %v729 = vpop.f32.mrf.mxu0
  %v730 = vadd.f32 %v707, %v729
  %731 = vdwg.mxu0
  %s732 = scalar_lea.vmem %s15, 64
  %v733 = vld [vmem:[%s732] sm:$0xff]
  %v734 = vld [vmem:[%s732 + $0x8] sm:$0xff]
  %v735 = vld [vmem:[%s732 + $0x10] sm:$0xff]
  %v736 = vld [vmem:[%s732 + $0x18] sm:$0xff]
  %s737 = scalar_lea.vmem %s21, 2
  %v738 = vld [vmem:[%s737] sm:$0x1]
  %v740 = vperm.slane %v738, 0
  %742 = vmatpush.msra.mxu0 0.0
  %743 = vmatpush.msra.mxu0 0.0
  %744 = vmatpush.msra.mxu0 0.0
  %745 = vmatpush.msra.mxu0 0.0
  %746 = vmatpush.msra.mxu0 0.0
  %747 = vmatpush.msra.mxu0 0.0
  %748 = vmatpush.msra.mxu0 0.0
  %749 = vmatpush.msra.mxu0 0.0
  %750 = vmatpush.msra.mxu0 0.0
  %751 = vmatpush.msra.mxu0 0.0
  %752 = vmatpush.msra.mxu0 0.0
  %753 = vmatpush.msra.mxu0 0.0
  %754 = vmatpush.msra.mxu0 %v736
  %755 = vmatpush.msra.mxu0 %v735
  %756 = vmatpush.msra.mxu0 %v734
  %757 = vmatpush.msra.mxu0 %v733
  %758 = vmatmul.f32.gmra.mxu0 %v267
  %v759 = vpop.f32.mrf.mxu0
  %v760 = vadd.f32 %v740, %v759
  %761 = vmatmul.f32.gmra.mxu0 %v270
  %v762 = vpop.f32.mrf.mxu0
  %v763 = vadd.f32 %v740, %v762
  %764 = vdwg.mxu0
  %s765 = scalar_lea.vmem %s17, 64
  %v766 = vld [vmem:[%s765] sm:$0xff]
  %v767 = vld [vmem:[%s765 + $0x8] sm:$0xff]
  %v768 = vld [vmem:[%s765 + $0x10] sm:$0xff]
  %v769 = vld [vmem:[%s765 + $0x18] sm:$0xff]
  %s770 = scalar_lea.vmem %s23, 2
  %v771 = vld [vmem:[%s770] sm:$0x1]
  %v773 = vperm.slane %v771, 0
  %775 = vmatpush.msra.mxu0 0.0
  %776 = vmatpush.msra.mxu0 0.0
  %777 = vmatpush.msra.mxu0 0.0
  %778 = vmatpush.msra.mxu0 0.0
  %779 = vmatpush.msra.mxu0 0.0
  %780 = vmatpush.msra.mxu0 0.0
  %781 = vmatpush.msra.mxu0 0.0
  %782 = vmatpush.msra.mxu0 0.0
  %783 = vmatpush.msra.mxu0 0.0
  %784 = vmatpush.msra.mxu0 0.0
  %785 = vmatpush.msra.mxu0 0.0
  %786 = vmatpush.msra.mxu0 0.0
  %787 = vmatpush.msra.mxu0 %v769
  %788 = vmatpush.msra.mxu0 %v768
  %789 = vmatpush.msra.mxu0 %v767
  %790 = vmatpush.msra.mxu0 %v766
  %791 = vmatmul.f32.gmra.mxu0 %v267
  %v792 = vpop.f32.mrf.mxu0
  %v793 = vadd.f32 %v773, %v792
  %794 = vmatmul.f32.gmra.mxu0 %v270
  %v795 = vpop.f32.mrf.mxu0
  %v796 = vadd.f32 %v773, %v795
  %797 = vdwg.mxu0
  %v799 = vsel %vm357, %v727, 0
  %v802 = vsel %vm357, %v730, 0
  %v805 = vsel %vm357, %v760, 0
  %v808 = vsel %vm357, %v763, 0
  %810 = vmatpush.xpose.msra.mxu0 0.0
  %811 = vmatpush.xpose.msra.mxu0 0.0
  %812 = vmatpush.xpose.msra.mxu0 0.0
  %813 = vmatpush.xpose.msra.mxu0 0.0
  %814 = vmatpush.xpose.msra.mxu0 0.0
  %815 = vmatpush.xpose.msra.mxu0 0.0
  %816 = vmatpush.xpose.msra.mxu0 0.0
  %817 = vmatpush.xpose.msra.mxu0 0.0
  %818 = vmatpush.xpose.msra.mxu0 0.0
  %819 = vmatpush.xpose.msra.mxu0 0.0
  %820 = vmatpush.xpose.msra.mxu0 0.0
  %821 = vmatpush.xpose.msra.mxu0 0.0
  %822 = vmatpush.xpose.msra.mxu0 0.0
  %823 = vmatpush.xpose.msra.mxu0 0.0
  %824 = vmatpush.xpose.msra.mxu0 %v808
  %825 = vmatpush.xpose.msra.mxu0 %v805
  %826 = vmatmul.f32.gmra.mxu0 %v799
  %v827 = vpop.f32.mrf.mxu0
  %v828 = vadd.f32 0.0, %v827
  %829 = vmatmul.f32.gmra.mxu0 %v802
  %v830 = vpop.f32.mrf.mxu0
  %v831 = vadd.f32 0.0, %v830
  %832 = vdwg.mxu0
  %v833 = vmul.f32 %v828, 0.35355338
  %v834 = vmul.f32 %v831, 0.35355338
  %v835 = vsel %vm256, %v833, -1e+30
  %v836 = vsel %vm257, %v834, -1e+30
  %v837 = vsel %vm397, %v835, -inf
  %838 = vmax.xlane.f32.xlu0 %v837
  %v839 = vpop.xlane.xlu0 %838
  %v840 = vsel %vm397, %v836, -inf
  %841 = vmax.xlane.f32.xlu0 %v840
  %v842 = vpop.xlane.xlu0 %841
  %v843 = vsub.f32 %v835, %v839
  %v844 = vsub.f32 %v836, %v842
  %v845 = vmul.f32 %v843, 1.442695
  %v846 = vpow.pop %v845
  %v847 = vmul.f32 %v844, 1.442695
  %v848 = vpow.pop %v847
  %v849 = vsel %vm397, %v846, 0.0
  %850 = vadd.xlane.f32.xlu0 %v849
  %v851 = vpop.xlane.xlu0 %850
  %v852 = vsel %vm397, %v848, 0.0
  %853 = vadd.xlane.f32.xlu0 %v852
  %v854 = vpop.xlane.xlu0 %853
  %v855 = vrcp.pop %v851
  %v856 = vrcp.pop %v854
  %v857 = vmul.f32 %v846, %v855
  %v858 = vmul.f32 %v848, %v856
  %v860 = vsel %vm397, %v857, 0
  %v863 = vsel %vm397, %v858, 0
  %865 = vmatpush.msra.mxu0 0.0
  %866 = vmatpush.msra.mxu0 0.0
  %867 = vmatpush.msra.mxu0 0.0
  %868 = vmatpush.msra.mxu0 0.0
  %869 = vmatpush.msra.mxu0 0.0
  %870 = vmatpush.msra.mxu0 0.0
  %871 = vmatpush.msra.mxu0 0.0
  %872 = vmatpush.msra.mxu0 0.0
  %873 = vmatpush.msra.mxu0 0.0
  %874 = vmatpush.msra.mxu0 0.0
  %875 = vmatpush.msra.mxu0 0.0
  %876 = vmatpush.msra.mxu0 0.0
  %877 = vmatpush.msra.mxu0 0.0
  %878 = vmatpush.msra.mxu0 0.0
  %879 = vmatpush.msra.mxu0 %v796
  %880 = vmatpush.msra.mxu0 %v793
  %881 = vmatmul.f32.gmra.mxu0 %v860
  %v882 = vpop.f32.mrf.mxu0
  %v883 = vadd.f32 0.0, %v882
  %884 = vmatmul.f32.gmra.mxu0 %v863
  %v885 = vpop.f32.mrf.mxu0
  %v886 = vadd.f32 0.0, %v885
  %887 = vdwg.mxu0
  %s888 = scalar_lea.vmem %s25, 16
  %v889 = vld [vmem:[%s888] sm:$0xff]
  %v891 = vsel %vm357, %v883, 0
  %v894 = vsel %vm357, %v886, 0
  %896 = vmatpush.msra.mxu0 0.0
  %897 = vmatpush.msra.mxu0 0.0
  %898 = vmatpush.msra.mxu0 0.0
  %899 = vmatpush.msra.mxu0 0.0
  %900 = vmatpush.msra.mxu0 0.0
  %901 = vmatpush.msra.mxu0 0.0
  %902 = vmatpush.msra.mxu0 0.0
  %903 = vmatpush.msra.mxu0 0.0
  %904 = vmatpush.msra.mxu0 0.0
  %905 = vmatpush.msra.mxu0 0.0
  %906 = vmatpush.msra.mxu0 0.0
  %907 = vmatpush.msra.mxu0 0.0
  %908 = vmatpush.msra.mxu0 0.0
  %909 = vmatpush.msra.mxu0 0.0
  %910 = vmatpush.msra.mxu0 0.0
  %911 = vmatpush.msra.mxu0 %v889
  %912 = vmatmul.f32.gmra.mxu0 %v891
  %v913 = vpop.f32.mrf.mxu0
  %v914 = vadd.f32 0.0, %v913
  %915 = vmatmul.f32.gmra.mxu0 %v894
  %v916 = vpop.f32.mrf.mxu0
  %v917 = vadd.f32 0.0, %v916
  %918 = vdwg.mxu0
  %v919 = vadd.f32 %v694, %v914
  %v920 = vadd.f32 %v697, %v917
  %s921 = scalar_lea.vmem %s13, 96
  %v922 = vld [vmem:[%s921] sm:$0xff]
  %v923 = vld [vmem:[%s921 + $0x8] sm:$0xff]
  %v924 = vld [vmem:[%s921 + $0x10] sm:$0xff]
  %v925 = vld [vmem:[%s921 + $0x18] sm:$0xff]
  %s926 = scalar_lea.vmem %s19, 3
  %v927 = vld [vmem:[%s926] sm:$0x1]
  %v929 = vperm.slane %v927, 0
  %931 = vmatpush.msra.mxu0 0.0
  %932 = vmatpush.msra.mxu0 0.0
  %933 = vmatpush.msra.mxu0 0.0
  %934 = vmatpush.msra.mxu0 0.0
  %935 = vmatpush.msra.mxu0 0.0
  %936 = vmatpush.msra.mxu0 0.0
  %937 = vmatpush.msra.mxu0 0.0
  %938 = vmatpush.msra.mxu0 0.0
  %939 = vmatpush.msra.mxu0 0.0
  %940 = vmatpush.msra.mxu0 0.0
  %941 = vmatpush.msra.mxu0 0.0
  %942 = vmatpush.msra.mxu0 0.0
  %943 = vmatpush.msra.mxu0 %v925
  %944 = vmatpush.msra.mxu0 %v924
  %945 = vmatpush.msra.mxu0 %v923
  %946 = vmatpush.msra.mxu0 %v922
  %947 = vmatmul.f32.gmra.mxu0 %v267
  %v948 = vpop.f32.mrf.mxu0
  %v949 = vadd.f32 %v929, %v948
  %950 = vmatmul.f32.gmra.mxu0 %v270
  %v951 = vpop.f32.mrf.mxu0
  %v952 = vadd.f32 %v929, %v951
  %953 = vdwg.mxu0
  %s954 = scalar_lea.vmem %s15, 96
  %v955 = vld [vmem:[%s954] sm:$0xff]
  %v956 = vld [vmem:[%s954 + $0x8] sm:$0xff]
  %v957 = vld [vmem:[%s954 + $0x10] sm:$0xff]
  %v958 = vld [vmem:[%s954 + $0x18] sm:$0xff]
  %s959 = scalar_lea.vmem %s21, 3
  %v960 = vld [vmem:[%s959] sm:$0x1]
  %v962 = vperm.slane %v960, 0
  %964 = vmatpush.msra.mxu0 0.0
  %965 = vmatpush.msra.mxu0 0.0
  %966 = vmatpush.msra.mxu0 0.0
  %967 = vmatpush.msra.mxu0 0.0
  %968 = vmatpush.msra.mxu0 0.0
  %969 = vmatpush.msra.mxu0 0.0
  %970 = vmatpush.msra.mxu0 0.0
  %971 = vmatpush.msra.mxu0 0.0
  %972 = vmatpush.msra.mxu0 0.0
  %973 = vmatpush.msra.mxu0 0.0
  %974 = vmatpush.msra.mxu0 0.0
  %975 = vmatpush.msra.mxu0 0.0
  %976 = vmatpush.msra.mxu0 %v958
  %977 = vmatpush.msra.mxu0 %v957
  %978 = vmatpush.msra.mxu0 %v956
  %979 = vmatpush.msra.mxu0 %v955
  %980 = vmatmul.f32.gmra.mxu0 %v267
  %v981 = vpop.f32.mrf.mxu0
  %v982 = vadd.f32 %v962, %v981
  %983 = vmatmul.f32.gmra.mxu0 %v270
  %v984 = vpop.f32.mrf.mxu0
  %v985 = vadd.f32 %v962, %v984
  %986 = vdwg.mxu0
  %s987 = scalar_lea.vmem %s17, 96
  %v988 = vld [vmem:[%s987] sm:$0xff]
  %v989 = vld [vmem:[%s987 + $0x8] sm:$0xff]
  %v990 = vld [vmem:[%s987 + $0x10] sm:$0xff]
  %v991 = vld [vmem:[%s987 + $0x18] sm:$0xff]
  %s992 = scalar_lea.vmem %s23, 3
  %v993 = vld [vmem:[%s992] sm:$0x1]
  %v995 = vperm.slane %v993, 0
  %997 = vmatpush.msra.mxu0 0.0
  %998 = vmatpush.msra.mxu0 0.0
  %999 = vmatpush.msra.mxu0 0.0
  %1000 = vmatpush.msra.mxu0 0.0
  %1001 = vmatpush.msra.mxu0 0.0
  %1002 = vmatpush.msra.mxu0 0.0
  %1003 = vmatpush.msra.mxu0 0.0
  %1004 = vmatpush.msra.mxu0 0.0
  %1005 = vmatpush.msra.mxu0 0.0
  %1006 = vmatpush.msra.mxu0 0.0
  %1007 = vmatpush.msra.mxu0 0.0
  %1008 = vmatpush.msra.mxu0 0.0
  %1009 = vmatpush.msra.mxu0 %v991
  %1010 = vmatpush.msra.mxu0 %v990
  %1011 = vmatpush.msra.mxu0 %v989
  %1012 = vmatpush.msra.mxu0 %v988
  %1013 = vmatmul.f32.gmra.mxu0 %v267
  %v1014 = vpop.f32.mrf.mxu0
  %v1015 = vadd.f32 %v995, %v1014
  %1016 = vmatmul.f32.gmra.mxu0 %v270
  %v1017 = vpop.f32.mrf.mxu0
  %v1018 = vadd.f32 %v995, %v1017
  %1019 = vdwg.mxu0
  %v1021 = vsel %vm357, %v949, 0
  %v1024 = vsel %vm357, %v952, 0
  %v1027 = vsel %vm357, %v982, 0
  %v1030 = vsel %vm357, %v985, 0
  %1032 = vmatpush.xpose.msra.mxu0 0.0
  %1033 = vmatpush.xpose.msra.mxu0 0.0
  %1034 = vmatpush.xpose.msra.mxu0 0.0
  %1035 = vmatpush.xpose.msra.mxu0 0.0
  %1036 = vmatpush.xpose.msra.mxu0 0.0
  %1037 = vmatpush.xpose.msra.mxu0 0.0
  %1038 = vmatpush.xpose.msra.mxu0 0.0
  %1039 = vmatpush.xpose.msra.mxu0 0.0
  %1040 = vmatpush.xpose.msra.mxu0 0.0
  %1041 = vmatpush.xpose.msra.mxu0 0.0
  %1042 = vmatpush.xpose.msra.mxu0 0.0
  %1043 = vmatpush.xpose.msra.mxu0 0.0
  %1044 = vmatpush.xpose.msra.mxu0 0.0
  %1045 = vmatpush.xpose.msra.mxu0 0.0
  %1046 = vmatpush.xpose.msra.mxu0 %v1030
  %1047 = vmatpush.xpose.msra.mxu0 %v1027
  %1048 = vmatmul.f32.gmra.mxu0 %v1021
  %v1049 = vpop.f32.mrf.mxu0
  %v1050 = vadd.f32 0.0, %v1049
  %1051 = vmatmul.f32.gmra.mxu0 %v1024
  %v1052 = vpop.f32.mrf.mxu0
  %v1053 = vadd.f32 0.0, %v1052
  %1054 = vdwg.mxu0
  %v1055 = vmul.f32 %v1050, 0.35355338
  %v1056 = vmul.f32 %v1053, 0.35355338
  %v1057 = vsel %vm256, %v1055, -1e+30
  %v1058 = vsel %vm257, %v1056, -1e+30
  %v1059 = vsel %vm397, %v1057, -inf
  %1060 = vmax.xlane.f32.xlu0 %v1059
  %v1061 = vpop.xlane.xlu0 %1060
  %v1062 = vsel %vm397, %v1058, -inf
  %1063 = vmax.xlane.f32.xlu0 %v1062
  %v1064 = vpop.xlane.xlu0 %1063
  %v1065 = vsub.f32 %v1057, %v1061
  %v1066 = vsub.f32 %v1058, %v1064
  %v1067 = vmul.f32 %v1065, 1.442695
  %v1068 = vpow.pop %v1067
  %v1069 = vmul.f32 %v1066, 1.442695
  %v1070 = vpow.pop %v1069
  %v1071 = vsel %vm397, %v1068, 0.0
  %1072 = vadd.xlane.f32.xlu0 %v1071
  %v1073 = vpop.xlane.xlu0 %1072
  %v1074 = vsel %vm397, %v1070, 0.0
  %1075 = vadd.xlane.f32.xlu0 %v1074
  %v1076 = vpop.xlane.xlu0 %1075
  %v1077 = vrcp.pop %v1073
  %v1078 = vrcp.pop %v1076
  %v1079 = vmul.f32 %v1068, %v1077
  %v1080 = vmul.f32 %v1070, %v1078
  %v1082 = vsel %vm397, %v1079, 0
  %v1085 = vsel %vm397, %v1080, 0
  %1087 = vmatpush.msra.mxu0 0.0
  %1088 = vmatpush.msra.mxu0 0.0
  %1089 = vmatpush.msra.mxu0 0.0
  %1090 = vmatpush.msra.mxu0 0.0
  %1091 = vmatpush.msra.mxu0 0.0
  %1092 = vmatpush.msra.mxu0 0.0
  %1093 = vmatpush.msra.mxu0 0.0
  %1094 = vmatpush.msra.mxu0 0.0
  %1095 = vmatpush.msra.mxu0 0.0
  %1096 = vmatpush.msra.mxu0 0.0
  %1097 = vmatpush.msra.mxu0 0.0
  %1098 = vmatpush.msra.mxu0 0.0
  %1099 = vmatpush.msra.mxu0 0.0
  %1100 = vmatpush.msra.mxu0 0.0
  %1101 = vmatpush.msra.mxu0 %v1018
  %1102 = vmatpush.msra.mxu0 %v1015
  %1103 = vmatmul.f32.gmra.mxu0 %v1082
  %v1104 = vpop.f32.mrf.mxu0
  %v1105 = vadd.f32 0.0, %v1104
  %1106 = vmatmul.f32.gmra.mxu0 %v1085
  %v1107 = vpop.f32.mrf.mxu0
  %v1108 = vadd.f32 0.0, %v1107
  %1109 = vdwg.mxu0
  %s1110 = scalar_lea.vmem %s25, 24
  %v1111 = vld [vmem:[%s1110] sm:$0xff]
  %v1113 = vsel %vm357, %v1105, 0
  %v1116 = vsel %vm357, %v1108, 0
  %1118 = vmatpush.msra.mxu0 0.0
  %1119 = vmatpush.msra.mxu0 0.0
  %1120 = vmatpush.msra.mxu0 0.0
  %1121 = vmatpush.msra.mxu0 0.0
  %1122 = vmatpush.msra.mxu0 0.0
  %1123 = vmatpush.msra.mxu0 0.0
  %1124 = vmatpush.msra.mxu0 0.0
  %1125 = vmatpush.msra.mxu0 0.0
  %1126 = vmatpush.msra.mxu0 0.0
  %1127 = vmatpush.msra.mxu0 0.0
  %1128 = vmatpush.msra.mxu0 0.0
  %1129 = vmatpush.msra.mxu0 0.0
  %1130 = vmatpush.msra.mxu0 0.0
  %1131 = vmatpush.msra.mxu0 0.0
  %1132 = vmatpush.msra.mxu0 0.0
  %1133 = vmatpush.msra.mxu0 %v1111
  %1134 = vmatmul.f32.gmra.mxu0 %v1113
  %v1135 = vpop.f32.mrf.mxu0
  %v1136 = vadd.f32 0.0, %v1135
  %1137 = vmatmul.f32.gmra.mxu0 %v1116
  %v1138 = vpop.f32.mrf.mxu0
  %v1139 = vadd.f32 0.0, %v1138
  %1140 = vdwg.mxu0
  %v1141 = vadd.f32 %v919, %v1136
  %v1142 = vadd.f32 %v920, %v1139
  %v1143 = vadd.f32 %v185, %v1141
  %v1144 = vadd.f32 %v188, %v1142
  %v1145 = vld [vmem:[%s27] sm:$0x1]
  %v1147 = vperm.slane %v1145, 0
  %v1149 = vadd.f32 %v1143, %v1147
  %v1150 = vadd.f32 %v1144, %v1147
  %v1151 = vld [vmem:[%s29] sm:$0x1]
  %v1152 = vld [vmem:[%s31] sm:$0x1]
  %v1153 = vsel %vm192, %v1149, 0.0
  %1154 = vadd.xlane.f32.xlu0 %v1153
  %v1155 = vpop.xlane.xlu0 %1154
  %v1156 = vsel %vm192, %v1150, 0.0
  %1157 = vadd.xlane.f32.xlu0 %v1156
  %v1158 = vpop.xlane.xlu0 %1157
  %v1159 = vmul.f32 %v1155, %v205
  %v1160 = vmul.f32 %v1158, %v205
  %v1161 = vsub.f32 %v1149, %v1159
  %v1162 = vsub.f32 %v1150, %v1160
  %v1163 = vmul.f32 %v1161, %v1161
  %v1164 = vmul.f32 %v1162, %v1162
  %v1165 = vsel %vm192, %v1163, 0.0
  %1166 = vadd.xlane.f32.xlu0 %v1165
  %v1167 = vpop.xlane.xlu0 %1166
  %v1168 = vsel %vm192, %v1164, 0.0
  %1169 = vadd.xlane.f32.xlu0 %v1168
  %v1170 = vpop.xlane.xlu0 %1169
  %v1171 = vmul.f32 %v1167, %v205
  %v1172 = vmul.f32 %v1170, %v205
  %v1173 = vadd.f32 %v1171, 1e-05
  %v1174 = vadd.f32 %v1172, 1e-05
  %v1175 = vrsqrt.pop %v1173
  %v1176 = vmul.f32 %v1175, %v1173
  %v1177 = vmul.f32 %v1176, %v1175
  %v1178 = vmul.f32 0.5, %v1177
  %v1179 = vsub.f32 1.5, %v1178
  %v1180 = vmul.f32 %v1175, %v1179
  %vm1181 = vweird.f32 %v1173
  %vm1182 = vweird.f32 %v1175
  %vm1183 = vmor %vm1181, %vm1182
  %v1184 = vsel %vm1183, %v1175, %v1180
  %v1185 = vrsqrt.pop %v1174
  %v1186 = vmul.f32 %v1185, %v1174
  %v1187 = vmul.f32 %v1186, %v1185
  %v1188 = vmul.f32 0.5, %v1187
  %v1189 = vsub.f32 1.5, %v1188
  %v1190 = vmul.f32 %v1185, %v1189
  %vm1191 = vweird.f32 %v1174
  %vm1192 = vweird.f32 %v1185
  %vm1193 = vmor %vm1191, %vm1192
  %v1194 = vsel %vm1193, %v1185, %v1190
  %v1195 = vmul.f32 %v1161, %v1184
  %v1196 = vmul.f32 %v1162, %v1194
  %v1198 = vperm.slane %v1151, 0
  %v1200 = vmul.f32 %v1195, %v1198
  %v1201 = vmul.f32 %v1196, %v1198
  %v1203 = vperm.slane %v1152, 0
  %v1205 = vadd.f32 %v1200, %v1203
  %v1206 = vadd.f32 %v1201, %v1203
  %v1207 = vld [vmem:[%s33] sm:$0xff]
  %v1208 = vld [vmem:[%s33 + $0x8] sm:$0xff]
  %v1209 = vld [vmem:[%s33 + $0x10] sm:$0xff]
  %v1210 = vld [vmem:[%s33 + $0x18] sm:$0xff]
  %v1211 = vld [vmem:[%s35] sm:$0x1]
  %v1213 = vperm.slane %v1211, 0
  %v1216 = vsel %vm192, %v1205, 0
  %v1219 = vsel %vm192, %v1206, 0
  %1221 = vmatpush.msra.mxu0 0.0
  %1222 = vmatpush.msra.mxu0 0.0
  %1223 = vmatpush.msra.mxu0 0.0
  %1224 = vmatpush.msra.mxu0 0.0
  %1225 = vmatpush.msra.mxu0 0.0
  %1226 = vmatpush.msra.mxu0 0.0
  %1227 = vmatpush.msra.mxu0 0.0
  %1228 = vmatpush.msra.mxu0 0.0
  %1229 = vmatpush.msra.mxu0 0.0
  %1230 = vmatpush.msra.mxu0 0.0
  %1231 = vmatpush.msra.mxu0 0.0
  %1232 = vmatpush.msra.mxu0 0.0
  %1233 = vmatpush.msra.mxu0 %v1210
  %1234 = vmatpush.msra.mxu0 %v1209
  %1235 = vmatpush.msra.mxu0 %v1208
  %1236 = vmatpush.msra.mxu0 %v1207
  %1237 = vmatmul.f32.gmra.mxu0 %v1216
  %v1238 = vpop.f32.mrf.mxu0
  %v1239 = vadd.f32 %v1213, %v1238
  %1240 = vmatmul.f32.gmra.mxu0 %v1219
  %v1241 = vpop.f32.mrf.mxu0
  %v1242 = vadd.f32 %v1213, %v1241
  %1243 = vdwg.mxu0
  %v1244 = vmul.f32 %v1239, 0.5
  %v1245 = vmul.f32 %v1242, 0.5
  %v1246 = vmul.f32 %v1239, 0.70710677
  %v1247 = vmul.f32 %v1242, 0.70710677
  %vm1248 = vcmp.lt.f32.partialorder %v1246, 0.0
  %vm1249 = vcmp.lt.f32.partialorder %v1247, 0.0
  %v1250 = vsel %vm1248, -1.0, 1.0
  %v1251 = vsel %vm1249, -1.0, 1.0
  %v1252 = vand.u32 2147483647, %v1246
  %v1253 = vand.u32 2147483647, %v1247
  %v1254 = vmul.f32 %v1252, 0.3275911
  %v1255 = vmul.f32 %v1253, 0.3275911
  %v1256 = vadd.f32 %v1254, 1.0
  %v1257 = vadd.f32 %v1255, 1.0
  %v1258 = vrcp.pop %v1256
  %v1259 = vmul.f32 %v1256, %v1258
  %v1260 = vsub.f32 1.0, %v1259
  %v1261 = vmul.f32 %v1258, %v1260
  %v1262 = vadd.f32 %v1258, %v1261
  %vm1263 = vweird.f32 %v1256
  %vm1264 = vweird.f32 %v1258
  %vm1265 = vmor %vm1263, %vm1264
  %v1266 = vsel %vm1265, %v1258, %v1262
  %v1267 = vand.u32 2147483647, %v1256
  %vm1268 = vcmp.eq.f32.partialorder %v1267, 8.507059e+37
  %v1269 = vand.u32 %v1256, 2147483648
  %v1270 = vor.u32 1.1754944e-38, %v1269
  %v1271 = vsel %vm1268, %v1270, %v1266
  %v1272 = vmul.f32 1.0, %v1271
  %v1273 = vrcp.pop %v1257
  %v1274 = vmul.f32 %v1257, %v1273
  %v1275 = vsub.f32 1.0, %v1274
  %v1276 = vmul.f32 %v1273, %v1275
  %v1277 = vadd.f32 %v1273, %v1276
  %vm1278 = vweird.f32 %v1257
  %vm1279 = vweird.f32 %v1273
  %vm1280 = vmor %vm1278, %vm1279
  %v1281 = vsel %vm1280, %v1273, %v1277
  %v1282 = vand.u32 2147483647, %v1257
  %vm1283 = vcmp.eq.f32.partialorder %v1282, 8.507059e+37
  %v1284 = vand.u32 %v1257, 2147483648
  %v1285 = vor.u32 1.1754944e-38, %v1284
  %v1286 = vsel %vm1283, %v1285, %v1281
  %v1287 = vmul.f32 1.0, %v1286
  %v1288 = vmul.f32 %v1272, 1.0614054
  %v1289 = vmul.f32 %v1287, 1.0614054
  %v1290 = vadd.f32 %v1288, -1.4531521
  %v1291 = vadd.f32 %v1289, -1.4531521
  %v1292 = vmul.f32 %v1290, %v1272
  %v1293 = vmul.f32 %v1291, %v1287
  %v1294 = vadd.f32 %v1292, 1.4214138
  %v1295 = vadd.f32 %v1293, 1.4214138
  %v1296 = vmul.f32 %v1294, %v1272
  %v1297 = vmul.f32 %v1295, %v1287
  %v1298 = vadd.f32 %v1296, -0.28449672
  %v1299 = vadd.f32 %v1297, -0.28449672
  %v1300 = vmul.f32 %v1298, %v1272
  %v1301 = vmul.f32 %v1299, %v1287
  %v1302 = vadd.f32 %v1300, 0.2548296
  %v1303 = vadd.f32 %v1301, 0.2548296
  %v1304 = vmul.f32 %v1302, %v1272
  %v1305 = vmul.f32 %v1303, %v1287
  %v1306 = vsub.f32 0.0, %v1252
  %v1307 = vsub.f32 0.0, %v1253
  %v1308 = vmul.f32 %v1306, %v1252
  %v1309 = vmul.f32 %v1307, %v1253
  %v1310 = vmul.f32 %v1308, 1.442695
  %v1311 = vpow.pop %v1310
  %v1312 = vmul.f32 %v1309, 1.442695
  %v1313 = vpow.pop %v1312
  %v1314 = vmul.f32 %v1304, %v1311
  %v1315 = vmul.f32 %v1305, %v1313
  %v1316 = vsub.f32 1.0, %v1314
  %v1317 = vsub.f32 1.0, %v1315
  %v1318 = vmul.f32 %v1250, %v1316
  %v1319 = vmul.f32 %v1251, %v1317
  %v1320 = vadd.f32 %v1318, 1.0
  %v1321 = vadd.f32 %v1319, 1.0
  %v1322 = vmul.f32 %v1244, %v1320
  %v1323 = vmul.f32 %v1245, %v1321
  %v1324 = vld [vmem:[%s37] sm:$0xff]
  %v1325 = vld [vmem:[%s37 + $0x8] sm:$0xff]
  %v1326 = vld [vmem:[%s37 + $0x10] sm:$0xff]
  %v1327 = vld [vmem:[%s37 + $0x18] sm:$0xff]
  %v1328 = vld [vmem:[%s37 + $0x20] sm:$0xff]
  %v1329 = vld [vmem:[%s37 + $0x28] sm:$0xff]
  %v1330 = vld [vmem:[%s37 + $0x30] sm:$0xff]
  %v1331 = vld [vmem:[%s37 + $0x38] sm:$0xff]
  %v1332 = vld [vmem:[%s37 + $0x40] sm:$0xff]
  %v1333 = vld [vmem:[%s37 + $0x48] sm:$0xff]
  %v1334 = vld [vmem:[%s37 + $0x50] sm:$0xff]
  %v1335 = vld [vmem:[%s37 + $0x58] sm:$0xff]
  %v1336 = vld [vmem:[%s37 + $0x60] sm:$0xff]
  %v1337 = vld [vmem:[%s37 + $0x68] sm:$0xff]
  %v1338 = vld [vmem:[%s37 + $0x70] sm:$0xff]
  %v1339 = vld [vmem:[%s37 + $0x78] sm:$0xff]
  %1340 = vmatpush.msra.mxu0 %v1339
  %1341 = vmatpush.msra.mxu0 %v1338
  %1342 = vmatpush.msra.mxu0 %v1337
  %1343 = vmatpush.msra.mxu0 %v1336
  %1344 = vmatpush.msra.mxu0 %v1335
  %1345 = vmatpush.msra.mxu0 %v1334
  %1346 = vmatpush.msra.mxu0 %v1333
  %1347 = vmatpush.msra.mxu0 %v1332
  %1348 = vmatpush.msra.mxu0 %v1331
  %1349 = vmatpush.msra.mxu0 %v1330
  %1350 = vmatpush.msra.mxu0 %v1329
  %1351 = vmatpush.msra.mxu0 %v1328
  %1352 = vmatpush.msra.mxu0 %v1327
  %1353 = vmatpush.msra.mxu0 %v1326
  %1354 = vmatpush.msra.mxu0 %v1325
  %1355 = vmatpush.msra.mxu0 %v1324
  %1356 = vmatmul.f32.gmra.mxu0 %v1322
  %v1357 = vpop.f32.mrf.mxu0
  %v1358 = vadd.f32 0.0, %v1357
  %1359 = vmatmul.f32.gmra.mxu0 %v1323
  %v1360 = vpop.f32.mrf.mxu0
  %v1361 = vadd.f32 0.0, %v1360
  %1362 = vdwg.mxu0
  %v1363 = vadd.f32 %v1149, %v1358
  %v1364 = vadd.f32 %v1150, %v1361
  %v1365 = vld [vmem:[%s39] sm:$0x1]
  %v1367 = vperm.slane %v1365, 0
  %v1369 = vadd.f32 %v1363, %v1367
  %v1370 = vadd.f32 %v1364, %v1367
  %v1371 = vld [vmem:[%s41] sm:$0x1]
  %v1372 = vld [vmem:[%s43] sm:$0x1]
  %v1373 = vsel %vm192, %v1369, 0.0
  %1374 = vadd.xlane.f32.xlu0 %v1373
  %v1375 = vpop.xlane.xlu0 %1374
  %v1376 = vsel %vm192, %v1370, 0.0
  %1377 = vadd.xlane.f32.xlu0 %v1376
  %v1378 = vpop.xlane.xlu0 %1377
  %v1379 = vmul.f32 %v1375, %v205
  %v1380 = vmul.f32 %v1378, %v205
  %v1381 = vsub.f32 %v1369, %v1379
  %v1382 = vsub.f32 %v1370, %v1380
  %v1383 = vmul.f32 %v1381, %v1381
  %v1384 = vmul.f32 %v1382, %v1382
  %v1385 = vsel %vm192, %v1383, 0.0
  %1386 = vadd.xlane.f32.xlu0 %v1385
  %v1387 = vpop.xlane.xlu0 %1386
  %v1388 = vsel %vm192, %v1384, 0.0
  %1389 = vadd.xlane.f32.xlu0 %v1388
  %v1390 = vpop.xlane.xlu0 %1389
  %v1391 = vmul.f32 %v1387, %v205
  %v1392 = vmul.f32 %v1390, %v205
  %v1393 = vadd.f32 %v1391, 1e-05
  %v1394 = vadd.f32 %v1392, 1e-05
  %v1395 = vrsqrt.pop %v1393
  %v1396 = vmul.f32 %v1395, %v1393
  %v1397 = vmul.f32 %v1396, %v1395
  %v1398 = vmul.f32 0.5, %v1397
  %v1399 = vsub.f32 1.5, %v1398
  %v1400 = vmul.f32 %v1395, %v1399
  %vm1401 = vweird.f32 %v1393
  %vm1402 = vweird.f32 %v1395
  %vm1403 = vmor %vm1401, %vm1402
  %v1404 = vsel %vm1403, %v1395, %v1400
  %v1405 = vrsqrt.pop %v1394
  %v1406 = vmul.f32 %v1405, %v1394
  %v1407 = vmul.f32 %v1406, %v1405
  %v1408 = vmul.f32 0.5, %v1407
  %v1409 = vsub.f32 1.5, %v1408
  %v1410 = vmul.f32 %v1405, %v1409
  %vm1411 = vweird.f32 %v1394
  %vm1412 = vweird.f32 %v1405
  %vm1413 = vmor %vm1411, %vm1412
  %v1414 = vsel %vm1413, %v1405, %v1410
  %v1415 = vmul.f32 %v1381, %v1404
  %v1416 = vmul.f32 %v1382, %v1414
  %v1418 = vperm.slane %v1371, 0
  %v1420 = vmul.f32 %v1415, %v1418
  %v1421 = vmul.f32 %v1416, %v1418
  %v1423 = vperm.slane %v1372, 0
  %v1425 = vadd.f32 %v1420, %v1423
  %v1426 = vadd.f32 %v1421, %v1423
  %v1427 = vld [vmem:[%s45] sm:$0xff]
  %v1428 = vld [vmem:[%s45 + $0x8] sm:$0xff]
  %v1429 = vld [vmem:[%s45 + $0x10] sm:$0xff]
  %v1430 = vld [vmem:[%s45 + $0x18] sm:$0xff]
  %v1431 = vld [vmem:[%s47] sm:$0x1]
  %v1433 = vperm.slane %v1431, 0
  %v1436 = vsel %vm192, %v1425, 0
  %v1439 = vsel %vm192, %v1426, 0
  %1441 = vmatpush.msra.mxu0 0.0
  %1442 = vmatpush.msra.mxu0 0.0
  %1443 = vmatpush.msra.mxu0 0.0
  %1444 = vmatpush.msra.mxu0 0.0
  %1445 = vmatpush.msra.mxu0 0.0
  %1446 = vmatpush.msra.mxu0 0.0
  %1447 = vmatpush.msra.mxu0 0.0
  %1448 = vmatpush.msra.mxu0 0.0
  %1449 = vmatpush.msra.mxu0 0.0
  %1450 = vmatpush.msra.mxu0 0.0
  %1451 = vmatpush.msra.mxu0 0.0
  %1452 = vmatpush.msra.mxu0 0.0
  %1453 = vmatpush.msra.mxu0 %v1430
  %1454 = vmatpush.msra.mxu0 %v1429
  %1455 = vmatpush.msra.mxu0 %v1428
  %1456 = vmatpush.msra.mxu0 %v1427
  %1457 = vmatmul.f32.gmra.mxu0 %v1436
  %v1458 = vpop.f32.mrf.mxu0
  %v1459 = vadd.f32 %v1433, %v1458
  %1460 = vmatmul.f32.gmra.mxu0 %v1439
  %v1461 = vpop.f32.mrf.mxu0
  %v1462 = vadd.f32 %v1433, %v1461
  %1463 = vdwg.mxu0
  %vm1464 = vcmask 31744
  %v1465 = vsel %vm1464, %v1459, -inf
  %v1466 = vsel %vm1464, %v1462, -inf
  %v1467 = vmax.f32 %v1465, %v1466
  %v1468 = vrot.slane %v1467, 4
  %v1469 = vmax.f32 %v1467, %v1468
  %v1470 = vrot.slane %v1469, 2
  %v1471 = vmax.f32 %v1469, %v1470
  %v1472 = vrot.slane %v1471, 1
  %v1473 = vmax.f32 %v1471, %v1472
  %v1474 = vsub.f32 %v1459, %v1473
  %v1475 = vsub.f32 %v1462, %v1473
  %v1476 = vmul.f32 %v1474, 1.442695
  %v1477 = vpow.pop %v1476
  %v1478 = vmul.f32 %v1475, 1.442695
  %v1479 = vpow.pop %v1478
  %v1480 = vsel %vm1464, %v1477, 0.0
  %v1481 = vsel %vm1464, %v1479, 0.0
  %v1482 = vadd.f32 %v1480, %v1481
  %v1483 = vrot.slane %v1482, 4
  %v1484 = vadd.f32 %v1482, %v1483
  %v1485 = vrot.slane %v1484, 2
  %v1486 = vadd.f32 %v1484, %v1485
  %v1487 = vrot.slane %v1486, 1
  %v1488 = vadd.f32 %v1486, %v1487
  %v1489 = vrcp.pop %v1488
  %v1490 = vmul.f32 %v1477, %v1489
  %v1491 = vmul.f32 %v1479, %v1489
  %1492 = vst.msk [vmem:[%s63] sm:$0xff] %vm1464, %v1490
  %1493 = vst.msk [vmem:[%s63 + $0x8] sm:$0xff] %vm1464, %v1491
  %v1494 = vlaneseq
  %v1495 = vshrl.u32 %v1494, 7
  %v1496 = vadd.s32 %v1495, 8
  %v1497 = vcvt.s32.f32 %v1495
  %v1498 = vcvt.s32.f32 %v1496
  %v1499 = vsel %vm1464, %v1490, -inf
  %v1500 = vsel %vm1464, %v1491, -inf
  %v1501 = vmax.f32 %v1499, %v1500
  %v1502 = vrot.slane %v1501, 4
  %v1503 = vmax.f32 %v1501, %v1502
  %v1504 = vrot.slane %v1503, 2
  %v1505 = vmax.f32 %v1503, %v1504
  %v1506 = vrot.slane %v1505, 1
  %v1507 = vmax.f32 %v1505, %v1506
  %vm1508 = vcmp.ge.f32.partialorder %v1490, %v1507
  %vm1509 = vcmp.ge.f32.partialorder %v1491, %v1507
  %v1510 = vsel %vm1508, %v1497, 16.0
  %v1511 = vsel %vm1509, %v1498, 16.0
  %v1512 = vsel %vm1464, %v1510, inf
  %v1513 = vsel %vm1464, %v1511, inf
  %v1514 = vmin.f32 %v1512, %v1513
  %v1515 = vrot.slane %v1514, 4
  %v1516 = vmin.f32 %v1514, %v1515
  %v1517 = vrot.slane %v1516, 2
  %v1518 = vmin.f32 %v1516, %v1517
  %v1519 = vrot.slane %v1518, 1
  %v1520 = vmin.f32 %v1518, %v1519
  %v1521 = vcvt.f32.s32.to.zero.pseudo %v1520
  %vm1522 = vcmp.eq.s32.totalorder %v1495, %v1521
  %vm1523 = vcmp.eq.s32.totalorder %v1496, %v1521
  %vm1524 = vcmask 24576
  %1525 = vst.msk [vmem:[%s65] sm:$0x1] %vm1524, %v1507
  %1526 = vst.msk [vmem:[%s67] sm:$0x1] %vm1524, %v1521
  %v1527 = vsel %vm1522, 1, 0
  %v1528 = vsel %vm1523, 1, 0
  %v1529 = vcvt.s32.f32 %v1527
  %v1530 = vcvt.s32.f32 %v1528
  %v1531 = vadd.f32 %v1529, 0.0
  %v1532 = vadd.f32 %v1530, 0.0
  %v1533 = vsel %vm1522, -1.0, %v1490
  %v1534 = vsel %vm1523, -1.0, %v1491
  %v1535 = vsel %vm1464, %v1533, -inf
  %v1536 = vsel %vm1464, %v1534, -inf
  %v1537 = vmax.f32 %v1535, %v1536
  %v1538 = vrot.slane %v1537, 4
  %v1539 = vmax.f32 %v1537, %v1538
  %v1540 = vrot.slane %v1539, 2
  %v1541 = vmax.f32 %v1539, %v1540
  %v1542 = vrot.slane %v1541, 1
  %v1543 = vmax.f32 %v1541, %v1542
  %vm1544 = vcmp.ge.f32.partialorder %v1533, %v1543
  %vm1545 = vcmp.ge.f32.partialorder %v1534, %v1543
  %v1546 = vsel %vm1544, %v1497, 16.0
  %v1547 = vsel %vm1545, %v1498, 16.0
  %v1548 = vsel %vm1464, %v1546, inf
  %v1549 = vsel %vm1464, %v1547, inf
  %v1550 = vmin.f32 %v1548, %v1549
  %v1551 = vrot.slane %v1550, 4
  %v1552 = vmin.f32 %v1550, %v1551
  %v1553 = vrot.slane %v1552, 2
  %v1554 = vmin.f32 %v1552, %v1553
  %v1555 = vrot.slane %v1554, 1
  %v1556 = vmin.f32 %v1554, %v1555
  %v1557 = vcvt.f32.s32.to.zero.pseudo %v1556
  %vm1558 = vcmp.eq.s32.totalorder %v1495, %v1557
  %vm1559 = vcmp.eq.s32.totalorder %v1496, %v1557
  %1560 = vst.msk [vmem:[%s65 + $0x1] sm:$0x1] %vm1524, %v1543
  %1561 = vst.msk [vmem:[%s67 + $0x1] sm:$0x1] %vm1524, %v1557
  %v1562 = vsel %vm1558, 1, 0
  %v1563 = vsel %vm1559, 1, 0
  %v1564 = vcvt.s32.f32 %v1562
  %v1565 = vcvt.s32.f32 %v1563
  %v1566 = vadd.f32 %v1531, %v1564
  %v1567 = vadd.f32 %v1532, %v1565
  %v1568 = vsel %vm1558, -1.0, %v1533
  %v1569 = vsel %vm1559, -1.0, %v1534
  %v1570 = vsel %vm1464, %v1568, -inf
  %v1571 = vsel %vm1464, %v1569, -inf
  %v1572 = vmax.f32 %v1570, %v1571
  %v1573 = vrot.slane %v1572, 4
  %v1574 = vmax.f32 %v1572, %v1573
  %v1575 = vrot.slane %v1574, 2
  %v1576 = vmax.f32 %v1574, %v1575
  %v1577 = vrot.slane %v1576, 1
  %v1578 = vmax.f32 %v1576, %v1577
  %vm1579 = vcmp.ge.f32.partialorder %v1568, %v1578
  %vm1580 = vcmp.ge.f32.partialorder %v1569, %v1578
  %v1581 = vsel %vm1579, %v1497, 16.0
  %v1582 = vsel %vm1580, %v1498, 16.0
  %v1583 = vsel %vm1464, %v1581, inf
  %v1584 = vsel %vm1464, %v1582, inf
  %v1585 = vmin.f32 %v1583, %v1584
  %v1586 = vrot.slane %v1585, 4
  %v1587 = vmin.f32 %v1585, %v1586
  %v1588 = vrot.slane %v1587, 2
  %v1589 = vmin.f32 %v1587, %v1588
  %v1590 = vrot.slane %v1589, 1
  %v1591 = vmin.f32 %v1589, %v1590
  %v1592 = vcvt.f32.s32.to.zero.pseudo %v1591
  %vm1593 = vcmp.eq.s32.totalorder %v1495, %v1592
  %vm1594 = vcmp.eq.s32.totalorder %v1496, %v1592
  %1595 = vst.msk [vmem:[%s65 + $0x2] sm:$0x1] %vm1524, %v1578
  %1596 = vst.msk [vmem:[%s67 + $0x2] sm:$0x1] %vm1524, %v1592
  %v1597 = vsel %vm1593, 1, 0
  %v1598 = vsel %vm1594, 1, 0
  %v1599 = vcvt.s32.f32 %v1597
  %v1600 = vcvt.s32.f32 %v1598
  %v1601 = vadd.f32 %v1566, %v1599
  %v1602 = vadd.f32 %v1567, %v1600
  %v1603 = vsel %vm1593, -1.0, %v1568
  %v1604 = vsel %vm1594, -1.0, %v1569
  %v1605 = vsel %vm1464, %v1603, -inf
  %v1606 = vsel %vm1464, %v1604, -inf
  %v1607 = vmax.f32 %v1605, %v1606
  %v1608 = vrot.slane %v1607, 4
  %v1609 = vmax.f32 %v1607, %v1608
  %v1610 = vrot.slane %v1609, 2
  %v1611 = vmax.f32 %v1609, %v1610
  %v1612 = vrot.slane %v1611, 1
  %v1613 = vmax.f32 %v1611, %v1612
  %vm1614 = vcmp.ge.f32.partialorder %v1603, %v1613
  %vm1615 = vcmp.ge.f32.partialorder %v1604, %v1613
  %v1616 = vsel %vm1614, %v1497, 16.0
  %v1617 = vsel %vm1615, %v1498, 16.0
  %v1618 = vsel %vm1464, %v1616, inf
  %v1619 = vsel %vm1464, %v1617, inf
  %v1620 = vmin.f32 %v1618, %v1619
  %v1621 = vrot.slane %v1620, 4
  %v1622 = vmin.f32 %v1620, %v1621
  %v1623 = vrot.slane %v1622, 2
  %v1624 = vmin.f32 %v1622, %v1623
  %v1625 = vrot.slane %v1624, 1
  %v1626 = vmin.f32 %v1624, %v1625
  %v1627 = vcvt.f32.s32.to.zero.pseudo %v1626
  %vm1628 = vcmp.eq.s32.totalorder %v1495, %v1627
  %vm1629 = vcmp.eq.s32.totalorder %v1496, %v1627
  %1630 = vst.msk [vmem:[%s65 + $0x3] sm:$0x1] %vm1524, %v1613
  %1631 = vst.msk [vmem:[%s67 + $0x3] sm:$0x1] %vm1524, %v1627
  %v1632 = vsel %vm1628, 1, 0
  %v1633 = vsel %vm1629, 1, 0
  %v1634 = vcvt.s32.f32 %v1632
  %v1635 = vcvt.s32.f32 %v1633
  %v1636 = vadd.f32 %v1601, %v1634
  %v1637 = vadd.f32 %v1602, %v1635
  %v1638 = vsel %vm1628, -1.0, %v1603
  %v1639 = vsel %vm1629, -1.0, %v1604
  %v1640 = vsel %vm1464, %v1638, -inf
  %v1641 = vsel %vm1464, %v1639, -inf
  %v1642 = vmax.f32 %v1640, %v1641
  %v1643 = vrot.slane %v1642, 4
  %v1644 = vmax.f32 %v1642, %v1643
  %v1645 = vrot.slane %v1644, 2
  %v1646 = vmax.f32 %v1644, %v1645
  %v1647 = vrot.slane %v1646, 1
  %v1648 = vmax.f32 %v1646, %v1647
  %vm1649 = vcmp.ge.f32.partialorder %v1638, %v1648
  %vm1650 = vcmp.ge.f32.partialorder %v1639, %v1648
  %v1651 = vsel %vm1649, %v1497, 16.0
  %v1652 = vsel %vm1650, %v1498, 16.0
  %v1653 = vsel %vm1464, %v1651, inf
  %v1654 = vsel %vm1464, %v1652, inf
  %v1655 = vmin.f32 %v1653, %v1654
  %v1656 = vrot.slane %v1655, 4
  %v1657 = vmin.f32 %v1655, %v1656
  %v1658 = vrot.slane %v1657, 2
  %v1659 = vmin.f32 %v1657, %v1658
  %v1660 = vrot.slane %v1659, 1
  %v1661 = vmin.f32 %v1659, %v1660
  %v1662 = vcvt.f32.s32.to.zero.pseudo %v1661
  %vm1663 = vcmp.eq.s32.totalorder %v1495, %v1662
  %vm1664 = vcmp.eq.s32.totalorder %v1496, %v1662
  %1665 = vst.msk [vmem:[%s65 + $0x4] sm:$0x1] %vm1524, %v1648
  %1666 = vst.msk [vmem:[%s67 + $0x4] sm:$0x1] %vm1524, %v1662
  %v1667 = vsel %vm1663, 1, 0
  %v1668 = vsel %vm1664, 1, 0
  %v1669 = vcvt.s32.f32 %v1667
  %v1670 = vcvt.s32.f32 %v1668
  %v1671 = vadd.f32 %v1636, %v1669
  %v1672 = vadd.f32 %v1637, %v1670
  %v1673 = vsel %vm1663, -1.0, %v1638
  %v1674 = vsel %vm1664, -1.0, %v1639
  %v1675 = vsel %vm1464, %v1673, -inf
  %v1676 = vsel %vm1464, %v1674, -inf
  %v1677 = vmax.f32 %v1675, %v1676
  %v1678 = vrot.slane %v1677, 4
  %v1679 = vmax.f32 %v1677, %v1678
  %v1680 = vrot.slane %v1679, 2
  %v1681 = vmax.f32 %v1679, %v1680
  %v1682 = vrot.slane %v1681, 1
  %v1683 = vmax.f32 %v1681, %v1682
  %vm1684 = vcmp.ge.f32.partialorder %v1673, %v1683
  %vm1685 = vcmp.ge.f32.partialorder %v1674, %v1683
  %v1686 = vsel %vm1684, %v1497, 16.0
  %v1687 = vsel %vm1685, %v1498, 16.0
  %v1688 = vsel %vm1464, %v1686, inf
  %v1689 = vsel %vm1464, %v1687, inf
  %v1690 = vmin.f32 %v1688, %v1689
  %v1691 = vrot.slane %v1690, 4
  %v1692 = vmin.f32 %v1690, %v1691
  %v1693 = vrot.slane %v1692, 2
  %v1694 = vmin.f32 %v1692, %v1693
  %v1695 = vrot.slane %v1694, 1
  %v1696 = vmin.f32 %v1694, %v1695
  %v1697 = vcvt.f32.s32.to.zero.pseudo %v1696
  %vm1698 = vcmp.eq.s32.totalorder %v1495, %v1697
  %vm1699 = vcmp.eq.s32.totalorder %v1496, %v1697
  %1700 = vst.msk [vmem:[%s65 + $0x5] sm:$0x1] %vm1524, %v1683
  %1701 = vst.msk [vmem:[%s67 + $0x5] sm:$0x1] %vm1524, %v1697
  %v1702 = vsel %vm1698, 1, 0
  %v1703 = vsel %vm1699, 1, 0
  %v1704 = vcvt.s32.f32 %v1702
  %v1705 = vcvt.s32.f32 %v1703
  %v1706 = vadd.f32 %v1671, %v1704
  %v1707 = vadd.f32 %v1672, %v1705
  %v1708 = vsel %vm1698, -1.0, %v1673
  %v1709 = vsel %vm1699, -1.0, %v1674
  %v1710 = vsel %vm1464, %v1708, -inf
  %v1711 = vsel %vm1464, %v1709, -inf
  %v1712 = vmax.f32 %v1710, %v1711
  %v1713 = vrot.slane %v1712, 4
  %v1714 = vmax.f32 %v1712, %v1713
  %v1715 = vrot.slane %v1714, 2
  %v1716 = vmax.f32 %v1714, %v1715
  %v1717 = vrot.slane %v1716, 1
  %v1718 = vmax.f32 %v1716, %v1717
  %vm1719 = vcmp.ge.f32.partialorder %v1708, %v1718
  %vm1720 = vcmp.ge.f32.partialorder %v1709, %v1718
  %v1721 = vsel %vm1719, %v1497, 16.0
  %v1722 = vsel %vm1720, %v1498, 16.0
  %v1723 = vsel %vm1464, %v1721, inf
  %v1724 = vsel %vm1464, %v1722, inf
  %v1725 = vmin.f32 %v1723, %v1724
  %v1726 = vrot.slane %v1725, 4
  %v1727 = vmin.f32 %v1725, %v1726
  %v1728 = vrot.slane %v1727, 2
  %v1729 = vmin.f32 %v1727, %v1728
  %v1730 = vrot.slane %v1729, 1
  %v1731 = vmin.f32 %v1729, %v1730
  %v1732 = vcvt.f32.s32.to.zero.pseudo %v1731
  %vm1733 = vcmp.eq.s32.totalorder %v1495, %v1732
  %vm1734 = vcmp.eq.s32.totalorder %v1496, %v1732
  %1735 = vst.msk [vmem:[%s65 + $0x6] sm:$0x1] %vm1524, %v1718
  %1736 = vst.msk [vmem:[%s67 + $0x6] sm:$0x1] %vm1524, %v1732
  %v1737 = vsel %vm1733, 1, 0
  %v1738 = vsel %vm1734, 1, 0
  %v1739 = vcvt.s32.f32 %v1737
  %v1740 = vcvt.s32.f32 %v1738
  %v1741 = vadd.f32 %v1706, %v1739
  %v1742 = vadd.f32 %v1707, %v1740
  %v1743 = vsel %vm1733, -1.0, %v1708
  %v1744 = vsel %vm1734, -1.0, %v1709
  %v1745 = vsel %vm1464, %v1743, -inf
  %v1746 = vsel %vm1464, %v1744, -inf
  %v1747 = vmax.f32 %v1745, %v1746
  %v1748 = vrot.slane %v1747, 4
  %v1749 = vmax.f32 %v1747, %v1748
  %v1750 = vrot.slane %v1749, 2
  %v1751 = vmax.f32 %v1749, %v1750
  %v1752 = vrot.slane %v1751, 1
  %v1753 = vmax.f32 %v1751, %v1752
  %vm1754 = vcmp.ge.f32.partialorder %v1743, %v1753
  %vm1755 = vcmp.ge.f32.partialorder %v1744, %v1753
  %v1756 = vsel %vm1754, %v1497, 16.0
  %v1757 = vsel %vm1755, %v1498, 16.0
  %v1758 = vsel %vm1464, %v1756, inf
  %v1759 = vsel %vm1464, %v1757, inf
  %v1760 = vmin.f32 %v1758, %v1759
  %v1761 = vrot.slane %v1760, 4
  %v1762 = vmin.f32 %v1760, %v1761
  %v1763 = vrot.slane %v1762, 2
  %v1764 = vmin.f32 %v1762, %v1763
  %v1765 = vrot.slane %v1764, 1
  %v1766 = vmin.f32 %v1764, %v1765
  %v1767 = vcvt.f32.s32.to.zero.pseudo %v1766
  %vm1768 = vcmp.eq.s32.totalorder %v1495, %v1767
  %vm1769 = vcmp.eq.s32.totalorder %v1496, %v1767
  %1770 = vst.msk [vmem:[%s65 + $0x7] sm:$0x1] %vm1524, %v1753
  %1771 = vst.msk [vmem:[%s67 + $0x7] sm:$0x1] %vm1524, %v1767
  %v1772 = vsel %vm1768, 1, 0
  %v1773 = vsel %vm1769, 1, 0
  %v1774 = vcvt.s32.f32 %v1772
  %v1775 = vcvt.s32.f32 %v1773
  %v1776 = vadd.f32 %v1741, %v1774
  %v1777 = vadd.f32 %v1742, %v1775
  %v1778 = vmul.f32 %v1490, %v1776
  %v1779 = vmul.f32 %v1491, %v1777
  %v1780 = vld [vmem:[%s49] sm:$0xff]
  %v1781 = vld [vmem:[%s49 + $0x8] sm:$0xff]
  %v1782 = vld [vmem:[%s49 + $0x10] sm:$0xff]
  %v1783 = vld [vmem:[%s49 + $0x18] sm:$0xff]
  %v1784 = vld [vmem:[%s51] sm:$0x1]
  %v1786 = vperm.slane %v1784, 0
  %1788 = vmatpush.msra.mxu0 0.0
  %1789 = vmatpush.msra.mxu0 0.0
  %1790 = vmatpush.msra.mxu0 0.0
  %1791 = vmatpush.msra.mxu0 0.0
  %1792 = vmatpush.msra.mxu0 0.0
  %1793 = vmatpush.msra.mxu0 0.0
  %1794 = vmatpush.msra.mxu0 0.0
  %1795 = vmatpush.msra.mxu0 0.0
  %1796 = vmatpush.msra.mxu0 0.0
  %1797 = vmatpush.msra.mxu0 0.0
  %1798 = vmatpush.msra.mxu0 0.0
  %1799 = vmatpush.msra.mxu0 0.0
  %1800 = vmatpush.msra.mxu0 %v1783
  %1801 = vmatpush.msra.mxu0 %v1782
  %1802 = vmatpush.msra.mxu0 %v1781
  %1803 = vmatpush.msra.mxu0 %v1780
  %1804 = vmatmul.f32.gmra.mxu0 %v1436
  %v1805 = vpop.f32.mrf.mxu0
  %v1806 = vadd.f32 %v1786, %v1805
  %1807 = vmatmul.f32.gmra.mxu0 %v1439
  %v1808 = vpop.f32.mrf.mxu0
  %v1809 = vadd.f32 %v1786, %v1808
  %1810 = vdwg.mxu0
  %v1811 = vmul.f32 %v1806, 0.5
  %v1812 = vmul.f32 %v1809, 0.5
  %v1813 = vmul.f32 %v1806, 0.70710677
  %v1814 = vmul.f32 %v1809, 0.70710677
  %vm1815 = vcmp.lt.f32.partialorder %v1813, 0.0
  %vm1816 = vcmp.lt.f32.partialorder %v1814, 0.0
  %v1817 = vsel %vm1815, -1.0, 1.0
  %v1818 = vsel %vm1816, -1.0, 1.0
  %v1819 = vand.u32 2147483647, %v1813
  %v1820 = vand.u32 2147483647, %v1814
  %v1821 = vmul.f32 %v1819, 0.3275911
  %v1822 = vmul.f32 %v1820, 0.3275911
  %v1823 = vadd.f32 %v1821, 1.0
  %v1824 = vadd.f32 %v1822, 1.0
  %v1825 = vrcp.pop %v1823
  %v1826 = vmul.f32 %v1823, %v1825
  %v1827 = vsub.f32 1.0, %v1826
  %v1828 = vmul.f32 %v1825, %v1827
  %v1829 = vadd.f32 %v1825, %v1828
  %vm1830 = vweird.f32 %v1823
  %vm1831 = vweird.f32 %v1825
  %vm1832 = vmor %vm1830, %vm1831
  %v1833 = vsel %vm1832, %v1825, %v1829
  %v1834 = vand.u32 2147483647, %v1823
  %vm1835 = vcmp.eq.f32.partialorder %v1834, 8.507059e+37
  %v1836 = vand.u32 %v1823, 2147483648
  %v1837 = vor.u32 1.1754944e-38, %v1836
  %v1838 = vsel %vm1835, %v1837, %v1833
  %v1839 = vmul.f32 1.0, %v1838
  %v1840 = vrcp.pop %v1824
  %v1841 = vmul.f32 %v1824, %v1840
  %v1842 = vsub.f32 1.0, %v1841
  %v1843 = vmul.f32 %v1840, %v1842
  %v1844 = vadd.f32 %v1840, %v1843
  %vm1845 = vweird.f32 %v1824
  %vm1846 = vweird.f32 %v1840
  %vm1847 = vmor %vm1845, %vm1846
  %v1848 = vsel %vm1847, %v1840, %v1844
  %v1849 = vand.u32 2147483647, %v1824
  %vm1850 = vcmp.eq.f32.partialorder %v1849, 8.507059e+37
  %v1851 = vand.u32 %v1824, 2147483648
  %v1852 = vor.u32 1.1754944e-38, %v1851
  %v1853 = vsel %vm1850, %v1852, %v1848
  %v1854 = vmul.f32 1.0, %v1853
  %v1855 = vmul.f32 %v1839, 1.0614054
  %v1856 = vmul.f32 %v1854, 1.0614054
  %v1857 = vadd.f32 %v1855, -1.4531521
  %v1858 = vadd.f32 %v1856, -1.4531521
  %v1859 = vmul.f32 %v1857, %v1839
  %v1860 = vmul.f32 %v1858, %v1854
  %v1861 = vadd.f32 %v1859, 1.4214138
  %v1862 = vadd.f32 %v1860, 1.4214138
  %v1863 = vmul.f32 %v1861, %v1839
  %v1864 = vmul.f32 %v1862, %v1854
  %v1865 = vadd.f32 %v1863, -0.28449672
  %v1866 = vadd.f32 %v1864, -0.28449672
  %v1867 = vmul.f32 %v1865, %v1839
  %v1868 = vmul.f32 %v1866, %v1854
  %v1869 = vadd.f32 %v1867, 0.2548296
  %v1870 = vadd.f32 %v1868, 0.2548296
  %v1871 = vmul.f32 %v1869, %v1839
  %v1872 = vmul.f32 %v1870, %v1854
  %v1873 = vsub.f32 0.0, %v1819
  %v1874 = vsub.f32 0.0, %v1820
  %v1875 = vmul.f32 %v1873, %v1819
  %v1876 = vmul.f32 %v1874, %v1820
  %v1877 = vmul.f32 %v1875, 1.442695
  %v1878 = vpow.pop %v1877
  %v1879 = vmul.f32 %v1876, 1.442695
  %v1880 = vpow.pop %v1879
  %v1881 = vmul.f32 %v1871, %v1878
  %v1882 = vmul.f32 %v1872, %v1880
  %v1883 = vsub.f32 1.0, %v1881
  %v1884 = vsub.f32 1.0, %v1882
  %v1885 = vmul.f32 %v1817, %v1883
  %v1886 = vmul.f32 %v1818, %v1884
  %v1887 = vadd.f32 %v1885, 1.0
  %v1888 = vadd.f32 %v1886, 1.0
  %v1889 = vmul.f32 %v1811, %v1887
  %v1890 = vmul.f32 %v1812, %v1888
  %v1891 = vld [vmem:[%s53] sm:$0xff]
  %v1892 = vld [vmem:[%s53 + $0x8] sm:$0xff]
  %v1893 = vld [vmem:[%s53 + $0x10] sm:$0xff]
  %v1894 = vld [vmem:[%s53 + $0x18] sm:$0xff]
  %v1895 = vld [vmem:[%s53 + $0x20] sm:$0xff]
  %v1896 = vld [vmem:[%s53 + $0x28] sm:$0xff]
  %v1897 = vld [vmem:[%s53 + $0x30] sm:$0xff]
  %v1898 = vld [vmem:[%s53 + $0x38] sm:$0xff]
  %v1899 = vld [vmem:[%s53 + $0x40] sm:$0xff]
  %v1900 = vld [vmem:[%s53 + $0x48] sm:$0xff]
  %v1901 = vld [vmem:[%s53 + $0x50] sm:$0xff]
  %v1902 = vld [vmem:[%s53 + $0x58] sm:$0xff]
  %v1903 = vld [vmem:[%s53 + $0x60] sm:$0xff]
  %v1904 = vld [vmem:[%s53 + $0x68] sm:$0xff]
  %v1905 = vld [vmem:[%s53 + $0x70] sm:$0xff]
  %v1906 = vld [vmem:[%s53 + $0x78] sm:$0xff]
  %v1907 = vld [vmem:[%s55] sm:$0x1]
  %v1909 = vperm.slane %v1907, 0
  %1911 = vmatpush.msra.mxu0 %v1906
  %1912 = vmatpush.msra.mxu0 %v1905
  %1913 = vmatpush.msra.mxu0 %v1904
  %1914 = vmatpush.msra.mxu0 %v1903
  %1915 = vmatpush.msra.mxu0 %v1902
  %1916 = vmatpush.msra.mxu0 %v1901
  %1917 = vmatpush.msra.mxu0 %v1900
  %1918 = vmatpush.msra.mxu0 %v1899
  %1919 = vmatpush.msra.mxu0 %v1898
  %1920 = vmatpush.msra.mxu0 %v1897
  %1921 = vmatpush.msra.mxu0 %v1896
  %1922 = vmatpush.msra.mxu0 %v1895
  %1923 = vmatpush.msra.mxu0 %v1894
  %1924 = vmatpush.msra.mxu0 %v1893
  %1925 = vmatpush.msra.mxu0 %v1892
  %1926 = vmatpush.msra.mxu0 %v1891
  %1927 = vmatmul.f32.gmra.mxu0 %v1889
  %v1928 = vpop.f32.mrf.mxu0
  %v1929 = vadd.f32 %v1909, %v1928
  %1930 = vmatmul.f32.gmra.mxu0 %v1890
  %v1931 = vpop.f32.mrf.mxu0
  %v1932 = vadd.f32 %v1909, %v1931
  %1933 = vdwg.mxu0
  %1935 = vset.pattern.permute.xlu0 0
  %1936 = vperm.xlu0 %1935, %v1778
  %v1937 = vpop.permute.xlu0 %1936
  %1940 = vset.pattern.permute.xlu0 0
  %1941 = vperm.xlu0 %1940, %v1779
  %v1942 = vpop.permute.xlu0 %1941
  %v1944 = vmul.f32 %v1937, %v1929
  %v1945 = vmul.f32 %v1942, %v1932
  %v1946 = vadd.f32 %v1944, 0.0
  %v1947 = vadd.f32 %v1945, 0.0
  %s1948 = scalar_lea.vmem %s49, 32
  %v1949 = vld [vmem:[%s1948] sm:$0xff]
  %v1950 = vld [vmem:[%s1948 + $0x8] sm:$0xff]
  %v1951 = vld [vmem:[%s1948 + $0x10] sm:$0xff]
  %v1952 = vld [vmem:[%s1948 + $0x18] sm:$0xff]
  %s1953 = scalar_lea.vmem %s51, 1
  %v1954 = vld [vmem:[%s1953] sm:$0x1]
  %v1956 = vperm.slane %v1954, 0
  %1958 = vmatpush.msra.mxu0 0.0
  %1959 = vmatpush.msra.mxu0 0.0
  %1960 = vmatpush.msra.mxu0 0.0
  %1961 = vmatpush.msra.mxu0 0.0
  %1962 = vmatpush.msra.mxu0 0.0
  %1963 = vmatpush.msra.mxu0 0.0
  %1964 = vmatpush.msra.mxu0 0.0
  %1965 = vmatpush.msra.mxu0 0.0
  %1966 = vmatpush.msra.mxu0 0.0
  %1967 = vmatpush.msra.mxu0 0.0
  %1968 = vmatpush.msra.mxu0 0.0
  %1969 = vmatpush.msra.mxu0 0.0
  %1970 = vmatpush.msra.mxu0 %v1952
  %1971 = vmatpush.msra.mxu0 %v1951
  %1972 = vmatpush.msra.mxu0 %v1950
  %1973 = vmatpush.msra.mxu0 %v1949
  %1974 = vmatmul.f32.gmra.mxu0 %v1436
  %v1975 = vpop.f32.mrf.mxu0
  %v1976 = vadd.f32 %v1956, %v1975
  %1977 = vmatmul.f32.gmra.mxu0 %v1439
  %v1978 = vpop.f32.mrf.mxu0
  %v1979 = vadd.f32 %v1956, %v1978
  %1980 = vdwg.mxu0
  %v1981 = vmul.f32 %v1976, 0.5
  %v1982 = vmul.f32 %v1979, 0.5
  %v1983 = vmul.f32 %v1976, 0.70710677
  %v1984 = vmul.f32 %v1979, 0.70710677
  %vm1985 = vcmp.lt.f32.partialorder %v1983, 0.0
  %vm1986 = vcmp.lt.f32.partialorder %v1984, 0.0
  %v1987 = vsel %vm1985, -1.0, 1.0
  %v1988 = vsel %vm1986, -1.0, 1.0
  %v1989 = vand.u32 2147483647, %v1983
  %v1990 = vand.u32 2147483647, %v1984
  %v1991 = vmul.f32 %v1989, 0.3275911
  %v1992 = vmul.f32 %v1990, 0.3275911
  %v1993 = vadd.f32 %v1991, 1.0
  %v1994 = vadd.f32 %v1992, 1.0
  %v1995 = vrcp.pop %v1993
  %v1996 = vmul.f32 %v1993, %v1995
  %v1997 = vsub.f32 1.0, %v1996
  %v1998 = vmul.f32 %v1995, %v1997
  %v1999 = vadd.f32 %v1995, %v1998
  %vm2000 = vweird.f32 %v1993
  %vm2001 = vweird.f32 %v1995
  %vm2002 = vmor %vm2000, %vm2001
  %v2003 = vsel %vm2002, %v1995, %v1999
  %v2004 = vand.u32 2147483647, %v1993
  %vm2005 = vcmp.eq.f32.partialorder %v2004, 8.507059e+37
  %v2006 = vand.u32 %v1993, 2147483648
  %v2007 = vor.u32 1.1754944e-38, %v2006
  %v2008 = vsel %vm2005, %v2007, %v2003
  %v2009 = vmul.f32 1.0, %v2008
  %v2010 = vrcp.pop %v1994
  %v2011 = vmul.f32 %v1994, %v2010
  %v2012 = vsub.f32 1.0, %v2011
  %v2013 = vmul.f32 %v2010, %v2012
  %v2014 = vadd.f32 %v2010, %v2013
  %vm2015 = vweird.f32 %v1994
  %vm2016 = vweird.f32 %v2010
  %vm2017 = vmor %vm2015, %vm2016
  %v2018 = vsel %vm2017, %v2010, %v2014
  %v2019 = vand.u32 2147483647, %v1994
  %vm2020 = vcmp.eq.f32.partialorder %v2019, 8.507059e+37
  %v2021 = vand.u32 %v1994, 2147483648
  %v2022 = vor.u32 1.1754944e-38, %v2021
  %v2023 = vsel %vm2020, %v2022, %v2018
  %v2024 = vmul.f32 1.0, %v2023
  %v2025 = vmul.f32 %v2009, 1.0614054
  %v2026 = vmul.f32 %v2024, 1.0614054
  %v2027 = vadd.f32 %v2025, -1.4531521
  %v2028 = vadd.f32 %v2026, -1.4531521
  %v2029 = vmul.f32 %v2027, %v2009
  %v2030 = vmul.f32 %v2028, %v2024
  %v2031 = vadd.f32 %v2029, 1.4214138
  %v2032 = vadd.f32 %v2030, 1.4214138
  %v2033 = vmul.f32 %v2031, %v2009
  %v2034 = vmul.f32 %v2032, %v2024
  %v2035 = vadd.f32 %v2033, -0.28449672
  %v2036 = vadd.f32 %v2034, -0.28449672
  %v2037 = vmul.f32 %v2035, %v2009
  %v2038 = vmul.f32 %v2036, %v2024
  %v2039 = vadd.f32 %v2037, 0.2548296
  %v2040 = vadd.f32 %v2038, 0.2548296
  %v2041 = vmul.f32 %v2039, %v2009
  %v2042 = vmul.f32 %v2040, %v2024
  %v2043 = vsub.f32 0.0, %v1989
  %v2044 = vsub.f32 0.0, %v1990
  %v2045 = vmul.f32 %v2043, %v1989
  %v2046 = vmul.f32 %v2044, %v1990
  %v2047 = vmul.f32 %v2045, 1.442695
  %v2048 = vpow.pop %v2047
  %v2049 = vmul.f32 %v2046, 1.442695
  %v2050 = vpow.pop %v2049
  %v2051 = vmul.f32 %v2041, %v2048
  %v2052 = vmul.f32 %v2042, %v2050
  %v2053 = vsub.f32 1.0, %v2051
  %v2054 = vsub.f32 1.0, %v2052
  %v2055 = vmul.f32 %v1987, %v2053
  %v2056 = vmul.f32 %v1988, %v2054
  %v2057 = vadd.f32 %v2055, 1.0
  %v2058 = vadd.f32 %v2056, 1.0
  %v2059 = vmul.f32 %v1981, %v2057
  %v2060 = vmul.f32 %v1982, %v2058
  %s2061 = scalar_lea.vmem %s53, 128
  %v2062 = vld [vmem:[%s2061] sm:$0xff]
  %v2063 = vld [vmem:[%s2061 + $0x8] sm:$0xff]
  %v2064 = vld [vmem:[%s2061 + $0x10] sm:$0xff]
  %v2065 = vld [vmem:[%s2061 + $0x18] sm:$0xff]
  %v2066 = vld [vmem:[%s2061 + $0x20] sm:$0xff]
  %v2067 = vld [vmem:[%s2061 + $0x28] sm:$0xff]
  %v2068 = vld [vmem:[%s2061 + $0x30] sm:$0xff]
  %v2069 = vld [vmem:[%s2061 + $0x38] sm:$0xff]
  %v2070 = vld [vmem:[%s2061 + $0x40] sm:$0xff]
  %v2071 = vld [vmem:[%s2061 + $0x48] sm:$0xff]
  %v2072 = vld [vmem:[%s2061 + $0x50] sm:$0xff]
  %v2073 = vld [vmem:[%s2061 + $0x58] sm:$0xff]
  %v2074 = vld [vmem:[%s2061 + $0x60] sm:$0xff]
  %v2075 = vld [vmem:[%s2061 + $0x68] sm:$0xff]
  %v2076 = vld [vmem:[%s2061 + $0x70] sm:$0xff]
  %v2077 = vld [vmem:[%s2061 + $0x78] sm:$0xff]
  %s2078 = scalar_lea.vmem %s55, 1
  %v2079 = vld [vmem:[%s2078] sm:$0x1]
  %v2081 = vperm.slane %v2079, 0
  %2083 = vmatpush.msra.mxu0 %v2077
  %2084 = vmatpush.msra.mxu0 %v2076
  %2085 = vmatpush.msra.mxu0 %v2075
  %2086 = vmatpush.msra.mxu0 %v2074
  %2087 = vmatpush.msra.mxu0 %v2073
  %2088 = vmatpush.msra.mxu0 %v2072
  %2089 = vmatpush.msra.mxu0 %v2071
  %2090 = vmatpush.msra.mxu0 %v2070
  %2091 = vmatpush.msra.mxu0 %v2069
  %2092 = vmatpush.msra.mxu0 %v2068
  %2093 = vmatpush.msra.mxu0 %v2067
  %2094 = vmatpush.msra.mxu0 %v2066
  %2095 = vmatpush.msra.mxu0 %v2065
  %2096 = vmatpush.msra.mxu0 %v2064
  %2097 = vmatpush.msra.mxu0 %v2063
  %2098 = vmatpush.msra.mxu0 %v2062
  %2099 = vmatmul.f32.gmra.mxu0 %v2059
  %v2100 = vpop.f32.mrf.mxu0
  %v2101 = vadd.f32 %v2081, %v2100
  %2102 = vmatmul.f32.gmra.mxu0 %v2060
  %v2103 = vpop.f32.mrf.mxu0
  %v2104 = vadd.f32 %v2081, %v2103
  %2105 = vdwg.mxu0
  %2106 = vset.pattern.permute.xlu0 1
  %2107 = vperm.xlu0 %2106, %v1778
  %v2108 = vpop.permute.xlu0 %2107
  %2110 = vset.pattern.permute.xlu0 1
  %2111 = vperm.xlu0 %2110, %v1779
  %v2112 = vpop.permute.xlu0 %2111
  %v2114 = vmul.f32 %v2108, %v2101
  %v2115 = vmul.f32 %v2112, %v2104
  %v2116 = vadd.f32 %v1946, %v2114
  %v2117 = vadd.f32 %v1947, %v2115
  %s2118 = scalar_lea.vmem %s49, 64
  %v2119 = vld [vmem:[%s2118] sm:$0xff]
  %v2120 = vld [vmem:[%s2118 + $0x8] sm:$0xff]
  %v2121 = vld [vmem:[%s2118 + $0x10] sm:$0xff]
  %v2122 = vld [vmem:[%s2118 + $0x18] sm:$0xff]
  %s2123 = scalar_lea.vmem %s51, 2
  %v2124 = vld [vmem:[%s2123] sm:$0x1]
  %v2126 = vperm.slane %v2124, 0
  %2128 = vmatpush.msra.mxu0 0.0
  %2129 = vmatpush.msra.mxu0 0.0
  %2130 = vmatpush.msra.mxu0 0.0
  %2131 = vmatpush.msra.mxu0 0.0
  %2132 = vmatpush.msra.mxu0 0.0
  %2133 = vmatpush.msra.mxu0 0.0
  %2134 = vmatpush.msra.mxu0 0.0
  %2135 = vmatpush.msra.mxu0 0.0
  %2136 = vmatpush.msra.mxu0 0.0
  %2137 = vmatpush.msra.mxu0 0.0
  %2138 = vmatpush.msra.mxu0 0.0
  %2139 = vmatpush.msra.mxu0 0.0
  %2140 = vmatpush.msra.mxu0 %v2122
  %2141 = vmatpush.msra.mxu0 %v2121
  %2142 = vmatpush.msra.mxu0 %v2120
  %2143 = vmatpush.msra.mxu0 %v2119
  %2144 = vmatmul.f32.gmra.mxu0 %v1436
  %v2145 = vpop.f32.mrf.mxu0
  %v2146 = vadd.f32 %v2126, %v2145
  %2147 = vmatmul.f32.gmra.mxu0 %v1439
  %v2148 = vpop.f32.mrf.mxu0
  %v2149 = vadd.f32 %v2126, %v2148
  %2150 = vdwg.mxu0
  %v2151 = vmul.f32 %v2146, 0.5
  %v2152 = vmul.f32 %v2149, 0.5
  %v2153 = vmul.f32 %v2146, 0.70710677
  %v2154 = vmul.f32 %v2149, 0.70710677
  %vm2155 = vcmp.lt.f32.partialorder %v2153, 0.0
  %vm2156 = vcmp.lt.f32.partialorder %v2154, 0.0
  %v2157 = vsel %vm2155, -1.0, 1.0
  %v2158 = vsel %vm2156, -1.0, 1.0
  %v2159 = vand.u32 2147483647, %v2153
  %v2160 = vand.u32 2147483647, %v2154
  %v2161 = vmul.f32 %v2159, 0.3275911
  %v2162 = vmul.f32 %v2160, 0.3275911
  %v2163 = vadd.f32 %v2161, 1.0
  %v2164 = vadd.f32 %v2162, 1.0
  %v2165 = vrcp.pop %v2163
  %v2166 = vmul.f32 %v2163, %v2165
  %v2167 = vsub.f32 1.0, %v2166
  %v2168 = vmul.f32 %v2165, %v2167
  %v2169 = vadd.f32 %v2165, %v2168
  %vm2170 = vweird.f32 %v2163
  %vm2171 = vweird.f32 %v2165
  %vm2172 = vmor %vm2170, %vm2171
  %v2173 = vsel %vm2172, %v2165, %v2169
  %v2174 = vand.u32 2147483647, %v2163
  %vm2175 = vcmp.eq.f32.partialorder %v2174, 8.507059e+37
  %v2176 = vand.u32 %v2163, 2147483648
  %v2177 = vor.u32 1.1754944e-38, %v2176
  %v2178 = vsel %vm2175, %v2177, %v2173
  %v2179 = vmul.f32 1.0, %v2178
  %v2180 = vrcp.pop %v2164
  %v2181 = vmul.f32 %v2164, %v2180
  %v2182 = vsub.f32 1.0, %v2181
  %v2183 = vmul.f32 %v2180, %v2182
  %v2184 = vadd.f32 %v2180, %v2183
  %vm2185 = vweird.f32 %v2164
  %vm2186 = vweird.f32 %v2180
  %vm2187 = vmor %vm2185, %vm2186
  %v2188 = vsel %vm2187, %v2180, %v2184
  %v2189 = vand.u32 2147483647, %v2164
  %vm2190 = vcmp.eq.f32.partialorder %v2189, 8.507059e+37
  %v2191 = vand.u32 %v2164, 2147483648
  %v2192 = vor.u32 1.1754944e-38, %v2191
  %v2193 = vsel %vm2190, %v2192, %v2188
  %v2194 = vmul.f32 1.0, %v2193
  %v2195 = vmul.f32 %v2179, 1.0614054
  %v2196 = vmul.f32 %v2194, 1.0614054
  %v2197 = vadd.f32 %v2195, -1.4531521
  %v2198 = vadd.f32 %v2196, -1.4531521
  %v2199 = vmul.f32 %v2197, %v2179
  %v2200 = vmul.f32 %v2198, %v2194
  %v2201 = vadd.f32 %v2199, 1.4214138
  %v2202 = vadd.f32 %v2200, 1.4214138
  %v2203 = vmul.f32 %v2201, %v2179
  %v2204 = vmul.f32 %v2202, %v2194
  %v2205 = vadd.f32 %v2203, -0.28449672
  %v2206 = vadd.f32 %v2204, -0.28449672
  %v2207 = vmul.f32 %v2205, %v2179
  %v2208 = vmul.f32 %v2206, %v2194
  %v2209 = vadd.f32 %v2207, 0.2548296
  %v2210 = vadd.f32 %v2208, 0.2548296
  %v2211 = vmul.f32 %v2209, %v2179
  %v2212 = vmul.f32 %v2210, %v2194
  %v2213 = vsub.f32 0.0, %v2159
  %v2214 = vsub.f32 0.0, %v2160
  %v2215 = vmul.f32 %v2213, %v2159
  %v2216 = vmul.f32 %v2214, %v2160
  %v2217 = vmul.f32 %v2215, 1.442695
  %v2218 = vpow.pop %v2217
  %v2219 = vmul.f32 %v2216, 1.442695
  %v2220 = vpow.pop %v2219
  %v2221 = vmul.f32 %v2211, %v2218
  %v2222 = vmul.f32 %v2212, %v2220
  %v2223 = vsub.f32 1.0, %v2221
  %v2224 = vsub.f32 1.0, %v2222
  %v2225 = vmul.f32 %v2157, %v2223
  %v2226 = vmul.f32 %v2158, %v2224
  %v2227 = vadd.f32 %v2225, 1.0
  %v2228 = vadd.f32 %v2226, 1.0
  %v2229 = vmul.f32 %v2151, %v2227
  %v2230 = vmul.f32 %v2152, %v2228
  %s2231 = scalar_lea.vmem %s53, 256
  %v2232 = vld [vmem:[%s2231] sm:$0xff]
  %v2233 = vld [vmem:[%s2231 + $0x8] sm:$0xff]
  %v2234 = vld [vmem:[%s2231 + $0x10] sm:$0xff]
  %v2235 = vld [vmem:[%s2231 + $0x18] sm:$0xff]
  %v2236 = vld [vmem:[%s2231 + $0x20] sm:$0xff]
  %v2237 = vld [vmem:[%s2231 + $0x28] sm:$0xff]
  %v2238 = vld [vmem:[%s2231 + $0x30] sm:$0xff]
  %v2239 = vld [vmem:[%s2231 + $0x38] sm:$0xff]
  %v2240 = vld [vmem:[%s2231 + $0x40] sm:$0xff]
  %v2241 = vld [vmem:[%s2231 + $0x48] sm:$0xff]
  %v2242 = vld [vmem:[%s2231 + $0x50] sm:$0xff]
  %v2243 = vld [vmem:[%s2231 + $0x58] sm:$0xff]
  %v2244 = vld [vmem:[%s2231 + $0x60] sm:$0xff]
  %v2245 = vld [vmem:[%s2231 + $0x68] sm:$0xff]
  %v2246 = vld [vmem:[%s2231 + $0x70] sm:$0xff]
  %v2247 = vld [vmem:[%s2231 + $0x78] sm:$0xff]
  %s2248 = scalar_lea.vmem %s55, 2
  %v2249 = vld [vmem:[%s2248] sm:$0x1]
  %v2251 = vperm.slane %v2249, 0
  %2253 = vmatpush.msra.mxu0 %v2247
  %2254 = vmatpush.msra.mxu0 %v2246
  %2255 = vmatpush.msra.mxu0 %v2245
  %2256 = vmatpush.msra.mxu0 %v2244
  %2257 = vmatpush.msra.mxu0 %v2243
  %2258 = vmatpush.msra.mxu0 %v2242
  %2259 = vmatpush.msra.mxu0 %v2241
  %2260 = vmatpush.msra.mxu0 %v2240
  %2261 = vmatpush.msra.mxu0 %v2239
  %2262 = vmatpush.msra.mxu0 %v2238
  %2263 = vmatpush.msra.mxu0 %v2237
  %2264 = vmatpush.msra.mxu0 %v2236
  %2265 = vmatpush.msra.mxu0 %v2235
  %2266 = vmatpush.msra.mxu0 %v2234
  %2267 = vmatpush.msra.mxu0 %v2233
  %2268 = vmatpush.msra.mxu0 %v2232
  %2269 = vmatmul.f32.gmra.mxu0 %v2229
  %v2270 = vpop.f32.mrf.mxu0
  %v2271 = vadd.f32 %v2251, %v2270
  %2272 = vmatmul.f32.gmra.mxu0 %v2230
  %v2273 = vpop.f32.mrf.mxu0
  %v2274 = vadd.f32 %v2251, %v2273
  %2275 = vdwg.mxu0
  %2276 = vset.pattern.permute.xlu0 2
  %2277 = vperm.xlu0 %2276, %v1778
  %v2278 = vpop.permute.xlu0 %2277
  %2280 = vset.pattern.permute.xlu0 2
  %2281 = vperm.xlu0 %2280, %v1779
  %v2282 = vpop.permute.xlu0 %2281
  %v2284 = vmul.f32 %v2278, %v2271
  %v2285 = vmul.f32 %v2282, %v2274
  %v2286 = vadd.f32 %v2116, %v2284
  %v2287 = vadd.f32 %v2117, %v2285
  %s2288 = scalar_lea.vmem %s49, 96
  %v2289 = vld [vmem:[%s2288] sm:$0xff]
  %v2290 = vld [vmem:[%s2288 + $0x8] sm:$0xff]
  %v2291 = vld [vmem:[%s2288 + $0x10] sm:$0xff]
  %v2292 = vld [vmem:[%s2288 + $0x18] sm:$0xff]
  %s2293 = scalar_lea.vmem %s51, 3
  %v2294 = vld [vmem:[%s2293] sm:$0x1]
  %v2296 = vperm.slane %v2294, 0
  %2298 = vmatpush.msra.mxu0 0.0
  %2299 = vmatpush.msra.mxu0 0.0
  %2300 = vmatpush.msra.mxu0 0.0
  %2301 = vmatpush.msra.mxu0 0.0
  %2302 = vmatpush.msra.mxu0 0.0
  %2303 = vmatpush.msra.mxu0 0.0
  %2304 = vmatpush.msra.mxu0 0.0
  %2305 = vmatpush.msra.mxu0 0.0
  %2306 = vmatpush.msra.mxu0 0.0
  %2307 = vmatpush.msra.mxu0 0.0
  %2308 = vmatpush.msra.mxu0 0.0
  %2309 = vmatpush.msra.mxu0 0.0
  %2310 = vmatpush.msra.mxu0 %v2292
  %2311 = vmatpush.msra.mxu0 %v2291
  %2312 = vmatpush.msra.mxu0 %v2290
  %2313 = vmatpush.msra.mxu0 %v2289
  %2314 = vmatmul.f32.gmra.mxu0 %v1436
  %v2315 = vpop.f32.mrf.mxu0
  %v2316 = vadd.f32 %v2296, %v2315
  %2317 = vmatmul.f32.gmra.mxu0 %v1439
  %v2318 = vpop.f32.mrf.mxu0
  %v2319 = vadd.f32 %v2296, %v2318
  %2320 = vdwg.mxu0
  %v2321 = vmul.f32 %v2316, 0.5
  %v2322 = vmul.f32 %v2319, 0.5
  %v2323 = vmul.f32 %v2316, 0.70710677
  %v2324 = vmul.f32 %v2319, 0.70710677
  %vm2325 = vcmp.lt.f32.partialorder %v2323, 0.0
  %vm2326 = vcmp.lt.f32.partialorder %v2324, 0.0
  %v2327 = vsel %vm2325, -1.0, 1.0
  %v2328 = vsel %vm2326, -1.0, 1.0
  %v2329 = vand.u32 2147483647, %v2323
  %v2330 = vand.u32 2147483647, %v2324
  %v2331 = vmul.f32 %v2329, 0.3275911
  %v2332 = vmul.f32 %v2330, 0.3275911
  %v2333 = vadd.f32 %v2331, 1.0
  %v2334 = vadd.f32 %v2332, 1.0
  %v2335 = vrcp.pop %v2333
  %v2336 = vmul.f32 %v2333, %v2335
  %v2337 = vsub.f32 1.0, %v2336
  %v2338 = vmul.f32 %v2335, %v2337
  %v2339 = vadd.f32 %v2335, %v2338
  %vm2340 = vweird.f32 %v2333
  %vm2341 = vweird.f32 %v2335
  %vm2342 = vmor %vm2340, %vm2341
  %v2343 = vsel %vm2342, %v2335, %v2339
  %v2344 = vand.u32 2147483647, %v2333
  %vm2345 = vcmp.eq.f32.partialorder %v2344, 8.507059e+37
  %v2346 = vand.u32 %v2333, 2147483648
  %v2347 = vor.u32 1.1754944e-38, %v2346
  %v2348 = vsel %vm2345, %v2347, %v2343
  %v2349 = vmul.f32 1.0, %v2348
  %v2350 = vrcp.pop %v2334
  %v2351 = vmul.f32 %v2334, %v2350
  %v2352 = vsub.f32 1.0, %v2351
  %v2353 = vmul.f32 %v2350, %v2352
  %v2354 = vadd.f32 %v2350, %v2353
  %vm2355 = vweird.f32 %v2334
  %vm2356 = vweird.f32 %v2350
  %vm2357 = vmor %vm2355, %vm2356
  %v2358 = vsel %vm2357, %v2350, %v2354
  %v2359 = vand.u32 2147483647, %v2334
  %vm2360 = vcmp.eq.f32.partialorder %v2359, 8.507059e+37
  %v2361 = vand.u32 %v2334, 2147483648
  %v2362 = vor.u32 1.1754944e-38, %v2361
  %v2363 = vsel %vm2360, %v2362, %v2358
  %v2364 = vmul.f32 1.0, %v2363
  %v2365 = vmul.f32 %v2349, 1.0614054
  %v2366 = vmul.f32 %v2364, 1.0614054
  %v2367 = vadd.f32 %v2365, -1.4531521
  %v2368 = vadd.f32 %v2366, -1.4531521
  %v2369 = vmul.f32 %v2367, %v2349
  %v2370 = vmul.f32 %v2368, %v2364
  %v2371 = vadd.f32 %v2369, 1.4214138
  %v2372 = vadd.f32 %v2370, 1.4214138
  %v2373 = vmul.f32 %v2371, %v2349
  %v2374 = vmul.f32 %v2372, %v2364
  %v2375 = vadd.f32 %v2373, -0.28449672
  %v2376 = vadd.f32 %v2374, -0.28449672
  %v2377 = vmul.f32 %v2375, %v2349
  %v2378 = vmul.f32 %v2376, %v2364
  %v2379 = vadd.f32 %v2377, 0.2548296
  %v2380 = vadd.f32 %v2378, 0.2548296
  %v2381 = vmul.f32 %v2379, %v2349
  %v2382 = vmul.f32 %v2380, %v2364
  %v2383 = vsub.f32 0.0, %v2329
  %v2384 = vsub.f32 0.0, %v2330
  %v2385 = vmul.f32 %v2383, %v2329
  %v2386 = vmul.f32 %v2384, %v2330
  %v2387 = vmul.f32 %v2385, 1.442695
  %v2388 = vpow.pop %v2387
  %v2389 = vmul.f32 %v2386, 1.442695
  %v2390 = vpow.pop %v2389
  %v2391 = vmul.f32 %v2381, %v2388
  %v2392 = vmul.f32 %v2382, %v2390
  %v2393 = vsub.f32 1.0, %v2391
  %v2394 = vsub.f32 1.0, %v2392
  %v2395 = vmul.f32 %v2327, %v2393
  %v2396 = vmul.f32 %v2328, %v2394
  %v2397 = vadd.f32 %v2395, 1.0
  %v2398 = vadd.f32 %v2396, 1.0
  %v2399 = vmul.f32 %v2321, %v2397
  %v2400 = vmul.f32 %v2322, %v2398
  %s2401 = scalar_lea.vmem %s53, 384
  %v2402 = vld [vmem:[%s2401] sm:$0xff]
  %v2403 = vld [vmem:[%s2401 + $0x8] sm:$0xff]
  %v2404 = vld [vmem:[%s2401 + $0x10] sm:$0xff]
  %v2405 = vld [vmem:[%s2401 + $0x18] sm:$0xff]
  %v2406 = vld [vmem:[%s2401 + $0x20] sm:$0xff]
  %v2407 = vld [vmem:[%s2401 + $0x28] sm:$0xff]
  %v2408 = vld [vmem:[%s2401 + $0x30] sm:$0xff]
  %v2409 = vld [vmem:[%s2401 + $0x38] sm:$0xff]
  %v2410 = vld [vmem:[%s2401 + $0x40] sm:$0xff]
  %v2411 = vld [vmem:[%s2401 + $0x48] sm:$0xff]
  %v2412 = vld [vmem:[%s2401 + $0x50] sm:$0xff]
  %v2413 = vld [vmem:[%s2401 + $0x58] sm:$0xff]
  %v2414 = vld [vmem:[%s2401 + $0x60] sm:$0xff]
  %v2415 = vld [vmem:[%s2401 + $0x68] sm:$0xff]
  %v2416 = vld [vmem:[%s2401 + $0x70] sm:$0xff]
  %v2417 = vld [vmem:[%s2401 + $0x78] sm:$0xff]
  %s2418 = scalar_lea.vmem %s55, 3
  %v2419 = vld [vmem:[%s2418] sm:$0x1]
  %v2421 = vperm.slane %v2419, 0
  %2423 = vmatpush.msra.mxu0 %v2417
  %2424 = vmatpush.msra.mxu0 %v2416
  %2425 = vmatpush.msra.mxu0 %v2415
  %2426 = vmatpush.msra.mxu0 %v2414
  %2427 = vmatpush.msra.mxu0 %v2413
  %2428 = vmatpush.msra.mxu0 %v2412
  %2429 = vmatpush.msra.mxu0 %v2411
  %2430 = vmatpush.msra.mxu0 %v2410
  %2431 = vmatpush.msra.mxu0 %v2409
  %2432 = vmatpush.msra.mxu0 %v2408
  %2433 = vmatpush.msra.mxu0 %v2407
  %2434 = vmatpush.msra.mxu0 %v2406
  %2435 = vmatpush.msra.mxu0 %v2405
  %2436 = vmatpush.msra.mxu0 %v2404
  %2437 = vmatpush.msra.mxu0 %v2403
  %2438 = vmatpush.msra.mxu0 %v2402
  %2439 = vmatmul.f32.gmra.mxu0 %v2399
  %v2440 = vpop.f32.mrf.mxu0
  %v2441 = vadd.f32 %v2421, %v2440
  %2442 = vmatmul.f32.gmra.mxu0 %v2400
  %v2443 = vpop.f32.mrf.mxu0
  %v2444 = vadd.f32 %v2421, %v2443
  %2445 = vdwg.mxu0
  %2446 = vset.pattern.permute.xlu0 3
  %2447 = vperm.xlu0 %2446, %v1778
  %v2448 = vpop.permute.xlu0 %2447
  %2450 = vset.pattern.permute.xlu0 3
  %2451 = vperm.xlu0 %2450, %v1779
  %v2452 = vpop.permute.xlu0 %2451
  %v2454 = vmul.f32 %v2448, %v2441
  %v2455 = vmul.f32 %v2452, %v2444
  %v2456 = vadd.f32 %v2286, %v2454
  %v2457 = vadd.f32 %v2287, %v2455
  %v2458 = vadd.f32 %v1369, %v2456
  %v2459 = vadd.f32 %v1370, %v2457
  %v2460 = vld [vmem:[%s57] sm:$0x1]
  %v2461 = vld [vmem:[%s59] sm:$0x1]
  %v2462 = vsel %vm192, %v2458, 0.0
  %2463 = vadd.xlane.f32.xlu0 %v2462
  %v2464 = vpop.xlane.xlu0 %2463
  %v2465 = vsel %vm192, %v2459, 0.0
  %2466 = vadd.xlane.f32.xlu0 %v2465
  %v2467 = vpop.xlane.xlu0 %2466
  %v2468 = vmul.f32 %v2464, %v205
  %v2469 = vmul.f32 %v2467, %v205
  %v2470 = vsub.f32 %v2458, %v2468
  %v2471 = vsub.f32 %v2459, %v2469
  %v2472 = vmul.f32 %v2470, %v2470
  %v2473 = vmul.f32 %v2471, %v2471
  %v2474 = vsel %vm192, %v2472, 0.0
  %2475 = vadd.xlane.f32.xlu0 %v2474
  %v2476 = vpop.xlane.xlu0 %2475
  %v2477 = vsel %vm192, %v2473, 0.0
  %2478 = vadd.xlane.f32.xlu0 %v2477
  %v2479 = vpop.xlane.xlu0 %2478
  %v2480 = vmul.f32 %v2476, %v205
  %v2481 = vmul.f32 %v2479, %v205
  %v2482 = vadd.f32 %v2480, 1e-05
  %v2483 = vadd.f32 %v2481, 1e-05
  %v2484 = vrsqrt.pop %v2482
  %v2485 = vmul.f32 %v2484, %v2482
  %v2486 = vmul.f32 %v2485, %v2484
  %v2487 = vmul.f32 0.5, %v2486
  %v2488 = vsub.f32 1.5, %v2487
  %v2489 = vmul.f32 %v2484, %v2488
  %vm2490 = vweird.f32 %v2482
  %vm2491 = vweird.f32 %v2484
  %vm2492 = vmor %vm2490, %vm2491
  %v2493 = vsel %vm2492, %v2484, %v2489
  %v2494 = vrsqrt.pop %v2483
  %v2495 = vmul.f32 %v2494, %v2483
  %v2496 = vmul.f32 %v2495, %v2494
  %v2497 = vmul.f32 0.5, %v2496
  %v2498 = vsub.f32 1.5, %v2497
  %v2499 = vmul.f32 %v2494, %v2498
  %vm2500 = vweird.f32 %v2483
  %vm2501 = vweird.f32 %v2494
  %vm2502 = vmor %vm2500, %vm2501
  %v2503 = vsel %vm2502, %v2494, %v2499
  %v2504 = vmul.f32 %v2470, %v2493
  %v2505 = vmul.f32 %v2471, %v2503
  %v2507 = vperm.slane %v2460, 0
  %v2509 = vmul.f32 %v2504, %v2507
  %v2510 = vmul.f32 %v2505, %v2507
  %v2512 = vperm.slane %v2461, 0
  %v2514 = vadd.f32 %v2509, %v2512
  %v2515 = vadd.f32 %v2510, %v2512
  %v2516 = vld [vmem:[%s3] sm:$0xff]
  %v2517 = vld [vmem:[%s3 + $0x8] sm:$0xff]
  %v2518 = vld [vmem:[%s3 + $0x10] sm:$0xff]
  %v2519 = vld [vmem:[%s3 + $0x18] sm:$0xff]
  %v2520 = vld [vmem:[%s3 + $0x20] sm:$0xff]
  %v2521 = vld [vmem:[%s3 + $0x28] sm:$0xff]
  %v2522 = vld [vmem:[%s3 + $0x30] sm:$0xff]
  %v2523 = vld [vmem:[%s3 + $0x38] sm:$0xff]
  %v2524 = vld [vmem:[%s3 + $0x40] sm:$0xff]
  %v2525 = vld [vmem:[%s3 + $0x48] sm:$0xff]
  %v2526 = vld [vmem:[%s3 + $0x50] sm:$0xff]
  %v2527 = vld [vmem:[%s3 + $0x58] sm:$0xff]
  %v2528 = vld [vmem:[%s3 + $0x60] sm:$0xff]
  %v2529 = vld [vmem:[%s3 + $0x68] sm:$0xff]
  %v2530 = vld [vmem:[%s3 + $0x70] sm:$0xff]
  %v2531 = vld [vmem:[%s3 + $0x78] sm:$0xff]
  %v2533 = vsel %vm192, %v2514, 0
  %v2536 = vsel %vm192, %v2515, 0
  %v2539 = vsel %vm192, %v2516, 0
  %v2542 = vsel %vm192, %v2517, 0
  %v2545 = vsel %vm192, %v2518, 0
  %v2548 = vsel %vm192, %v2519, 0
  %v2551 = vsel %vm192, %v2520, 0
  %v2554 = vsel %vm192, %v2521, 0
  %v2557 = vsel %vm192, %v2522, 0
  %v2560 = vsel %vm192, %v2523, 0
  %v2563 = vsel %vm192, %v2524, 0
  %v2566 = vsel %vm192, %v2525, 0
  %v2569 = vsel %vm192, %v2526, 0
  %v2572 = vsel %vm192, %v2527, 0
  %v2575 = vsel %vm192, %v2528, 0
  %v2578 = vsel %vm192, %v2529, 0
  %v2581 = vsel %vm192, %v2530, 0
  %v2584 = vsel %vm192, %v2531, 0
  %2586 = vmatpush.xpose.msra.mxu0 %v2584
  %2587 = vmatpush.xpose.msra.mxu0 %v2581
  %2588 = vmatpush.xpose.msra.mxu0 %v2578
  %2589 = vmatpush.xpose.msra.mxu0 %v2575
  %2590 = vmatpush.xpose.msra.mxu0 %v2572
  %2591 = vmatpush.xpose.msra.mxu0 %v2569
  %2592 = vmatpush.xpose.msra.mxu0 %v2566
  %2593 = vmatpush.xpose.msra.mxu0 %v2563
  %2594 = vmatpush.xpose.msra.mxu0 %v2560
  %2595 = vmatpush.xpose.msra.mxu0 %v2557
  %2596 = vmatpush.xpose.msra.mxu0 %v2554
  %2597 = vmatpush.xpose.msra.mxu0 %v2551
  %2598 = vmatpush.xpose.msra.mxu0 %v2548
  %2599 = vmatpush.xpose.msra.mxu0 %v2545
  %2600 = vmatpush.xpose.msra.mxu0 %v2542
  %2601 = vmatpush.xpose.msra.mxu0 %v2539
  %2602 = vmatmul.f32.gmra.mxu0 %v2533
  %v2603 = vpop.f32.mrf.mxu0
  %v2604 = vadd.f32 0.0, %v2603
  %2605 = vmatmul.f32.gmra.mxu0 %v2536
  %v2606 = vpop.f32.mrf.mxu0
  %v2607 = vadd.f32 0.0, %v2606
  %2608 = vdwg.mxu0
  %2609 = vst [vmem:[%s61] sm:$0xff] %v2604
  %2610 = vst [vmem:[%s61 + $0x8] sm:$0xff] %v2607
  // Predicated region
  $region122: #{forward.1} parent=0 // pred_check
    _
  $region123: #{forward.1} parent=0 // pred_check_branch
    %2612 = sbr.rel (0) target = $region125
  $region124: #{forward.1} parent=0 // pred_region
    _
  $region125: #{forward.1} parent=0 // pred_fallthru
    _
  // Predicated region
  $region126: #{forward.1} parent=0 // pred_check
    _
  $region127: #{forward.1} parent=0 // pred_check_branch
    %2614 = sbr.rel (0) target = $region129
  $region128: #{forward.1} parent=0 // pred_region
    _
  $region129: #{forward.1} parent=0 // pred_fallthru
    _
  // Predicated region
  $region130: #{forward.1} parent=0 // pred_check
    _
  $region131: #{forward.1} parent=0 // pred_check_branch
    %2616 = sbr.rel (0) target = $region133
  $region132: #{forward.1} parent=0 // pred_region
    _
  $region133: #{forward.1} parent=0 // pred_fallthru
    _
  // Predicated region
  $region134: #{forward.1} parent=0 // pred_check
    _
  $region135: #{forward.1} parent=0 // pred_check_branch
    %2618 = sbr.rel (0) target = $region137
  $region136: #{forward.1} parent=0 // pred_region
    _
  $region137: #{forward.1} parent=0 // pred_fallthru
    _
  // Predicated region
  $region138: #{forward.1} parent=0 // pred_check
    _
  $region139: #{forward.1} parent=0 // pred_check_branch
    %2620 = sbr.rel (0) target = $region141
  $region140: #{forward.1} parent=0 // pred_region
    _
  $region141: #{forward.1} parent=0 // pred_fallthru
    _
  // Predicated region
  $region142: #{forward.1} parent=0 // pred_check
    _
  $region143: #{forward.1} parent=0 // pred_check_branch
    %2622 = sbr.rel (0) target = $region145
  $region144: #{forward.1} parent=0 // pred_region
    _
  $region145: #{forward.1} parent=0 // pred_fallthru
    _
  // Predicated region
  $region146: #{forward.1} parent=0 // pred_check
    _
  $region147: #{forward.1} parent=0 // pred_check_branch
    %2624 = sbr.rel (0) target = $region149
  $region148: #{forward.1} parent=0 // pred_region
    _
  $region149: #{forward.1} parent=0 // pred_fallthru
    _
  // Predicated region
  $region150: #{forward.1} parent=0 // pred_check
    _
  $region151: #{forward.1} parent=0 // pred_check_branch
    %2626 = sbr.rel (0) target = $region153
  $region152: #{forward.1} parent=0 // pred_region
    _
  $region153: #{forward.1} parent=0 // pred_fallthru
    _

</llo_original>
